<compile_context>
chip_gen: v7x
topology: tpu7x:2x2x1
jax: 0.10.0
libtpu: 0.0.40
codegen_flags: <defaults>
</compile_context>

<pallas_src>
import functools
import math

import jax
import jax.numpy as jnp
from jax.experimental import pallas as pl
from jax.experimental.pallas import tpu as pltpu

_LANES = 128


def _round_up(n, m):
    return ((n + m - 1) // m) * m


def _lastlayer_kernel(xp_ref, wbd_ref, o_ref):
    # xp_ref : (bm_p, 128*d_model)        -- 128 original rows per packed row
    # wbd_ref: (128*d_model, 128*n_chan)  -- block-diagonal effective weight
    # o_ref  : (bm_p, 128*n_chan)         -- lane-dense output tile
    y = jnp.dot(xp_ref[...], wbd_ref[...], preferred_element_type=jnp.float32)
    o_ref[...] = jax.nn.sigmoid(y).astype(o_ref.dtype)


@functools.partial(jax.jit, static_argnames=("block_m",))
def _last_layer_forward_2d(x2d, weight_v, weight_g, *, block_m):
    """x2d: (M, d_model); weight_v: (n_channels, d_model); weight_g: (n_channels, 1)."""
    m, d_model = x2d.shape
    n_channels = weight_v.shape[0]
    out_dtype = x2d.dtype

    # ---- weight-norm reparameterization (f32; no epsilon, as in torch) ----
    v32 = weight_v.astype(jnp.float32)
    g32 = weight_g.astype(jnp.float32)
    v_norm = jnp.sqrt(jnp.sum(v32 * v32, axis=1, keepdims=True))
    w_eff = g32 * v32 / v_norm                                  # (n_chan, d_model)
    # Block-diagonal expansion so the packed matmul
    # (M/128, 128*D) @ (128*D, 128*C) yields a lane-dense result directly.
    # Sized for UnetMem's small d_model/n_channels (4 MiB f32 at D=64, C=1).
    wbd = jnp.kron(jnp.eye(_LANES, dtype=jnp.float32), w_eff.T)  # (128*D, 128*C)
    wbd = wbd.astype(x2d.dtype)

    # ---- pack 128 rows per packed row (free row-major reshape) ----
    m_pad = _round_up(m, _LANES)
    if m_pad != m:
        # TODO(synk): this pad copies x once in HBM; it triggers only when
        # batch*seq is not a multiple of 128 (< 128 pad rows).  Tile
        # raggedness itself is handled by the grid below, never by padding
        # to block_m.
        x2d = jnp.pad(x2d, ((0, m_pad - m), (0, 0)))
    m_p = m_pad // _LANES
    xp = x2d.reshape(m_p, _LANES * d_model)

    # ---- tile the packed-M axis ----
    mult = 16 if jnp.dtype(x2d.dtype).itemsize < 4 else 8   # sublane packing
    bm_p = max(mult, (block_m // _LANES) // mult * mult)
    if m_p >= 2 * mult:
        # keep >= 2 grid steps so v7x can shard the "parallel" axis over 2 TCs
        bm_p = min(bm_p, _round_up(pl.cdiv(m_p, 2), mult))
    if bm_p >= m_p:
        bm_p = m_p                                           # single full block
    grid_m = pl.cdiv(m_p, bm_p)                              # ragged last block OK

    out_p = pl.pallas_call(
        _lastlayer_kernel,
        out_shape=jax.ShapeDtypeStruct((m_p, _LANES * n_channels), out_dtype),
        grid_spec=pltpu.PrefetchScalarGridSpec(
            num_scalar_prefetch=0,
            grid=(grid_m,),
            in_specs=[
                # packed activation tile: streamed / double-buffered over M
                pl.BlockSpec((bm_p, _LANES * d_model), lambda i: (i, 0)),
                # block-diagonal weight: constant index -> stays VMEM-resident
                pl.BlockSpec((_LANES * d_model, _LANES * n_channels),
                             lambda i: (0, 0)),
            ],
            # lane-dense output tile (128*n_channels wide): unmasked stores,
            # contiguous writeback
            out_specs=pl.BlockSpec((bm_p, _LANES * n_channels), lambda i: (i, 0)),
        ),
        compiler_params=pltpu.CompilerParams(
            dimension_semantics=("parallel",),
            # re-derived for v7x (64 MiB/TC): x 2x8 MiB + weight <=8 MiB +
            # tiny output, with headroom for internal scratch
            vmem_limit_bytes=48 * 1024 * 1024,
        ),
    )(xp, wbd)

    out2d = out_p.reshape(m_pad, n_channels)   # free unpack of the lane packing
    if m_pad != m:
        out2d = out2d[:m]
    return out2d


def last_layer_forward(x, weight_v, weight_g, mask=None, block_m=32768):
    """LastLayer forward: sigmoid(weight_norm_linear(x)).

    x: (batch, seq, d_model); weight_v: (n_channels, d_model);
    weight_g: (n_channels, 1). `mask` is accepted but unused (matches the
    PyTorch LastLayer, which ignores its mask argument).
    """
    b, s, d_model = x.shape
    n_channels = weight_v.shape[0]
    x2d = x.reshape(b * s, d_model)
    out2d = _last_layer_forward_2d(x2d, weight_v, weight_g, block_m=int(block_m))
    return out2d.reshape(b, s, n_channels)


def _xavier_uniform(key, shape):
    # matches torch.nn.init.xavier_uniform_ for a 2-D tensor (fan_out, fan_in)
    fan_out, fan_in = shape
    a = math.sqrt(6.0 / (fan_in + fan_out))
    return jax.random.uniform(key, shape, jnp.float32, minval=-a, maxval=a)


def _reference(x, weight_v, weight_g):
    w_eff = weight_g * weight_v / jnp.linalg.norm(weight_v, axis=1, keepdims=True)
    return jax.nn.sigmoid(jnp.einsum("bsd,cd->bsc", x.astype(jnp.float32), w_eff))


if __name__ == "__main__":
    # Shapes consistent with UnetMem: d_model=64, output_channels=1.
    d_model = 64
    n_channels = 1

    key = jax.random.PRNGKey(0)
    k_v, k_g, k1, k2, k3 = jax.random.split(key, 5)

    # deterministic parameter init (mirrors LastLayer's xavier loop over the
    # weight-normed Linear's weight_v and weight_g, both dim > 1)
    weight_v = _xavier_uniform(k_v, (n_channels, d_model))
    weight_g = _xavier_uniform(k_g, (n_channels, 1))

    # 1) 128-aligned M (no pad, no copy of x), single tile: batch=2, 16x16 grid
    batch, W, H = 2, 16, 16
    x1 = jax.random.normal(k1, (batch, W * H, d_model), dtype=jnp.float32)
    mask1 = jnp.ones((batch, W * H), dtype=jnp.float32)  # unused, as in PyTorch
    o1 = jax.block_until_ready(last_layer_forward(x1, weight_v, weight_g, mask1))
    r1 = _reference(x1, weight_v, weight_g)
    assert o1.shape == (batch, W * H, n_channels)
    assert jnp.max(jnp.abs(o1.astype(jnp.float32) - r1)) < 1e-4

    # 2) unaligned M (UnetMem default size=(20,20): M=1200 -> 128-pad to 1280)
    #    with a small block_m to force a multi-tile grid + ragged last block.
    W2, H2 = 20, 20
    x2 = jax.random.normal(k2, (3, W2 * H2, d_model), dtype=jnp.float32)
    o2 = jax.block_until_ready(
        last_layer_forward(x2, weight_v, weight_g, mask=None, block_m=1024))
    r2 = _reference(x2, weight_v, weight_g)
    assert o2.shape == (3, W2 * H2, n_channels)
    assert jnp.max(jnp.abs(o2.astype(jnp.float32) - r2)) < 1e-4

    # 3) bf16 activations (halves the dominant HBM read on v6e/v7x), default
    #    tiling; M=8192 -> the ">=2 grid steps" cap kicks in (grid of 2).
    x3 = jax.random.normal(k3, (2, 4096, d_model), dtype=jnp.bfloat16)
    o3 = jax.block_until_ready(last_layer_forward(x3, weight_v, weight_g))
    r3 = _reference(x3, weight_v, weight_g)
    assert o3.shape == (2, 4096, n_channels) and o3.dtype == jnp.bfloat16
    assert jnp.max(jnp.abs(o3.astype(jnp.float32) - r3)) < 3e-2

    print("KERNEL_OK")
</pallas_src>

<mosaic_0001>
module attributes {stable_mosaic.version = 11 : i64} {
  func.func @_lastlayer_kernel(%arg0: i32, %arg1: memref<4x8192xf32, #tpu.memory_space<vmem>>, %arg2: memref<8192x128xf32, #tpu.memory_space<vmem>>, %arg3: memref<4x128xf32, #tpu.memory_space<vmem>>) attributes {dimension_semantics = [#tpu.dimension_semantics<parallel>], iteration_bounds = array<i64: 1>, scalar_prefetch = 0 : i64, scratch_operands = 0 : i64, tpu.core_type = #tpu.core_type<tc>, window_params = [{transform_indices = @transform_0, window_bounds = array<i64: 4, 8192>}, {pipeline_mode = #tpu.pipeline_mode<synchronous>, transform_indices = @transform_1, window_bounds = array<i64: 8192, 128>}, {transform_indices = @transform_2, window_bounds = array<i64: 4, 128>}]} {
    %c0 = arith.constant 0 : index
    %c0_0 = arith.constant 0 : index
    %0 = vector.load %arg1[%c0, %c0_0] : memref<4x8192xf32, #tpu.memory_space<vmem>>, vector<4x8192xf32>
    %c0_1 = arith.constant 0 : index
    %c0_2 = arith.constant 0 : index
    %1 = vector.load %arg2[%c0_1, %c0_2] : memref<8192x128xf32, #tpu.memory_space<vmem>>, vector<8192x128xf32>
    %cst = arith.constant dense<0.000000e+00> : vector<4x128xf32>
    %2 = tpu.matmul %0, %1, %cst {dimension_numbers = #tpu.dot_dimension_numbers<[1], [0], [0], [1], [0, 0, 1, 1], [], []>} : vector<4x8192xf32>, vector<8192x128xf32>, vector<4x128xf32> -> vector<4x128xf32>
    %3 = arith.negf %2 : vector<4x128xf32>
    %4 = math.exp %3 : vector<4x128xf32>
    %cst_3 = arith.constant 1.000000e+00 : f32
    %5 = vector.broadcast %cst_3 : f32 to vector<4x128xf32>
    %6 = arith.addf %5, %4 : vector<4x128xf32>
    %7 = arith.divf %5, %6 : vector<4x128xf32>
    %c0_4 = arith.constant 0 : index
    %c0_5 = arith.constant 0 : index
    %8 = vector.load %arg3[%c0_4, %c0_5] : memref<4x128xf32, #tpu.memory_space<vmem>>, vector<4x128xf32>
    tpu.vector_store %arg3[%c0_4, %c0_5], %7 {strides = array<i32>} : memref<4x128xf32, #tpu.memory_space<vmem>>, vector<4x128xf32>,
    return
  }
  func.func @transform_0(%arg0: i32) -> (i32, i32) {
    %c0_i32 = arith.constant 0 : i32
    %c0_i32_0 = arith.constant 0 : i32
    return %arg0, %c0_i32 : i32, i32
  }
  func.func @transform_1(%arg0: i32) -> (i32, i32) {
    %c0_i32 = arith.constant 0 : i32
    %c0_i32_0 = arith.constant 0 : i32
    %c0_i32_1 = arith.constant 0 : i32
    return %c0_i32, %c0_i32_0 : i32, i32
  }
  func.func @transform_2(%arg0: i32) -> (i32, i32) {
    %c0_i32 = arith.constant 0 : i32
    %c0_i32_0 = arith.constant 0 : i32
    return %arg0, %c0_i32 : i32, i32
  }
}

</mosaic_0001>

<llo_original>
// kernel: _last_layer_forward_2d.1
$region0: #{_last_layer_forward_2d.1}
  #allocation0 [shape = 'u32[]', space=smem, size = 0x4, offset = 0x4, fixed_abs, tag = 'smem constant byte address 0x4 - core index']
  #allocation1 [shape = 'u32[144,128]{1,0:T(1,128)}', space=vmem, size = 0x12000, scoped, tag = 'internal scratch']
  %s0 = inlined_call_operand.vmem [shape: f32[4,8192], index: 0, kind: input, shape index: {}]
  %s1 = inlined_call_operand.vmem [shape: f32[8192,128], index: 1, kind: input, shape index: {}]
  %s2 = inlined_call_operand.hbm [shape: f32[4,128], index: 2, kind: output, shape index: {}]
  %s3 = sld [smem:[#allocation0]]
  $region18: #{_last_layer_forward_2d.1} parent=0
    _
  %s5 = ssub.s32 1, %s3
  %s6 = scalar_select 0, %s5, %s3
  $region1: #{_last_layer_forward_2d.1} parent=0
    #allocation2 [shape = 'u8[2048]{0}', space=vmem, size = 0x800, scoped, tag = 'output window, operand 0, single buffered']
    #allocation3 [shape = 's32[1]{0}', space=sflag, size = 0x4, scoped, tag = 'scoped memory for _last_layer_forward_2d.1']
    %7 = vsyncpa [#allocation3], 0
    // Predicated region
    $region2: #{_last_layer_forward_2d.1} parent=1 // pred_check
      _
    $region3: #{_last_layer_forward_2d.1} parent=1 // pred_check_branch
      %9 = sbr.rel (0) target = $region5
    $region4: #{_last_layer_forward_2d.1} parent=1 // pred_region
      _
    $region5: #{_last_layer_forward_2d.1} parent=1 // pred_fallthru
      _
    // Predicated region
    $region6: #{_last_layer_forward_2d.1} parent=1 // pred_check
      _
    $region7: #{_last_layer_forward_2d.1} parent=1 // pred_check_branch
      %11 = sbr.rel (0) target = $region9
    $region8: #{_last_layer_forward_2d.1} parent=1 // pred_region
      _
    $region9: #{_last_layer_forward_2d.1} parent=1 // pred_fallthru
      _
    %v12 = vld [vmem:[%s0] sm:$0xff]
    %v13 = vld [vmem:[%s0 + $0x8] sm:$0xff]
    %v14 = vld [vmem:[%s0 + $0x10] sm:$0xff]
    %v15 = vld [vmem:[%s0 + $0x18] sm:$0xff]
    %v16 = vld [vmem:[%s0 + $0x20] sm:$0xff]
    %v17 = vld [vmem:[%s0 + $0x28] sm:$0xff]
    %v18 = vld [vmem:[%s0 + $0x30] sm:$0xff]
    %v19 = vld [vmem:[%s0 + $0x38] sm:$0xff]
    %v20 = vld [vmem:[%s0 + $0x40] sm:$0xff]
    %v21 = vld [vmem:[%s0 + $0x48] sm:$0xff]
    %v22 = vld [vmem:[%s0 + $0x50] sm:$0xff]
    %v23 = vld [vmem:[%s0 + $0x58] sm:$0xff]
    %v24 = vld [vmem:[%s0 + $0x60] sm:$0xff]
    %v25 = vld [vmem:[%s0 + $0x68] sm:$0xff]
    %v26 = vld [vmem:[%s0 + $0x70] sm:$0xff]
    %v27 = vld [vmem:[%s0 + $0x78] sm:$0xff]
    %v28 = vld [vmem:[%s0 + $0x80] sm:$0xff]
    %v29 = vld [vmem:[%s0 + $0x88] sm:$0xff]
    %v30 = vld [vmem:[%s0 + $0x90] sm:$0xff]
    %v31 = vld [vmem:[%s0 + $0x98] sm:$0xff]
    %v32 = vld [vmem:[%s0 + $0xa0] sm:$0xff]
    %v33 = vld [vmem:[%s0 + $0xa8] sm:$0xff]
    %v34 = vld [vmem:[%s0 + $0xb0] sm:$0xff]
    %v35 = vld [vmem:[%s0 + $0xb8] sm:$0xff]
    %v36 = vld [vmem:[%s0 + $0xc0] sm:$0xff]
    %v37 = vld [vmem:[%s0 + $0xc8] sm:$0xff]
    %v38 = vld [vmem:[%s0 + $0xd0] sm:$0xff]
    %v39 = vld [vmem:[%s0 + $0xd8] sm:$0xff]
    %v40 = vld [vmem:[%s0 + $0xe0] sm:$0xff]
    %v41 = vld [vmem:[%s0 + $0xe8] sm:$0xff]
    %v42 = vld [vmem:[%s0 + $0xf0] sm:$0xff]
    %v43 = vld [vmem:[%s0 + $0xf8] sm:$0xff]
    %v44 = vld [vmem:[%s1] sm:$0xff]
    %v45 = vld [vmem:[%s1 + $0x8] sm:$0xff]
    %v46 = vld [vmem:[%s1 + $0x10] sm:$0xff]
    %v47 = vld [vmem:[%s1 + $0x18] sm:$0xff]
    %v48 = vld [vmem:[%s1 + $0x20] sm:$0xff]
    %v49 = vld [vmem:[%s1 + $0x28] sm:$0xff]
    %v50 = vld [vmem:[%s1 + $0x30] sm:$0xff]
    %v51 = vld [vmem:[%s1 + $0x38] sm:$0xff]
    %v52 = vld [vmem:[%s1 + $0x40] sm:$0xff]
    %v53 = vld [vmem:[%s1 + $0x48] sm:$0xff]
    %v54 = vld [vmem:[%s1 + $0x50] sm:$0xff]
    %v55 = vld [vmem:[%s1 + $0x58] sm:$0xff]
    %v56 = vld [vmem:[%s1 + $0x60] sm:$0xff]
    %v57 = vld [vmem:[%s1 + $0x68] sm:$0xff]
    %v58 = vld [vmem:[%s1 + $0x70] sm:$0xff]
    %v59 = vld [vmem:[%s1 + $0x78] sm:$0xff]
    %v60 = vld [vmem:[%s1 + $0x80] sm:$0xff]
    %v61 = vld [vmem:[%s1 + $0x88] sm:$0xff]
    %v62 = vld [vmem:[%s1 + $0x90] sm:$0xff]
    %v63 = vld [vmem:[%s1 + $0x98] sm:$0xff]
    %v64 = vld [vmem:[%s1 + $0xa0] sm:$0xff]
    %v65 = vld [vmem:[%s1 + $0xa8] sm:$0xff]
    %v66 = vld [vmem:[%s1 + $0xb0] sm:$0xff]
    %v67 = vld [vmem:[%s1 + $0xb8] sm:$0xff]
    %v68 = vld [vmem:[%s1 + $0xc0] sm:$0xff]
    %v69 = vld [vmem:[%s1 + $0xc8] sm:$0xff]
    %v70 = vld [vmem:[%s1 + $0xd0] sm:$0xff]
    %v71 = vld [vmem:[%s1 + $0xd8] sm:$0xff]
    %v72 = vld [vmem:[%s1 + $0xe0] sm:$0xff]
    %v73 = vld [vmem:[%s1 + $0xe8] sm:$0xff]
    %v74 = vld [vmem:[%s1 + $0xf0] sm:$0xff]
    %v75 = vld [vmem:[%s1 + $0xf8] sm:$0xff]
    %v76 = vld [vmem:[%s1 + $0x100] sm:$0xff]
    %v77 = vld [vmem:[%s1 + $0x108] sm:$0xff]
    %v78 = vld [vmem:[%s1 + $0x110] sm:$0xff]
    %v79 = vld [vmem:[%s1 + $0x118] sm:$0xff]
    %v80 = vld [vmem:[%s1 + $0x120] sm:$0xff]
    %v81 = vld [vmem:[%s1 + $0x128] sm:$0xff]
    %v82 = vld [vmem:[%s1 + $0x130] sm:$0xff]
    %v83 = vld [vmem:[%s1 + $0x138] sm:$0xff]
    %v84 = vld [vmem:[%s1 + $0x140] sm:$0xff]
    %v85 = vld [vmem:[%s1 + $0x148] sm:$0xff]
    %v86 = vld [vmem:[%s1 + $0x150] sm:$0xff]
    %v87 = vld [vmem:[%s1 + $0x158] sm:$0xff]
    %v88 = vld [vmem:[%s1 + $0x160] sm:$0xff]
    %v89 = vld [vmem:[%s1 + $0x168] sm:$0xff]
    %v90 = vld [vmem:[%s1 + $0x170] sm:$0xff]
    %v91 = vld [vmem:[%s1 + $0x178] sm:$0xff]
    %v92 = vld [vmem:[%s1 + $0x180] sm:$0xff]
    %v93 = vld [vmem:[%s1 + $0x188] sm:$0xff]
    %v94 = vld [vmem:[%s1 + $0x190] sm:$0xff]
    %v95 = vld [vmem:[%s1 + $0x198] sm:$0xff]
    %v96 = vld [vmem:[%s1 + $0x1a0] sm:$0xff]
    %v97 = vld [vmem:[%s1 + $0x1a8] sm:$0xff]
    %v98 = vld [vmem:[%s1 + $0x1b0] sm:$0xff]
    %v99 = vld [vmem:[%s1 + $0x1b8] sm:$0xff]
    %v100 = vld [vmem:[%s1 + $0x1c0] sm:$0xff]
    %v101 = vld [vmem:[%s1 + $0x1c8] sm:$0xff]
    %v102 = vld [vmem:[%s1 + $0x1d0] sm:$0xff]
    %v103 = vld [vmem:[%s1 + $0x1d8] sm:$0xff]
    %v104 = vld [vmem:[%s1 + $0x1e0] sm:$0xff]
    %v105 = vld [vmem:[%s1 + $0x1e8] sm:$0xff]
    %v106 = vld [vmem:[%s1 + $0x1f0] sm:$0xff]
    %v107 = vld [vmem:[%s1 + $0x1f8] sm:$0xff]
    %v108 = vld [vmem:[%s1 + $0x200] sm:$0xff]
    %v109 = vld [vmem:[%s1 + $0x208] sm:$0xff]
    %v110 = vld [vmem:[%s1 + $0x210] sm:$0xff]
    %v111 = vld [vmem:[%s1 + $0x218] sm:$0xff]
    %v112 = vld [vmem:[%s1 + $0x220] sm:$0xff]
    %v113 = vld [vmem:[%s1 + $0x228] sm:$0xff]
    %v114 = vld [vmem:[%s1 + $0x230] sm:$0xff]
    %v115 = vld [vmem:[%s1 + $0x238] sm:$0xff]
    %v116 = vld [vmem:[%s1 + $0x240] sm:$0xff]
    %v117 = vld [vmem:[%s1 + $0x248] sm:$0xff]
    %v118 = vld [vmem:[%s1 + $0x250] sm:$0xff]
    %v119 = vld [vmem:[%s1 + $0x258] sm:$0xff]
    %v120 = vld [vmem:[%s1 + $0x260] sm:$0xff]
    %v121 = vld [vmem:[%s1 + $0x268] sm:$0xff]
    %v122 = vld [vmem:[%s1 + $0x270] sm:$0xff]
    %v123 = vld [vmem:[%s1 + $0x278] sm:$0xff]
    %v124 = vld [vmem:[%s1 + $0x280] sm:$0xff]
    %v125 = vld [vmem:[%s1 + $0x288] sm:$0xff]
    %v126 = vld [vmem:[%s1 + $0x290] sm:$0xff]
    %v127 = vld [vmem:[%s1 + $0x298] sm:$0xff]
    %v128 = vld [vmem:[%s1 + $0x2a0] sm:$0xff]
    %v129 = vld [vmem:[%s1 + $0x2a8] sm:$0xff]
    %v130 = vld [vmem:[%s1 + $0x2b0] sm:$0xff]
    %v131 = vld [vmem:[%s1 + $0x2b8] sm:$0xff]
    %v132 = vld [vmem:[%s1 + $0x2c0] sm:$0xff]
    %v133 = vld [vmem:[%s1 + $0x2c8] sm:$0xff]
    %v134 = vld [vmem:[%s1 + $0x2d0] sm:$0xff]
    %v135 = vld [vmem:[%s1 + $0x2d8] sm:$0xff]
    %v136 = vld [vmem:[%s1 + $0x2e0] sm:$0xff]
    %v137 = vld [vmem:[%s1 + $0x2e8] sm:$0xff]
    %v138 = vld [vmem:[%s1 + $0x2f0] sm:$0xff]
    %v139 = vld [vmem:[%s1 + $0x2f8] sm:$0xff]
    %v140 = vld [vmem:[%s1 + $0x300] sm:$0xff]
    %v141 = vld [vmem:[%s1 + $0x308] sm:$0xff]
    %v142 = vld [vmem:[%s1 + $0x310] sm:$0xff]
    %v143 = vld [vmem:[%s1 + $0x318] sm:$0xff]
    %v144 = vld [vmem:[%s1 + $0x320] sm:$0xff]
    %v145 = vld [vmem:[%s1 + $0x328] sm:$0xff]
    %v146 = vld [vmem:[%s1 + $0x330] sm:$0xff]
    %v147 = vld [vmem:[%s1 + $0x338] sm:$0xff]
    %v148 = vld [vmem:[%s1 + $0x340] sm:$0xff]
    %v149 = vld [vmem:[%s1 + $0x348] sm:$0xff]
    %v150 = vld [vmem:[%s1 + $0x350] sm:$0xff]
    %v151 = vld [vmem:[%s1 + $0x358] sm:$0xff]
    %v152 = vld [vmem:[%s1 + $0x360] sm:$0xff]
    %v153 = vld [vmem:[%s1 + $0x368] sm:$0xff]
    %v154 = vld [vmem:[%s1 + $0x370] sm:$0xff]
    %v155 = vld [vmem:[%s1 + $0x378] sm:$0xff]
    %v156 = vld [vmem:[%s1 + $0x380] sm:$0xff]
    %v157 = vld [vmem:[%s1 + $0x388] sm:$0xff]
    %v158 = vld [vmem:[%s1 + $0x390] sm:$0xff]
    %v159 = vld [vmem:[%s1 + $0x398] sm:$0xff]
    %v160 = vld [vmem:[%s1 + $0x3a0] sm:$0xff]
    %v161 = vld [vmem:[%s1 + $0x3a8] sm:$0xff]
    %v162 = vld [vmem:[%s1 + $0x3b0] sm:$0xff]
    %v163 = vld [vmem:[%s1 + $0x3b8] sm:$0xff]
    %v164 = vld [vmem:[%s1 + $0x3c0] sm:$0xff]
    %v165 = vld [vmem:[%s1 + $0x3c8] sm:$0xff]
    %v166 = vld [vmem:[%s1 + $0x3d0] sm:$0xff]
    %v167 = vld [vmem:[%s1 + $0x3d8] sm:$0xff]
    %v168 = vld [vmem:[%s1 + $0x3e0] sm:$0xff]
    %v169 = vld [vmem:[%s1 + $0x3e8] sm:$0xff]
    %v170 = vld [vmem:[%s1 + $0x3f0] sm:$0xff]
    %v171 = vld [vmem:[%s1 + $0x3f8] sm:$0xff]
    %v172 = vld [vmem:[%s1 + $0x400] sm:$0xff]
    %v173 = vld [vmem:[%s1 + $0x408] sm:$0xff]
    %v174 = vld [vmem:[%s1 + $0x410] sm:$0xff]
    %v175 = vld [vmem:[%s1 + $0x418] sm:$0xff]
    %v176 = vld [vmem:[%s1 + $0x420] sm:$0xff]
    %v177 = vld [vmem:[%s1 + $0x428] sm:$0xff]
    %v178 = vld [vmem:[%s1 + $0x430] sm:$0xff]
    %v179 = vld [vmem:[%s1 + $0x438] sm:$0xff]
    %v180 = vld [vmem:[%s1 + $0x440] sm:$0xff]
    %v181 = vld [vmem:[%s1 + $0x448] sm:$0xff]
    %v182 = vld [vmem:[%s1 + $0x450] sm:$0xff]
    %v183 = vld [vmem:[%s1 + $0x458] sm:$0xff]
    %v184 = vld [vmem:[%s1 + $0x460] sm:$0xff]
    %v185 = vld [vmem:[%s1 + $0x468] sm:$0xff]
    %v186 = vld [vmem:[%s1 + $0x470] sm:$0xff]
    %v187 = vld [vmem:[%s1 + $0x478] sm:$0xff]
    %v188 = vld [vmem:[%s1 + $0x480] sm:$0xff]
    %v189 = vld [vmem:[%s1 + $0x488] sm:$0xff]
    %v190 = vld [vmem:[%s1 + $0x490] sm:$0xff]
    %v191 = vld [vmem:[%s1 + $0x498] sm:$0xff]
    %v192 = vld [vmem:[%s1 + $0x4a0] sm:$0xff]
    %v193 = vld [vmem:[%s1 + $0x4a8] sm:$0xff]
    %v194 = vld [vmem:[%s1 + $0x4b0] sm:$0xff]
    %v195 = vld [vmem:[%s1 + $0x4b8] sm:$0xff]
    %v196 = vld [vmem:[%s1 + $0x4c0] sm:$0xff]
    %v197 = vld [vmem:[%s1 + $0x4c8] sm:$0xff]
    %v198 = vld [vmem:[%s1 + $0x4d0] sm:$0xff]
    %v199 = vld [vmem:[%s1 + $0x4d8] sm:$0xff]
    %v200 = vld [vmem:[%s1 + $0x4e0] sm:$0xff]
    %v201 = vld [vmem:[%s1 + $0x4e8] sm:$0xff]
    %v202 = vld [vmem:[%s1 + $0x4f0] sm:$0xff]
    %v203 = vld [vmem:[%s1 + $0x4f8] sm:$0xff]
    %v204 = vld [vmem:[%s1 + $0x500] sm:$0xff]
    %v205 = vld [vmem:[%s1 + $0x508] sm:$0xff]
    %v206 = vld [vmem:[%s1 + $0x510] sm:$0xff]
    %v207 = vld [vmem:[%s1 + $0x518] sm:$0xff]
    %v208 = vld [vmem:[%s1 + $0x520] sm:$0xff]
    %v209 = vld [vmem:[%s1 + $0x528] sm:$0xff]
    %v210 = vld [vmem:[%s1 + $0x530] sm:$0xff]
    %v211 = vld [vmem:[%s1 + $0x538] sm:$0xff]
    %v212 = vld [vmem:[%s1 + $0x540] sm:$0xff]
    %v213 = vld [vmem:[%s1 + $0x548] sm:$0xff]
    %v214 = vld [vmem:[%s1 + $0x550] sm:$0xff]
    %v215 = vld [vmem:[%s1 + $0x558] sm:$0xff]
    %v216 = vld [vmem:[%s1 + $0x560] sm:$0xff]
    %v217 = vld [vmem:[%s1 + $0x568] sm:$0xff]
    %v218 = vld [vmem:[%s1 + $0x570] sm:$0xff]
    %v219 = vld [vmem:[%s1 + $0x578] sm:$0xff]
    %v220 = vld [vmem:[%s1 + $0x580] sm:$0xff]
    %v221 = vld [vmem:[%s1 + $0x588] sm:$0xff]
    %v222 = vld [vmem:[%s1 + $0x590] sm:$0xff]
    %v223 = vld [vmem:[%s1 + $0x598] sm:$0xff]
    %v224 = vld [vmem:[%s1 + $0x5a0] sm:$0xff]
    %v225 = vld [vmem:[%s1 + $0x5a8] sm:$0xff]
    %v226 = vld [vmem:[%s1 + $0x5b0] sm:$0xff]
    %v227 = vld [vmem:[%s1 + $0x5b8] sm:$0xff]
    %v228 = vld [vmem:[%s1 + $0x5c0] sm:$0xff]
    %v229 = vld [vmem:[%s1 + $0x5c8] sm:$0xff]
    %v230 = vld [vmem:[%s1 + $0x5d0] sm:$0xff]
    %v231 = vld [vmem:[%s1 + $0x5d8] sm:$0xff]
    %v232 = vld [vmem:[%s1 + $0x5e0] sm:$0xff]
    %v233 = vld [vmem:[%s1 + $0x5e8] sm:$0xff]
    %v234 = vld [vmem:[%s1 + $0x5f0] sm:$0xff]
    %v235 = vld [vmem:[%s1 + $0x5f8] sm:$0xff]
    %v236 = vld [vmem:[%s1 + $0x600] sm:$0xff]
    %v237 = vld [vmem:[%s1 + $0x608] sm:$0xff]
    %v238 = vld [vmem:[%s1 + $0x610] sm:$0xff]
    %v239 = vld [vmem:[%s1 + $0x618] sm:$0xff]
    %v240 = vld [vmem:[%s1 + $0x620] sm:$0xff]
    %v241 = vld [vmem:[%s1 + $0x628] sm:$0xff]
    %v242 = vld [vmem:[%s1 + $0x630] sm:$0xff]
    %v243 = vld [vmem:[%s1 + $0x638] sm:$0xff]
    %v244 = vld [vmem:[%s1 + $0x640] sm:$0xff]
    %v245 = vld [vmem:[%s1 + $0x648] sm:$0xff]
    %v246 = vld [vmem:[%s1 + $0x650] sm:$0xff]
    %v247 = vld [vmem:[%s1 + $0x658] sm:$0xff]
    %v248 = vld [vmem:[%s1 + $0x660] sm:$0xff]
    %v249 = vld [vmem:[%s1 + $0x668] sm:$0xff]
    %v250 = vld [vmem:[%s1 + $0x670] sm:$0xff]
    %v251 = vld [vmem:[%s1 + $0x678] sm:$0xff]
    %v252 = vld [vmem:[%s1 + $0x680] sm:$0xff]
    %v253 = vld [vmem:[%s1 + $0x688] sm:$0xff]
    %v254 = vld [vmem:[%s1 + $0x690] sm:$0xff]
    %v255 = vld [vmem:[%s1 + $0x698] sm:$0xff]
    %v256 = vld [vmem:[%s1 + $0x6a0] sm:$0xff]
    %v257 = vld [vmem:[%s1 + $0x6a8] sm:$0xff]
    %v258 = vld [vmem:[%s1 + $0x6b0] sm:$0xff]
    %v259 = vld [vmem:[%s1 + $0x6b8] sm:$0xff]
    %v260 = vld [vmem:[%s1 + $0x6c0] sm:$0xff]
    %v261 = vld [vmem:[%s1 + $0x6c8] sm:$0xff]
    %v262 = vld [vmem:[%s1 + $0x6d0] sm:$0xff]
    %v263 = vld [vmem:[%s1 + $0x6d8] sm:$0xff]
    %v264 = vld [vmem:[%s1 + $0x6e0] sm:$0xff]
    %v265 = vld [vmem:[%s1 + $0x6e8] sm:$0xff]
    %v266 = vld [vmem:[%s1 + $0x6f0] sm:$0xff]
    %v267 = vld [vmem:[%s1 + $0x6f8] sm:$0xff]
    %v268 = vld [vmem:[%s1 + $0x700] sm:$0xff]
    %v269 = vld [vmem:[%s1 + $0x708] sm:$0xff]
    %v270 = vld [vmem:[%s1 + $0x710] sm:$0xff]
    %v271 = vld [vmem:[%s1 + $0x718] sm:$0xff]
    %v272 = vld [vmem:[%s1 + $0x720] sm:$0xff]
    %v273 = vld [vmem:[%s1 + $0x728] sm:$0xff]
    %v274 = vld [vmem:[%s1 + $0x730] sm:$0xff]
    %v275 = vld [vmem:[%s1 + $0x738] sm:$0xff]
    %v276 = vld [vmem:[%s1 + $0x740] sm:$0xff]
    %v277 = vld [vmem:[%s1 + $0x748] sm:$0xff]
    %v278 = vld [vmem:[%s1 + $0x750] sm:$0xff]
    %v279 = vld [vmem:[%s1 + $0x758] sm:$0xff]
    %v280 = vld [vmem:[%s1 + $0x760] sm:$0xff]
    %v281 = vld [vmem:[%s1 + $0x768] sm:$0xff]
    %v282 = vld [vmem:[%s1 + $0x770] sm:$0xff]
    %v283 = vld [vmem:[%s1 + $0x778] sm:$0xff]
    %v284 = vld [vmem:[%s1 + $0x780] sm:$0xff]
    %v285 = vld [vmem:[%s1 + $0x788] sm:$0xff]
    %v286 = vld [vmem:[%s1 + $0x790] sm:$0xff]
    %v287 = vld [vmem:[%s1 + $0x798] sm:$0xff]
    %v288 = vld [vmem:[%s1 + $0x7a0] sm:$0xff]
    %v289 = vld [vmem:[%s1 + $0x7a8] sm:$0xff]
    %v290 = vld [vmem:[%s1 + $0x7b0] sm:$0xff]
    %v291 = vld [vmem:[%s1 + $0x7b8] sm:$0xff]
    %v292 = vld [vmem:[%s1 + $0x7c0] sm:$0xff]
    %v293 = vld [vmem:[%s1 + $0x7c8] sm:$0xff]
    %v294 = vld [vmem:[%s1 + $0x7d0] sm:$0xff]
    %v295 = vld [vmem:[%s1 + $0x7d8] sm:$0xff]
    %v296 = vld [vmem:[%s1 + $0x7e0] sm:$0xff]
    %v297 = vld [vmem:[%s1 + $0x7e8] sm:$0xff]
    %v298 = vld [vmem:[%s1 + $0x7f0] sm:$0xff]
    %v299 = vld [vmem:[%s1 + $0x7f8] sm:$0xff]
    %v300 = vld [vmem:[%s1 + $0x800] sm:$0xff]
    %v301 = vld [vmem:[%s1 + $0x808] sm:$0xff]
    %v302 = vld [vmem:[%s1 + $0x810] sm:$0xff]
    %v303 = vld [vmem:[%s1 + $0x818] sm:$0xff]
    %v304 = vld [vmem:[%s1 + $0x820] sm:$0xff]
    %v305 = vld [vmem:[%s1 + $0x828] sm:$0xff]
    %v306 = vld [vmem:[%s1 + $0x830] sm:$0xff]
    %v307 = vld [vmem:[%s1 + $0x838] sm:$0xff]
    %v308 = vld [vmem:[%s1 + $0x840] sm:$0xff]
    %v309 = vld [vmem:[%s1 + $0x848] sm:$0xff]
    %v310 = vld [vmem:[%s1 + $0x850] sm:$0xff]
    %v311 = vld [vmem:[%s1 + $0x858] sm:$0xff]
    %v312 = vld [vmem:[%s1 + $0x860] sm:$0xff]
    %v313 = vld [vmem:[%s1 + $0x868] sm:$0xff]
    %v314 = vld [vmem:[%s1 + $0x870] sm:$0xff]
    %v315 = vld [vmem:[%s1 + $0x878] sm:$0xff]
    %v316 = vld [vmem:[%s1 + $0x880] sm:$0xff]
    %v317 = vld [vmem:[%s1 + $0x888] sm:$0xff]
    %v318 = vld [vmem:[%s1 + $0x890] sm:$0xff]
    %v319 = vld [vmem:[%s1 + $0x898] sm:$0xff]
    %v320 = vld [vmem:[%s1 + $0x8a0] sm:$0xff]
    %v321 = vld [vmem:[%s1 + $0x8a8] sm:$0xff]
    %v322 = vld [vmem:[%s1 + $0x8b0] sm:$0xff]
    %v323 = vld [vmem:[%s1 + $0x8b8] sm:$0xff]
    %v324 = vld [vmem:[%s1 + $0x8c0] sm:$0xff]
    %v325 = vld [vmem:[%s1 + $0x8c8] sm:$0xff]
    %v326 = vld [vmem:[%s1 + $0x8d0] sm:$0xff]
    %v327 = vld [vmem:[%s1 + $0x8d8] sm:$0xff]
    %v328 = vld [vmem:[%s1 + $0x8e0] sm:$0xff]
    %v329 = vld [vmem:[%s1 + $0x8e8] sm:$0xff]
    %v330 = vld [vmem:[%s1 + $0x8f0] sm:$0xff]
    %v331 = vld [vmem:[%s1 + $0x8f8] sm:$0xff]
    %v332 = vld [vmem:[%s1 + $0x900] sm:$0xff]
    %v333 = vld [vmem:[%s1 + $0x908] sm:$0xff]
    %v334 = vld [vmem:[%s1 + $0x910] sm:$0xff]
    %v335 = vld [vmem:[%s1 + $0x918] sm:$0xff]
    %v336 = vld [vmem:[%s1 + $0x920] sm:$0xff]
    %v337 = vld [vmem:[%s1 + $0x928] sm:$0xff]
    %v338 = vld [vmem:[%s1 + $0x930] sm:$0xff]
    %v339 = vld [vmem:[%s1 + $0x938] sm:$0xff]
    %v340 = vld [vmem:[%s1 + $0x940] sm:$0xff]
    %v341 = vld [vmem:[%s1 + $0x948] sm:$0xff]
    %v342 = vld [vmem:[%s1 + $0x950] sm:$0xff]
    %v343 = vld [vmem:[%s1 + $0x958] sm:$0xff]
    %v344 = vld [vmem:[%s1 + $0x960] sm:$0xff]
    %v345 = vld [vmem:[%s1 + $0x968] sm:$0xff]
    %v346 = vld [vmem:[%s1 + $0x970] sm:$0xff]
    %v347 = vld [vmem:[%s1 + $0x978] sm:$0xff]
    %v348 = vld [vmem:[%s1 + $0x980] sm:$0xff]
    %v349 = vld [vmem:[%s1 + $0x988] sm:$0xff]
    %v350 = vld [vmem:[%s1 + $0x990] sm:$0xff]
    %v351 = vld [vmem:[%s1 + $0x998] sm:$0xff]
    %v352 = vld [vmem:[%s1 + $0x9a0] sm:$0xff]
    %v353 = vld [vmem:[%s1 + $0x9a8] sm:$0xff]
    %v354 = vld [vmem:[%s1 + $0x9b0] sm:$0xff]
    %v355 = vld [vmem:[%s1 + $0x9b8] sm:$0xff]
    %v356 = vld [vmem:[%s1 + $0x9c0] sm:$0xff]
    %v357 = vld [vmem:[%s1 + $0x9c8] sm:$0xff]
    %v358 = vld [vmem:[%s1 + $0x9d0] sm:$0xff]
    %v359 = vld [vmem:[%s1 + $0x9d8] sm:$0xff]
    %v360 = vld [vmem:[%s1 + $0x9e0] sm:$0xff]
    %v361 = vld [vmem:[%s1 + $0x9e8] sm:$0xff]
    %v362 = vld [vmem:[%s1 + $0x9f0] sm:$0xff]
    %v363 = vld [vmem:[%s1 + $0x9f8] sm:$0xff]
    %v364 = vld [vmem:[%s1 + $0xa00] sm:$0xff]
    %v365 = vld [vmem:[%s1 + $0xa08] sm:$0xff]
    %v366 = vld [vmem:[%s1 + $0xa10] sm:$0xff]
    %v367 = vld [vmem:[%s1 + $0xa18] sm:$0xff]
    %v368 = vld [vmem:[%s1 + $0xa20] sm:$0xff]
    %v369 = vld [vmem:[%s1 + $0xa28] sm:$0xff]
    %v370 = vld [vmem:[%s1 + $0xa30] sm:$0xff]
    %v371 = vld [vmem:[%s1 + $0xa38] sm:$0xff]
    %v372 = vld [vmem:[%s1 + $0xa40] sm:$0xff]
    %v373 = vld [vmem:[%s1 + $0xa48] sm:$0xff]
    %v374 = vld [vmem:[%s1 + $0xa50] sm:$0xff]
    %v375 = vld [vmem:[%s1 + $0xa58] sm:$0xff]
    %v376 = vld [vmem:[%s1 + $0xa60] sm:$0xff]
    %v377 = vld [vmem:[%s1 + $0xa68] sm:$0xff]
    %v378 = vld [vmem:[%s1 + $0xa70] sm:$0xff]
    %v379 = vld [vmem:[%s1 + $0xa78] sm:$0xff]
    %v380 = vld [vmem:[%s1 + $0xa80] sm:$0xff]
    %v381 = vld [vmem:[%s1 + $0xa88] sm:$0xff]
    %v382 = vld [vmem:[%s1 + $0xa90] sm:$0xff]
    %v383 = vld [vmem:[%s1 + $0xa98] sm:$0xff]
    %v384 = vld [vmem:[%s1 + $0xaa0] sm:$0xff]
    %v385 = vld [vmem:[%s1 + $0xaa8] sm:$0xff]
    %v386 = vld [vmem:[%s1 + $0xab0] sm:$0xff]
    %v387 = vld [vmem:[%s1 + $0xab8] sm:$0xff]
    %v388 = vld [vmem:[%s1 + $0xac0] sm:$0xff]
    %v389 = vld [vmem:[%s1 + $0xac8] sm:$0xff]
    %v390 = vld [vmem:[%s1 + $0xad0] sm:$0xff]
    %v391 = vld [vmem:[%s1 + $0xad8] sm:$0xff]
    %v392 = vld [vmem:[%s1 + $0xae0] sm:$0xff]
    %v393 = vld [vmem:[%s1 + $0xae8] sm:$0xff]
    %v394 = vld [vmem:[%s1 + $0xaf0] sm:$0xff]
    %v395 = vld [vmem:[%s1 + $0xaf8] sm:$0xff]
    %v396 = vld [vmem:[%s1 + $0xb00] sm:$0xff]
    %v397 = vld [vmem:[%s1 + $0xb08] sm:$0xff]
    %v398 = vld [vmem:[%s1 + $0xb10] sm:$0xff]
    %v399 = vld [vmem:[%s1 + $0xb18] sm:$0xff]
    %v400 = vld [vmem:[%s1 + $0xb20] sm:$0xff]
    %v401 = vld [vmem:[%s1 + $0xb28] sm:$0xff]
    %v402 = vld [vmem:[%s1 + $0xb30] sm:$0xff]
    %v403 = vld [vmem:[%s1 + $0xb38] sm:$0xff]
    %v404 = vld [vmem:[%s1 + $0xb40] sm:$0xff]
    %v405 = vld [vmem:[%s1 + $0xb48] sm:$0xff]
    %v406 = vld [vmem:[%s1 + $0xb50] sm:$0xff]
    %v407 = vld [vmem:[%s1 + $0xb58] sm:$0xff]
    %v408 = vld [vmem:[%s1 + $0xb60] sm:$0xff]
    %v409 = vld [vmem:[%s1 + $0xb68] sm:$0xff]
    %v410 = vld [vmem:[%s1 + $0xb70] sm:$0xff]
    %v411 = vld [vmem:[%s1 + $0xb78] sm:$0xff]
    %v412 = vld [vmem:[%s1 + $0xb80] sm:$0xff]
    %v413 = vld [vmem:[%s1 + $0xb88] sm:$0xff]
    %v414 = vld [vmem:[%s1 + $0xb90] sm:$0xff]
    %v415 = vld [vmem:[%s1 + $0xb98] sm:$0xff]
    %v416 = vld [vmem:[%s1 + $0xba0] sm:$0xff]
    %v417 = vld [vmem:[%s1 + $0xba8] sm:$0xff]
    %v418 = vld [vmem:[%s1 + $0xbb0] sm:$0xff]
    %v419 = vld [vmem:[%s1 + $0xbb8] sm:$0xff]
    %v420 = vld [vmem:[%s1 + $0xbc0] sm:$0xff]
    %v421 = vld [vmem:[%s1 + $0xbc8] sm:$0xff]
    %v422 = vld [vmem:[%s1 + $0xbd0] sm:$0xff]
    %v423 = vld [vmem:[%s1 + $0xbd8] sm:$0xff]
    %v424 = vld [vmem:[%s1 + $0xbe0] sm:$0xff]
    %v425 = vld [vmem:[%s1 + $0xbe8] sm:$0xff]
    %v426 = vld [vmem:[%s1 + $0xbf0] sm:$0xff]
    %v427 = vld [vmem:[%s1 + $0xbf8] sm:$0xff]
    %v428 = vld [vmem:[%s1 + $0xc00] sm:$0xff]
    %v429 = vld [vmem:[%s1 + $0xc08] sm:$0xff]
    %v430 = vld [vmem:[%s1 + $0xc10] sm:$0xff]
    %v431 = vld [vmem:[%s1 + $0xc18] sm:$0xff]
    %v432 = vld [vmem:[%s1 + $0xc20] sm:$0xff]
    %v433 = vld [vmem:[%s1 + $0xc28] sm:$0xff]
    %v434 = vld [vmem:[%s1 + $0xc30] sm:$0xff]
    %v435 = vld [vmem:[%s1 + $0xc38] sm:$0xff]
    %v436 = vld [vmem:[%s1 + $0xc40] sm:$0xff]
    %v437 = vld [vmem:[%s1 + $0xc48] sm:$0xff]
    %v438 = vld [vmem:[%s1 + $0xc50] sm:$0xff]
    %v439 = vld [vmem:[%s1 + $0xc58] sm:$0xff]
    %v440 = vld [vmem:[%s1 + $0xc60] sm:$0xff]
    %v441 = vld [vmem:[%s1 + $0xc68] sm:$0xff]
    %v442 = vld [vmem:[%s1 + $0xc70] sm:$0xff]
    %v443 = vld [vmem:[%s1 + $0xc78] sm:$0xff]
    %v444 = vld [vmem:[%s1 + $0xc80] sm:$0xff]
    %v445 = vld [vmem:[%s1 + $0xc88] sm:$0xff]
    %v446 = vld [vmem:[%s1 + $0xc90] sm:$0xff]
    %v447 = vld [vmem:[%s1 + $0xc98] sm:$0xff]
    %v448 = vld [vmem:[%s1 + $0xca0] sm:$0xff]
    %v449 = vld [vmem:[%s1 + $0xca8] sm:$0xff]
    %v450 = vld [vmem:[%s1 + $0xcb0] sm:$0xff]
    %v451 = vld [vmem:[%s1 + $0xcb8] sm:$0xff]
    %v452 = vld [vmem:[%s1 + $0xcc0] sm:$0xff]
    %v453 = vld [vmem:[%s1 + $0xcc8] sm:$0xff]
    %v454 = vld [vmem:[%s1 + $0xcd0] sm:$0xff]
    %v455 = vld [vmem:[%s1 + $0xcd8] sm:$0xff]
    %v456 = vld [vmem:[%s1 + $0xce0] sm:$0xff]
    %v457 = vld [vmem:[%s1 + $0xce8] sm:$0xff]
    %v458 = vld [vmem:[%s1 + $0xcf0] sm:$0xff]
    %v459 = vld [vmem:[%s1 + $0xcf8] sm:$0xff]
    %v460 = vld [vmem:[%s1 + $0xd00] sm:$0xff]
    %v461 = vld [vmem:[%s1 + $0xd08] sm:$0xff]
    %v462 = vld [vmem:[%s1 + $0xd10] sm:$0xff]
    %v463 = vld [vmem:[%s1 + $0xd18] sm:$0xff]
    %v464 = vld [vmem:[%s1 + $0xd20] sm:$0xff]
    %v465 = vld [vmem:[%s1 + $0xd28] sm:$0xff]
    %v466 = vld [vmem:[%s1 + $0xd30] sm:$0xff]
    %v467 = vld [vmem:[%s1 + $0xd38] sm:$0xff]
    %v468 = vld [vmem:[%s1 + $0xd40] sm:$0xff]
    %v469 = vld [vmem:[%s1 + $0xd48] sm:$0xff]
    %v470 = vld [vmem:[%s1 + $0xd50] sm:$0xff]
    %v471 = vld [vmem:[%s1 + $0xd58] sm:$0xff]
    %v472 = vld [vmem:[%s1 + $0xd60] sm:$0xff]
    %v473 = vld [vmem:[%s1 + $0xd68] sm:$0xff]
    %v474 = vld [vmem:[%s1 + $0xd70] sm:$0xff]
    %v475 = vld [vmem:[%s1 + $0xd78] sm:$0xff]
    %v476 = vld [vmem:[%s1 + $0xd80] sm:$0xff]
    %v477 = vld [vmem:[%s1 + $0xd88] sm:$0xff]
    %v478 = vld [vmem:[%s1 + $0xd90] sm:$0xff]
    %v479 = vld [vmem:[%s1 + $0xd98] sm:$0xff]
    %v480 = vld [vmem:[%s1 + $0xda0] sm:$0xff]
    %v481 = vld [vmem:[%s1 + $0xda8] sm:$0xff]
    %v482 = vld [vmem:[%s1 + $0xdb0] sm:$0xff]
    %v483 = vld [vmem:[%s1 + $0xdb8] sm:$0xff]
    %v484 = vld [vmem:[%s1 + $0xdc0] sm:$0xff]
    %v485 = vld [vmem:[%s1 + $0xdc8] sm:$0xff]
    %v486 = vld [vmem:[%s1 + $0xdd0] sm:$0xff]
    %v487 = vld [vmem:[%s1 + $0xdd8] sm:$0xff]
    %v488 = vld [vmem:[%s1 + $0xde0] sm:$0xff]
    %v489 = vld [vmem:[%s1 + $0xde8] sm:$0xff]
    %v490 = vld [vmem:[%s1 + $0xdf0] sm:$0xff]
    %v491 = vld [vmem:[%s1 + $0xdf8] sm:$0xff]
    %v492 = vld [vmem:[%s1 + $0xe00] sm:$0xff]
    %v493 = vld [vmem:[%s1 + $0xe08] sm:$0xff]
    %v494 = vld [vmem:[%s1 + $0xe10] sm:$0xff]
    %v495 = vld [vmem:[%s1 + $0xe18] sm:$0xff]
    %v496 = vld [vmem:[%s1 + $0xe20] sm:$0xff]
    %v497 = vld [vmem:[%s1 + $0xe28] sm:$0xff]
    %v498 = vld [vmem:[%s1 + $0xe30] sm:$0xff]
    %v499 = vld [vmem:[%s1 + $0xe38] sm:$0xff]
    %v500 = vld [vmem:[%s1 + $0xe40] sm:$0xff]
    %v501 = vld [vmem:[%s1 + $0xe48] sm:$0xff]
    %v502 = vld [vmem:[%s1 + $0xe50] sm:$0xff]
    %v503 = vld [vmem:[%s1 + $0xe58] sm:$0xff]
    %v504 = vld [vmem:[%s1 + $0xe60] sm:$0xff]
    %v505 = vld [vmem:[%s1 + $0xe68] sm:$0xff]
    %v506 = vld [vmem:[%s1 + $0xe70] sm:$0xff]
    %v507 = vld [vmem:[%s1 + $0xe78] sm:$0xff]
    %v508 = vld [vmem:[%s1 + $0xe80] sm:$0xff]
    %v509 = vld [vmem:[%s1 + $0xe88] sm:$0xff]
    %v510 = vld [vmem:[%s1 + $0xe90] sm:$0xff]
    %v511 = vld [vmem:[%s1 + $0xe98] sm:$0xff]
    %v512 = vld [vmem:[%s1 + $0xea0] sm:$0xff]
    %v513 = vld [vmem:[%s1 + $0xea8] sm:$0xff]
    %v514 = vld [vmem:[%s1 + $0xeb0] sm:$0xff]
    %v515 = vld [vmem:[%s1 + $0xeb8] sm:$0xff]
    %v516 = vld [vmem:[%s1 + $0xec0] sm:$0xff]
    %v517 = vld [vmem:[%s1 + $0xec8] sm:$0xff]
    %v518 = vld [vmem:[%s1 + $0xed0] sm:$0xff]
    %v519 = vld [vmem:[%s1 + $0xed8] sm:$0xff]
    %v520 = vld [vmem:[%s1 + $0xee0] sm:$0xff]
    %v521 = vld [vmem:[%s1 + $0xee8] sm:$0xff]
    %v522 = vld [vmem:[%s1 + $0xef0] sm:$0xff]
    %v523 = vld [vmem:[%s1 + $0xef8] sm:$0xff]
    %v524 = vld [vmem:[%s1 + $0xf00] sm:$0xff]
    %v525 = vld [vmem:[%s1 + $0xf08] sm:$0xff]
    %v526 = vld [vmem:[%s1 + $0xf10] sm:$0xff]
    %v527 = vld [vmem:[%s1 + $0xf18] sm:$0xff]
    %v528 = vld [vmem:[%s1 + $0xf20] sm:$0xff]
    %v529 = vld [vmem:[%s1 + $0xf28] sm:$0xff]
    %v530 = vld [vmem:[%s1 + $0xf30] sm:$0xff]
    %v531 = vld [vmem:[%s1 + $0xf38] sm:$0xff]
    %v532 = vld [vmem:[%s1 + $0xf40] sm:$0xff]
    %v533 = vld [vmem:[%s1 + $0xf48] sm:$0xff]
    %v534 = vld [vmem:[%s1 + $0xf50] sm:$0xff]
    %v535 = vld [vmem:[%s1 + $0xf58] sm:$0xff]
    %v536 = vld [vmem:[%s1 + $0xf60] sm:$0xff]
    %v537 = vld [vmem:[%s1 + $0xf68] sm:$0xff]
    %v538 = vld [vmem:[%s1 + $0xf70] sm:$0xff]
    %v539 = vld [vmem:[%s1 + $0xf78] sm:$0xff]
    %v540 = vld [vmem:[%s1 + $0xf80] sm:$0xff]
    %v541 = vld [vmem:[%s1 + $0xf88] sm:$0xff]
    %v542 = vld [vmem:[%s1 + $0xf90] sm:$0xff]
    %v543 = vld [vmem:[%s1 + $0xf98] sm:$0xff]
    %v544 = vld [vmem:[%s1 + $0xfa0] sm:$0xff]
    %v545 = vld [vmem:[%s1 + $0xfa8] sm:$0xff]
    %v546 = vld [vmem:[%s1 + $0xfb0] sm:$0xff]
    %v547 = vld [vmem:[%s1 + $0xfb8] sm:$0xff]
    %v548 = vld [vmem:[%s1 + $0xfc0] sm:$0xff]
    %v549 = vld [vmem:[%s1 + $0xfc8] sm:$0xff]
    %v550 = vld [vmem:[%s1 + $0xfd0] sm:$0xff]
    %v551 = vld [vmem:[%s1 + $0xfd8] sm:$0xff]
    %v552 = vld [vmem:[%s1 + $0xfe0] sm:$0xff]
    %v553 = vld [vmem:[%s1 + $0xfe8] sm:$0xff]
    %v554 = vld [vmem:[%s1 + $0xff0] sm:$0xff]
    %v555 = vld [vmem:[%s1 + $0xff8] sm:$0xff]
    %v556 = vld [vmem:[%s1 + $0x1000] sm:$0xff]
    %v557 = vld [vmem:[%s1 + $0x1008] sm:$0xff]
    %v558 = vld [vmem:[%s1 + $0x1010] sm:$0xff]
    %v559 = vld [vmem:[%s1 + $0x1018] sm:$0xff]
    %v560 = vld [vmem:[%s1 + $0x1020] sm:$0xff]
    %v561 = vld [vmem:[%s1 + $0x1028] sm:$0xff]
    %v562 = vld [vmem:[%s1 + $0x1030] sm:$0xff]
    %v563 = vld [vmem:[%s1 + $0x1038] sm:$0xff]
    %v564 = vld [vmem:[%s1 + $0x1040] sm:$0xff]
    %v565 = vld [vmem:[%s1 + $0x1048] sm:$0xff]
    %v566 = vld [vmem:[%s1 + $0x1050] sm:$0xff]
    %v567 = vld [vmem:[%s1 + $0x1058] sm:$0xff]
    %v568 = vld [vmem:[%s1 + $0x1060] sm:$0xff]
    %v569 = vld [vmem:[%s1 + $0x1068] sm:$0xff]
    %v570 = vld [vmem:[%s1 + $0x1070] sm:$0xff]
    %v571 = vld [vmem:[%s1 + $0x1078] sm:$0xff]
    %v572 = vld [vmem:[%s1 + $0x1080] sm:$0xff]
    %v573 = vld [vmem:[%s1 + $0x1088] sm:$0xff]
    %v574 = vld [vmem:[%s1 + $0x1090] sm:$0xff]
    %v575 = vld [vmem:[%s1 + $0x1098] sm:$0xff]
    %v576 = vld [vmem:[%s1 + $0x10a0] sm:$0xff]
    %v577 = vld [vmem:[%s1 + $0x10a8] sm:$0xff]
    %v578 = vld [vmem:[%s1 + $0x10b0] sm:$0xff]
    %v579 = vld [vmem:[%s1 + $0x10b8] sm:$0xff]
    %v580 = vld [vmem:[%s1 + $0x10c0] sm:$0xff]
    %v581 = vld [vmem:[%s1 + $0x10c8] sm:$0xff]
    %v582 = vld [vmem:[%s1 + $0x10d0] sm:$0xff]
    %v583 = vld [vmem:[%s1 + $0x10d8] sm:$0xff]
    %v584 = vld [vmem:[%s1 + $0x10e0] sm:$0xff]
    %v585 = vld [vmem:[%s1 + $0x10e8] sm:$0xff]
    %v586 = vld [vmem:[%s1 + $0x10f0] sm:$0xff]
    %v587 = vld [vmem:[%s1 + $0x10f8] sm:$0xff]
    %v588 = vld [vmem:[%s1 + $0x1100] sm:$0xff]
    %v589 = vld [vmem:[%s1 + $0x1108] sm:$0xff]
    %v590 = vld [vmem:[%s1 + $0x1110] sm:$0xff]
    %v591 = vld [vmem:[%s1 + $0x1118] sm:$0xff]
    %v592 = vld [vmem:[%s1 + $0x1120] sm:$0xff]
    %v593 = vld [vmem:[%s1 + $0x1128] sm:$0xff]
    %v594 = vld [vmem:[%s1 + $0x1130] sm:$0xff]
    %v595 = vld [vmem:[%s1 + $0x1138] sm:$0xff]
    %v596 = vld [vmem:[%s1 + $0x1140] sm:$0xff]
    %v597 = vld [vmem:[%s1 + $0x1148] sm:$0xff]
    %v598 = vld [vmem:[%s1 + $0x1150] sm:$0xff]
    %v599 = vld [vmem:[%s1 + $0x1158] sm:$0xff]
    %v600 = vld [vmem:[%s1 + $0x1160] sm:$0xff]
    %v601 = vld [vmem:[%s1 + $0x1168] sm:$0xff]
    %v602 = vld [vmem:[%s1 + $0x1170] sm:$0xff]
    %v603 = vld [vmem:[%s1 + $0x1178] sm:$0xff]
    %v604 = vld [vmem:[%s1 + $0x1180] sm:$0xff]
    %v605 = vld [vmem:[%s1 + $0x1188] sm:$0xff]
    %v606 = vld [vmem:[%s1 + $0x1190] sm:$0xff]
    %v607 = vld [vmem:[%s1 + $0x1198] sm:$0xff]
    %v608 = vld [vmem:[%s1 + $0x11a0] sm:$0xff]
    %v609 = vld [vmem:[%s1 + $0x11a8] sm:$0xff]
    %v610 = vld [vmem:[%s1 + $0x11b0] sm:$0xff]
    %v611 = vld [vmem:[%s1 + $0x11b8] sm:$0xff]
    %v612 = vld [vmem:[%s1 + $0x11c0] sm:$0xff]
    %v613 = vld [vmem:[%s1 + $0x11c8] sm:$0xff]
    %v614 = vld [vmem:[%s1 + $0x11d0] sm:$0xff]
    %v615 = vld [vmem:[%s1 + $0x11d8] sm:$0xff]
    %v616 = vld [vmem:[%s1 + $0x11e0] sm:$0xff]
    %v617 = vld [vmem:[%s1 + $0x11e8] sm:$0xff]
    %v618 = vld [vmem:[%s1 + $0x11f0] sm:$0xff]
    %v619 = vld [vmem:[%s1 + $0x11f8] sm:$0xff]
    %v620 = vld [vmem:[%s1 + $0x1200] sm:$0xff]
    %v621 = vld [vmem:[%s1 + $0x1208] sm:$0xff]
    %v622 = vld [vmem:[%s1 + $0x1210] sm:$0xff]
    %v623 = vld [vmem:[%s1 + $0x1218] sm:$0xff]
    %v624 = vld [vmem:[%s1 + $0x1220] sm:$0xff]
    %v625 = vld [vmem:[%s1 + $0x1228] sm:$0xff]
    %v626 = vld [vmem:[%s1 + $0x1230] sm:$0xff]
    %v627 = vld [vmem:[%s1 + $0x1238] sm:$0xff]
    %v628 = vld [vmem:[%s1 + $0x1240] sm:$0xff]
    %v629 = vld [vmem:[%s1 + $0x1248] sm:$0xff]
    %v630 = vld [vmem:[%s1 + $0x1250] sm:$0xff]
    %v631 = vld [vmem:[%s1 + $0x1258] sm:$0xff]
    %v632 = vld [vmem:[%s1 + $0x1260] sm:$0xff]
    %v633 = vld [vmem:[%s1 + $0x1268] sm:$0xff]
    %v634 = vld [vmem:[%s1 + $0x1270] sm:$0xff]
    %v635 = vld [vmem:[%s1 + $0x1278] sm:$0xff]
    %v636 = vld [vmem:[%s1 + $0x1280] sm:$0xff]
    %v637 = vld [vmem:[%s1 + $0x1288] sm:$0xff]
    %v638 = vld [vmem:[%s1 + $0x1290] sm:$0xff]
    %v639 = vld [vmem:[%s1 + $0x1298] sm:$0xff]
    %v640 = vld [vmem:[%s1 + $0x12a0] sm:$0xff]
    %v641 = vld [vmem:[%s1 + $0x12a8] sm:$0xff]
    %v642 = vld [vmem:[%s1 + $0x12b0] sm:$0xff]
    %v643 = vld [vmem:[%s1 + $0x12b8] sm:$0xff]
    %v644 = vld [vmem:[%s1 + $0x12c0] sm:$0xff]
    %v645 = vld [vmem:[%s1 + $0x12c8] sm:$0xff]
    %v646 = vld [vmem:[%s1 + $0x12d0] sm:$0xff]
    %v647 = vld [vmem:[%s1 + $0x12d8] sm:$0xff]
    %v648 = vld [vmem:[%s1 + $0x12e0] sm:$0xff]
    %v649 = vld [vmem:[%s1 + $0x12e8] sm:$0xff]
    %v650 = vld [vmem:[%s1 + $0x12f0] sm:$0xff]
    %v651 = vld [vmem:[%s1 + $0x12f8] sm:$0xff]
    %v652 = vld [vmem:[%s1 + $0x1300] sm:$0xff]
    %v653 = vld [vmem:[%s1 + $0x1308] sm:$0xff]
    %v654 = vld [vmem:[%s1 + $0x1310] sm:$0xff]
    %v655 = vld [vmem:[%s1 + $0x1318] sm:$0xff]
    %v656 = vld [vmem:[%s1 + $0x1320] sm:$0xff]
    %v657 = vld [vmem:[%s1 + $0x1328] sm:$0xff]
    %v658 = vld [vmem:[%s1 + $0x1330] sm:$0xff]
    %v659 = vld [vmem:[%s1 + $0x1338] sm:$0xff]
    %v660 = vld [vmem:[%s1 + $0x1340] sm:$0xff]
    %v661 = vld [vmem:[%s1 + $0x1348] sm:$0xff]
    %v662 = vld [vmem:[%s1 + $0x1350] sm:$0xff]
    %v663 = vld [vmem:[%s1 + $0x1358] sm:$0xff]
    %v664 = vld [vmem:[%s1 + $0x1360] sm:$0xff]
    %v665 = vld [vmem:[%s1 + $0x1368] sm:$0xff]
    %v666 = vld [vmem:[%s1 + $0x1370] sm:$0xff]
    %v667 = vld [vmem:[%s1 + $0x1378] sm:$0xff]
    %v668 = vld [vmem:[%s1 + $0x1380] sm:$0xff]
    %v669 = vld [vmem:[%s1 + $0x1388] sm:$0xff]
    %v670 = vld [vmem:[%s1 + $0x1390] sm:$0xff]
    %v671 = vld [vmem:[%s1 + $0x1398] sm:$0xff]
    %v672 = vld [vmem:[%s1 + $0x13a0] sm:$0xff]
    %v673 = vld [vmem:[%s1 + $0x13a8] sm:$0xff]
    %v674 = vld [vmem:[%s1 + $0x13b0] sm:$0xff]
    %v675 = vld [vmem:[%s1 + $0x13b8] sm:$0xff]
    %v676 = vld [vmem:[%s1 + $0x13c0] sm:$0xff]
    %v677 = vld [vmem:[%s1 + $0x13c8] sm:$0xff]
    %v678 = vld [vmem:[%s1 + $0x13d0] sm:$0xff]
    %v679 = vld [vmem:[%s1 + $0x13d8] sm:$0xff]
    %v680 = vld [vmem:[%s1 + $0x13e0] sm:$0xff]
    %v681 = vld [vmem:[%s1 + $0x13e8] sm:$0xff]
    %v682 = vld [vmem:[%s1 + $0x13f0] sm:$0xff]
    %v683 = vld [vmem:[%s1 + $0x13f8] sm:$0xff]
    %v684 = vld [vmem:[%s1 + $0x1400] sm:$0xff]
    %v685 = vld [vmem:[%s1 + $0x1408] sm:$0xff]
    %v686 = vld [vmem:[%s1 + $0x1410] sm:$0xff]
    %v687 = vld [vmem:[%s1 + $0x1418] sm:$0xff]
    %v688 = vld [vmem:[%s1 + $0x1420] sm:$0xff]
    %v689 = vld [vmem:[%s1 + $0x1428] sm:$0xff]
    %v690 = vld [vmem:[%s1 + $0x1430] sm:$0xff]
    %v691 = vld [vmem:[%s1 + $0x1438] sm:$0xff]
    %v692 = vld [vmem:[%s1 + $0x1440] sm:$0xff]
    %v693 = vld [vmem:[%s1 + $0x1448] sm:$0xff]
    %v694 = vld [vmem:[%s1 + $0x1450] sm:$0xff]
    %v695 = vld [vmem:[%s1 + $0x1458] sm:$0xff]
    %v696 = vld [vmem:[%s1 + $0x1460] sm:$0xff]
    %v697 = vld [vmem:[%s1 + $0x1468] sm:$0xff]
    %v698 = vld [vmem:[%s1 + $0x1470] sm:$0xff]
    %v699 = vld [vmem:[%s1 + $0x1478] sm:$0xff]
    %v700 = vld [vmem:[%s1 + $0x1480] sm:$0xff]
    %v701 = vld [vmem:[%s1 + $0x1488] sm:$0xff]
    %v702 = vld [vmem:[%s1 + $0x1490] sm:$0xff]
    %v703 = vld [vmem:[%s1 + $0x1498] sm:$0xff]
    %v704 = vld [vmem:[%s1 + $0x14a0] sm:$0xff]
    %v705 = vld [vmem:[%s1 + $0x14a8] sm:$0xff]
    %v706 = vld [vmem:[%s1 + $0x14b0] sm:$0xff]
    %v707 = vld [vmem:[%s1 + $0x14b8] sm:$0xff]
    %v708 = vld [vmem:[%s1 + $0x14c0] sm:$0xff]
    %v709 = vld [vmem:[%s1 + $0x14c8] sm:$0xff]
    %v710 = vld [vmem:[%s1 + $0x14d0] sm:$0xff]
    %v711 = vld [vmem:[%s1 + $0x14d8] sm:$0xff]
    %v712 = vld [vmem:[%s1 + $0x14e0] sm:$0xff]
    %v713 = vld [vmem:[%s1 + $0x14e8] sm:$0xff]
    %v714 = vld [vmem:[%s1 + $0x14f0] sm:$0xff]
    %v715 = vld [vmem:[%s1 + $0x14f8] sm:$0xff]
    %v716 = vld [vmem:[%s1 + $0x1500] sm:$0xff]
    %v717 = vld [vmem:[%s1 + $0x1508] sm:$0xff]
    %v718 = vld [vmem:[%s1 + $0x1510] sm:$0xff]
    %v719 = vld [vmem:[%s1 + $0x1518] sm:$0xff]
    %v720 = vld [vmem:[%s1 + $0x1520] sm:$0xff]
    %v721 = vld [vmem:[%s1 + $0x1528] sm:$0xff]
    %v722 = vld [vmem:[%s1 + $0x1530] sm:$0xff]
    %v723 = vld [vmem:[%s1 + $0x1538] sm:$0xff]
    %v724 = vld [vmem:[%s1 + $0x1540] sm:$0xff]
    %v725 = vld [vmem:[%s1 + $0x1548] sm:$0xff]
    %v726 = vld [vmem:[%s1 + $0x1550] sm:$0xff]
    %v727 = vld [vmem:[%s1 + $0x1558] sm:$0xff]
    %v728 = vld [vmem:[%s1 + $0x1560] sm:$0xff]
    %v729 = vld [vmem:[%s1 + $0x1568] sm:$0xff]
    %v730 = vld [vmem:[%s1 + $0x1570] sm:$0xff]
    %v731 = vld [vmem:[%s1 + $0x1578] sm:$0xff]
    %v732 = vld [vmem:[%s1 + $0x1580] sm:$0xff]
    %v733 = vld [vmem:[%s1 + $0x1588] sm:$0xff]
    %v734 = vld [vmem:[%s1 + $0x1590] sm:$0xff]
    %v735 = vld [vmem:[%s1 + $0x1598] sm:$0xff]
    %v736 = vld [vmem:[%s1 + $0x15a0] sm:$0xff]
    %v737 = vld [vmem:[%s1 + $0x15a8] sm:$0xff]
    %v738 = vld [vmem:[%s1 + $0x15b0] sm:$0xff]
    %v739 = vld [vmem:[%s1 + $0x15b8] sm:$0xff]
    %v740 = vld [vmem:[%s1 + $0x15c0] sm:$0xff]
    %v741 = vld [vmem:[%s1 + $0x15c8] sm:$0xff]
    %v742 = vld [vmem:[%s1 + $0x15d0] sm:$0xff]
    %v743 = vld [vmem:[%s1 + $0x15d8] sm:$0xff]
    %v744 = vld [vmem:[%s1 + $0x15e0] sm:$0xff]
    %v745 = vld [vmem:[%s1 + $0x15e8] sm:$0xff]
    %v746 = vld [vmem:[%s1 + $0x15f0] sm:$0xff]
    %v747 = vld [vmem:[%s1 + $0x15f8] sm:$0xff]
    %v748 = vld [vmem:[%s1 + $0x1600] sm:$0xff]
    %v749 = vld [vmem:[%s1 + $0x1608] sm:$0xff]
    %v750 = vld [vmem:[%s1 + $0x1610] sm:$0xff]
    %v751 = vld [vmem:[%s1 + $0x1618] sm:$0xff]
    %v752 = vld [vmem:[%s1 + $0x1620] sm:$0xff]
    %v753 = vld [vmem:[%s1 + $0x1628] sm:$0xff]
    %v754 = vld [vmem:[%s1 + $0x1630] sm:$0xff]
    %v755 = vld [vmem:[%s1 + $0x1638] sm:$0xff]
    %v756 = vld [vmem:[%s1 + $0x1640] sm:$0xff]
    %v757 = vld [vmem:[%s1 + $0x1648] sm:$0xff]
    %v758 = vld [vmem:[%s1 + $0x1650] sm:$0xff]
    %v759 = vld [vmem:[%s1 + $0x1658] sm:$0xff]
    %v760 = vld [vmem:[%s1 + $0x1660] sm:$0xff]
    %v761 = vld [vmem:[%s1 + $0x1668] sm:$0xff]
    %v762 = vld [vmem:[%s1 + $0x1670] sm:$0xff]
    %v763 = vld [vmem:[%s1 + $0x1678] sm:$0xff]
    %v764 = vld [vmem:[%s1 + $0x1680] sm:$0xff]
    %v765 = vld [vmem:[%s1 + $0x1688] sm:$0xff]
    %v766 = vld [vmem:[%s1 + $0x1690] sm:$0xff]
    %v767 = vld [vmem:[%s1 + $0x1698] sm:$0xff]
    %v768 = vld [vmem:[%s1 + $0x16a0] sm:$0xff]
    %v769 = vld [vmem:[%s1 + $0x16a8] sm:$0xff]
    %v770 = vld [vmem:[%s1 + $0x16b0] sm:$0xff]
    %v771 = vld [vmem:[%s1 + $0x16b8] sm:$0xff]
    %v772 = vld [vmem:[%s1 + $0x16c0] sm:$0xff]
    %v773 = vld [vmem:[%s1 + $0x16c8] sm:$0xff]
    %v774 = vld [vmem:[%s1 + $0x16d0] sm:$0xff]
    %v775 = vld [vmem:[%s1 + $0x16d8] sm:$0xff]
    %v776 = vld [vmem:[%s1 + $0x16e0] sm:$0xff]
    %v777 = vld [vmem:[%s1 + $0x16e8] sm:$0xff]
    %v778 = vld [vmem:[%s1 + $0x16f0] sm:$0xff]
    %v779 = vld [vmem:[%s1 + $0x16f8] sm:$0xff]
    %v780 = vld [vmem:[%s1 + $0x1700] sm:$0xff]
    %v781 = vld [vmem:[%s1 + $0x1708] sm:$0xff]
    %v782 = vld [vmem:[%s1 + $0x1710] sm:$0xff]
    %v783 = vld [vmem:[%s1 + $0x1718] sm:$0xff]
    %v784 = vld [vmem:[%s1 + $0x1720] sm:$0xff]
    %v785 = vld [vmem:[%s1 + $0x1728] sm:$0xff]
    %v786 = vld [vmem:[%s1 + $0x1730] sm:$0xff]
    %v787 = vld [vmem:[%s1 + $0x1738] sm:$0xff]
    %v788 = vld [vmem:[%s1 + $0x1740] sm:$0xff]
    %v789 = vld [vmem:[%s1 + $0x1748] sm:$0xff]
    %v790 = vld [vmem:[%s1 + $0x1750] sm:$0xff]
    %v791 = vld [vmem:[%s1 + $0x1758] sm:$0xff]
    %v792 = vld [vmem:[%s1 + $0x1760] sm:$0xff]
    %v793 = vld [vmem:[%s1 + $0x1768] sm:$0xff]
    %v794 = vld [vmem:[%s1 + $0x1770] sm:$0xff]
    %v795 = vld [vmem:[%s1 + $0x1778] sm:$0xff]
    %v796 = vld [vmem:[%s1 + $0x1780] sm:$0xff]
    %v797 = vld [vmem:[%s1 + $0x1788] sm:$0xff]
    %v798 = vld [vmem:[%s1 + $0x1790] sm:$0xff]
    %v799 = vld [vmem:[%s1 + $0x1798] sm:$0xff]
    %v800 = vld [vmem:[%s1 + $0x17a0] sm:$0xff]
    %v801 = vld [vmem:[%s1 + $0x17a8] sm:$0xff]
    %v802 = vld [vmem:[%s1 + $0x17b0] sm:$0xff]
    %v803 = vld [vmem:[%s1 + $0x17b8] sm:$0xff]
    %v804 = vld [vmem:[%s1 + $0x17c0] sm:$0xff]
    %v805 = vld [vmem:[%s1 + $0x17c8] sm:$0xff]
    %v806 = vld [vmem:[%s1 + $0x17d0] sm:$0xff]
    %v807 = vld [vmem:[%s1 + $0x17d8] sm:$0xff]
    %v808 = vld [vmem:[%s1 + $0x17e0] sm:$0xff]
    %v809 = vld [vmem:[%s1 + $0x17e8] sm:$0xff]
    %v810 = vld [vmem:[%s1 + $0x17f0] sm:$0xff]
    %v811 = vld [vmem:[%s1 + $0x17f8] sm:$0xff]
    %v812 = vld [vmem:[%s1 + $0x1800] sm:$0xff]
    %v813 = vld [vmem:[%s1 + $0x1808] sm:$0xff]
    %v814 = vld [vmem:[%s1 + $0x1810] sm:$0xff]
    %v815 = vld [vmem:[%s1 + $0x1818] sm:$0xff]
    %v816 = vld [vmem:[%s1 + $0x1820] sm:$0xff]
    %v817 = vld [vmem:[%s1 + $0x1828] sm:$0xff]
    %v818 = vld [vmem:[%s1 + $0x1830] sm:$0xff]
    %v819 = vld [vmem:[%s1 + $0x1838] sm:$0xff]
    %v820 = vld [vmem:[%s1 + $0x1840] sm:$0xff]
    %v821 = vld [vmem:[%s1 + $0x1848] sm:$0xff]
    %v822 = vld [vmem:[%s1 + $0x1850] sm:$0xff]
    %v823 = vld [vmem:[%s1 + $0x1858] sm:$0xff]
    %v824 = vld [vmem:[%s1 + $0x1860] sm:$0xff]
    %v825 = vld [vmem:[%s1 + $0x1868] sm:$0xff]
    %v826 = vld [vmem:[%s1 + $0x1870] sm:$0xff]
    %v827 = vld [vmem:[%s1 + $0x1878] sm:$0xff]
    %v828 = vld [vmem:[%s1 + $0x1880] sm:$0xff]
    %v829 = vld [vmem:[%s1 + $0x1888] sm:$0xff]
    %v830 = vld [vmem:[%s1 + $0x1890] sm:$0xff]
    %v831 = vld [vmem:[%s1 + $0x1898] sm:$0xff]
    %v832 = vld [vmem:[%s1 + $0x18a0] sm:$0xff]
    %v833 = vld [vmem:[%s1 + $0x18a8] sm:$0xff]
    %v834 = vld [vmem:[%s1 + $0x18b0] sm:$0xff]
    %v835 = vld [vmem:[%s1 + $0x18b8] sm:$0xff]
    %v836 = vld [vmem:[%s1 + $0x18c0] sm:$0xff]
    %v837 = vld [vmem:[%s1 + $0x18c8] sm:$0xff]
    %v838 = vld [vmem:[%s1 + $0x18d0] sm:$0xff]
    %v839 = vld [vmem:[%s1 + $0x18d8] sm:$0xff]
    %v840 = vld [vmem:[%s1 + $0x18e0] sm:$0xff]
    %v841 = vld [vmem:[%s1 + $0x18e8] sm:$0xff]
    %v842 = vld [vmem:[%s1 + $0x18f0] sm:$0xff]
    %v843 = vld [vmem:[%s1 + $0x18f8] sm:$0xff]
    %v844 = vld [vmem:[%s1 + $0x1900] sm:$0xff]
    %v845 = vld [vmem:[%s1 + $0x1908] sm:$0xff]
    %v846 = vld [vmem:[%s1 + $0x1910] sm:$0xff]
    %v847 = vld [vmem:[%s1 + $0x1918] sm:$0xff]
    %v848 = vld [vmem:[%s1 + $0x1920] sm:$0xff]
    %v849 = vld [vmem:[%s1 + $0x1928] sm:$0xff]
    %v850 = vld [vmem:[%s1 + $0x1930] sm:$0xff]
    %v851 = vld [vmem:[%s1 + $0x1938] sm:$0xff]
    %v852 = vld [vmem:[%s1 + $0x1940] sm:$0xff]
    %v853 = vld [vmem:[%s1 + $0x1948] sm:$0xff]
    %v854 = vld [vmem:[%s1 + $0x1950] sm:$0xff]
    %v855 = vld [vmem:[%s1 + $0x1958] sm:$0xff]
    %v856 = vld [vmem:[%s1 + $0x1960] sm:$0xff]
    %v857 = vld [vmem:[%s1 + $0x1968] sm:$0xff]
    %v858 = vld [vmem:[%s1 + $0x1970] sm:$0xff]
    %v859 = vld [vmem:[%s1 + $0x1978] sm:$0xff]
    %v860 = vld [vmem:[%s1 + $0x1980] sm:$0xff]
    %v861 = vld [vmem:[%s1 + $0x1988] sm:$0xff]
    %v862 = vld [vmem:[%s1 + $0x1990] sm:$0xff]
    %v863 = vld [vmem:[%s1 + $0x1998] sm:$0xff]
    %v864 = vld [vmem:[%s1 + $0x19a0] sm:$0xff]
    %v865 = vld [vmem:[%s1 + $0x19a8] sm:$0xff]
    %v866 = vld [vmem:[%s1 + $0x19b0] sm:$0xff]
    %v867 = vld [vmem:[%s1 + $0x19b8] sm:$0xff]
    %v868 = vld [vmem:[%s1 + $0x19c0] sm:$0xff]
    %v869 = vld [vmem:[%s1 + $0x19c8] sm:$0xff]
    %v870 = vld [vmem:[%s1 + $0x19d0] sm:$0xff]
    %v871 = vld [vmem:[%s1 + $0x19d8] sm:$0xff]
    %v872 = vld [vmem:[%s1 + $0x19e0] sm:$0xff]
    %v873 = vld [vmem:[%s1 + $0x19e8] sm:$0xff]
    %v874 = vld [vmem:[%s1 + $0x19f0] sm:$0xff]
    %v875 = vld [vmem:[%s1 + $0x19f8] sm:$0xff]
    %v876 = vld [vmem:[%s1 + $0x1a00] sm:$0xff]
    %v877 = vld [vmem:[%s1 + $0x1a08] sm:$0xff]
    %v878 = vld [vmem:[%s1 + $0x1a10] sm:$0xff]
    %v879 = vld [vmem:[%s1 + $0x1a18] sm:$0xff]
    %v880 = vld [vmem:[%s1 + $0x1a20] sm:$0xff]
    %v881 = vld [vmem:[%s1 + $0x1a28] sm:$0xff]
    %v882 = vld [vmem:[%s1 + $0x1a30] sm:$0xff]
    %v883 = vld [vmem:[%s1 + $0x1a38] sm:$0xff]
    %v884 = vld [vmem:[%s1 + $0x1a40] sm:$0xff]
    %v885 = vld [vmem:[%s1 + $0x1a48] sm:$0xff]
    %v886 = vld [vmem:[%s1 + $0x1a50] sm:$0xff]
    %v887 = vld [vmem:[%s1 + $0x1a58] sm:$0xff]
    %v888 = vld [vmem:[%s1 + $0x1a60] sm:$0xff]
    %v889 = vld [vmem:[%s1 + $0x1a68] sm:$0xff]
    %v890 = vld [vmem:[%s1 + $0x1a70] sm:$0xff]
    %v891 = vld [vmem:[%s1 + $0x1a78] sm:$0xff]
    %v892 = vld [vmem:[%s1 + $0x1a80] sm:$0xff]
    %v893 = vld [vmem:[%s1 + $0x1a88] sm:$0xff]
    %v894 = vld [vmem:[%s1 + $0x1a90] sm:$0xff]
    %v895 = vld [vmem:[%s1 + $0x1a98] sm:$0xff]
    %v896 = vld [vmem:[%s1 + $0x1aa0] sm:$0xff]
    %v897 = vld [vmem:[%s1 + $0x1aa8] sm:$0xff]
    %v898 = vld [vmem:[%s1 + $0x1ab0] sm:$0xff]
    %v899 = vld [vmem:[%s1 + $0x1ab8] sm:$0xff]
    %v900 = vld [vmem:[%s1 + $0x1ac0] sm:$0xff]
    %v901 = vld [vmem:[%s1 + $0x1ac8] sm:$0xff]
    %v902 = vld [vmem:[%s1 + $0x1ad0] sm:$0xff]
    %v903 = vld [vmem:[%s1 + $0x1ad8] sm:$0xff]
    %v904 = vld [vmem:[%s1 + $0x1ae0] sm:$0xff]
    %v905 = vld [vmem:[%s1 + $0x1ae8] sm:$0xff]
    %v906 = vld [vmem:[%s1 + $0x1af0] sm:$0xff]
    %v907 = vld [vmem:[%s1 + $0x1af8] sm:$0xff]
    %v908 = vld [vmem:[%s1 + $0x1b00] sm:$0xff]
    %v909 = vld [vmem:[%s1 + $0x1b08] sm:$0xff]
    %v910 = vld [vmem:[%s1 + $0x1b10] sm:$0xff]
    %v911 = vld [vmem:[%s1 + $0x1b18] sm:$0xff]
    %v912 = vld [vmem:[%s1 + $0x1b20] sm:$0xff]
    %v913 = vld [vmem:[%s1 + $0x1b28] sm:$0xff]
    %v914 = vld [vmem:[%s1 + $0x1b30] sm:$0xff]
    %v915 = vld [vmem:[%s1 + $0x1b38] sm:$0xff]
    %v916 = vld [vmem:[%s1 + $0x1b40] sm:$0xff]
    %v917 = vld [vmem:[%s1 + $0x1b48] sm:$0xff]
    %v918 = vld [vmem:[%s1 + $0x1b50] sm:$0xff]
    %v919 = vld [vmem:[%s1 + $0x1b58] sm:$0xff]
    %v920 = vld [vmem:[%s1 + $0x1b60] sm:$0xff]
    %v921 = vld [vmem:[%s1 + $0x1b68] sm:$0xff]
    %v922 = vld [vmem:[%s1 + $0x1b70] sm:$0xff]
    %v923 = vld [vmem:[%s1 + $0x1b78] sm:$0xff]
    %v924 = vld [vmem:[%s1 + $0x1b80] sm:$0xff]
    %v925 = vld [vmem:[%s1 + $0x1b88] sm:$0xff]
    %v926 = vld [vmem:[%s1 + $0x1b90] sm:$0xff]
    %v927 = vld [vmem:[%s1 + $0x1b98] sm:$0xff]
    %v928 = vld [vmem:[%s1 + $0x1ba0] sm:$0xff]
    %v929 = vld [vmem:[%s1 + $0x1ba8] sm:$0xff]
    %v930 = vld [vmem:[%s1 + $0x1bb0] sm:$0xff]
    %v931 = vld [vmem:[%s1 + $0x1bb8] sm:$0xff]
    %v932 = vld [vmem:[%s1 + $0x1bc0] sm:$0xff]
    %v933 = vld [vmem:[%s1 + $0x1bc8] sm:$0xff]
    %v934 = vld [vmem:[%s1 + $0x1bd0] sm:$0xff]
    %v935 = vld [vmem:[%s1 + $0x1bd8] sm:$0xff]
    %v936 = vld [vmem:[%s1 + $0x1be0] sm:$0xff]
    %v937 = vld [vmem:[%s1 + $0x1be8] sm:$0xff]
    %v938 = vld [vmem:[%s1 + $0x1bf0] sm:$0xff]
    %v939 = vld [vmem:[%s1 + $0x1bf8] sm:$0xff]
    %v940 = vld [vmem:[%s1 + $0x1c00] sm:$0xff]
    %v941 = vld [vmem:[%s1 + $0x1c08] sm:$0xff]
    %v942 = vld [vmem:[%s1 + $0x1c10] sm:$0xff]
    %v943 = vld [vmem:[%s1 + $0x1c18] sm:$0xff]
    %v944 = vld [vmem:[%s1 + $0x1c20] sm:$0xff]
    %v945 = vld [vmem:[%s1 + $0x1c28] sm:$0xff]
    %v946 = vld [vmem:[%s1 + $0x1c30] sm:$0xff]
    %v947 = vld [vmem:[%s1 + $0x1c38] sm:$0xff]
    %v948 = vld [vmem:[%s1 + $0x1c40] sm:$0xff]
    %v949 = vld [vmem:[%s1 + $0x1c48] sm:$0xff]
    %v950 = vld [vmem:[%s1 + $0x1c50] sm:$0xff]
    %v951 = vld [vmem:[%s1 + $0x1c58] sm:$0xff]
    %v952 = vld [vmem:[%s1 + $0x1c60] sm:$0xff]
    %v953 = vld [vmem:[%s1 + $0x1c68] sm:$0xff]
    %v954 = vld [vmem:[%s1 + $0x1c70] sm:$0xff]
    %v955 = vld [vmem:[%s1 + $0x1c78] sm:$0xff]
    %v956 = vld [vmem:[%s1 + $0x1c80] sm:$0xff]
    %v957 = vld [vmem:[%s1 + $0x1c88] sm:$0xff]
    %v958 = vld [vmem:[%s1 + $0x1c90] sm:$0xff]
    %v959 = vld [vmem:[%s1 + $0x1c98] sm:$0xff]
    %v960 = vld [vmem:[%s1 + $0x1ca0] sm:$0xff]
    %v961 = vld [vmem:[%s1 + $0x1ca8] sm:$0xff]
    %v962 = vld [vmem:[%s1 + $0x1cb0] sm:$0xff]
    %v963 = vld [vmem:[%s1 + $0x1cb8] sm:$0xff]
    %v964 = vld [vmem:[%s1 + $0x1cc0] sm:$0xff]
    %v965 = vld [vmem:[%s1 + $0x1cc8] sm:$0xff]
    %v966 = vld [vmem:[%s1 + $0x1cd0] sm:$0xff]
    %v967 = vld [vmem:[%s1 + $0x1cd8] sm:$0xff]
    %v968 = vld [vmem:[%s1 + $0x1ce0] sm:$0xff]
    %v969 = vld [vmem:[%s1 + $0x1ce8] sm:$0xff]
    %v970 = vld [vmem:[%s1 + $0x1cf0] sm:$0xff]
    %v971 = vld [vmem:[%s1 + $0x1cf8] sm:$0xff]
    %v972 = vld [vmem:[%s1 + $0x1d00] sm:$0xff]
    %v973 = vld [vmem:[%s1 + $0x1d08] sm:$0xff]
    %v974 = vld [vmem:[%s1 + $0x1d10] sm:$0xff]
    %v975 = vld [vmem:[%s1 + $0x1d18] sm:$0xff]
    %v976 = vld [vmem:[%s1 + $0x1d20] sm:$0xff]
    %v977 = vld [vmem:[%s1 + $0x1d28] sm:$0xff]
    %v978 = vld [vmem:[%s1 + $0x1d30] sm:$0xff]
    %v979 = vld [vmem:[%s1 + $0x1d38] sm:$0xff]
    %v980 = vld [vmem:[%s1 + $0x1d40] sm:$0xff]
    %v981 = vld [vmem:[%s1 + $0x1d48] sm:$0xff]
    %v982 = vld [vmem:[%s1 + $0x1d50] sm:$0xff]
    %v983 = vld [vmem:[%s1 + $0x1d58] sm:$0xff]
    %v984 = vld [vmem:[%s1 + $0x1d60] sm:$0xff]
    %v985 = vld [vmem:[%s1 + $0x1d68] sm:$0xff]
    %v986 = vld [vmem:[%s1 + $0x1d70] sm:$0xff]
    %v987 = vld [vmem:[%s1 + $0x1d78] sm:$0xff]
    %v988 = vld [vmem:[%s1 + $0x1d80] sm:$0xff]
    %v989 = vld [vmem:[%s1 + $0x1d88] sm:$0xff]
    %v990 = vld [vmem:[%s1 + $0x1d90] sm:$0xff]
    %v991 = vld [vmem:[%s1 + $0x1d98] sm:$0xff]
    %v992 = vld [vmem:[%s1 + $0x1da0] sm:$0xff]
    %v993 = vld [vmem:[%s1 + $0x1da8] sm:$0xff]
    %v994 = vld [vmem:[%s1 + $0x1db0] sm:$0xff]
    %v995 = vld [vmem:[%s1 + $0x1db8] sm:$0xff]
    %v996 = vld [vmem:[%s1 + $0x1dc0] sm:$0xff]
    %v997 = vld [vmem:[%s1 + $0x1dc8] sm:$0xff]
    %v998 = vld [vmem:[%s1 + $0x1dd0] sm:$0xff]
    %v999 = vld [vmem:[%s1 + $0x1dd8] sm:$0xff]
    %v1000 = vld [vmem:[%s1 + $0x1de0] sm:$0xff]
    %v1001 = vld [vmem:[%s1 + $0x1de8] sm:$0xff]
    %v1002 = vld [vmem:[%s1 + $0x1df0] sm:$0xff]
    %v1003 = vld [vmem:[%s1 + $0x1df8] sm:$0xff]
    %v1004 = vld [vmem:[%s1 + $0x1e00] sm:$0xff]
    %v1005 = vld [vmem:[%s1 + $0x1e08] sm:$0xff]
    %v1006 = vld [vmem:[%s1 + $0x1e10] sm:$0xff]
    %v1007 = vld [vmem:[%s1 + $0x1e18] sm:$0xff]
    %v1008 = vld [vmem:[%s1 + $0x1e20] sm:$0xff]
    %v1009 = vld [vmem:[%s1 + $0x1e28] sm:$0xff]
    %v1010 = vld [vmem:[%s1 + $0x1e30] sm:$0xff]
    %v1011 = vld [vmem:[%s1 + $0x1e38] sm:$0xff]
    %v1012 = vld [vmem:[%s1 + $0x1e40] sm:$0xff]
    %v1013 = vld [vmem:[%s1 + $0x1e48] sm:$0xff]
    %v1014 = vld [vmem:[%s1 + $0x1e50] sm:$0xff]
    %v1015 = vld [vmem:[%s1 + $0x1e58] sm:$0xff]
    %v1016 = vld [vmem:[%s1 + $0x1e60] sm:$0xff]
    %v1017 = vld [vmem:[%s1 + $0x1e68] sm:$0xff]
    %v1018 = vld [vmem:[%s1 + $0x1e70] sm:$0xff]
    %v1019 = vld [vmem:[%s1 + $0x1e78] sm:$0xff]
    %v1020 = vld [vmem:[%s1 + $0x1e80] sm:$0xff]
    %v1021 = vld [vmem:[%s1 + $0x1e88] sm:$0xff]
    %v1022 = vld [vmem:[%s1 + $0x1e90] sm:$0xff]
    %v1023 = vld [vmem:[%s1 + $0x1e98] sm:$0xff]
    %v1024 = vld [vmem:[%s1 + $0x1ea0] sm:$0xff]
    %v1025 = vld [vmem:[%s1 + $0x1ea8] sm:$0xff]
    %v1026 = vld [vmem:[%s1 + $0x1eb0] sm:$0xff]
    %v1027 = vld [vmem:[%s1 + $0x1eb8] sm:$0xff]
    %v1028 = vld [vmem:[%s1 + $0x1ec0] sm:$0xff]
    %v1029 = vld [vmem:[%s1 + $0x1ec8] sm:$0xff]
    %v1030 = vld [vmem:[%s1 + $0x1ed0] sm:$0xff]
    %v1031 = vld [vmem:[%s1 + $0x1ed8] sm:$0xff]
    %v1032 = vld [vmem:[%s1 + $0x1ee0] sm:$0xff]
    %v1033 = vld [vmem:[%s1 + $0x1ee8] sm:$0xff]
    %v1034 = vld [vmem:[%s1 + $0x1ef0] sm:$0xff]
    %v1035 = vld [vmem:[%s1 + $0x1ef8] sm:$0xff]
    %v1036 = vld [vmem:[%s1 + $0x1f00] sm:$0xff]
    %v1037 = vld [vmem:[%s1 + $0x1f08] sm:$0xff]
    %v1038 = vld [vmem:[%s1 + $0x1f10] sm:$0xff]
    %v1039 = vld [vmem:[%s1 + $0x1f18] sm:$0xff]
    %v1040 = vld [vmem:[%s1 + $0x1f20] sm:$0xff]
    %v1041 = vld [vmem:[%s1 + $0x1f28] sm:$0xff]
    %v1042 = vld [vmem:[%s1 + $0x1f30] sm:$0xff]
    %v1043 = vld [vmem:[%s1 + $0x1f38] sm:$0xff]
    %v1044 = vld [vmem:[%s1 + $0x1f40] sm:$0xff]
    %v1045 = vld [vmem:[%s1 + $0x1f48] sm:$0xff]
    %v1046 = vld [vmem:[%s1 + $0x1f50] sm:$0xff]
    %v1047 = vld [vmem:[%s1 + $0x1f58] sm:$0xff]
    %v1048 = vld [vmem:[%s1 + $0x1f60] sm:$0xff]
    %v1049 = vld [vmem:[%s1 + $0x1f68] sm:$0xff]
    %v1050 = vld [vmem:[%s1 + $0x1f70] sm:$0xff]
    %v1051 = vld [vmem:[%s1 + $0x1f78] sm:$0xff]
    %v1052 = vld [vmem:[%s1 + $0x1f80] sm:$0xff]
    %v1053 = vld [vmem:[%s1 + $0x1f88] sm:$0xff]
    %v1054 = vld [vmem:[%s1 + $0x1f90] sm:$0xff]
    %v1055 = vld [vmem:[%s1 + $0x1f98] sm:$0xff]
    %v1056 = vld [vmem:[%s1 + $0x1fa0] sm:$0xff]
    %v1057 = vld [vmem:[%s1 + $0x1fa8] sm:$0xff]
    %v1058 = vld [vmem:[%s1 + $0x1fb0] sm:$0xff]
    %v1059 = vld [vmem:[%s1 + $0x1fb8] sm:$0xff]
    %v1060 = vld [vmem:[%s1 + $0x1fc0] sm:$0xff]
    %v1061 = vld [vmem:[%s1 + $0x1fc8] sm:$0xff]
    %v1062 = vld [vmem:[%s1 + $0x1fd0] sm:$0xff]
    %v1063 = vld [vmem:[%s1 + $0x1fd8] sm:$0xff]
    %v1064 = vld [vmem:[%s1 + $0x1fe0] sm:$0xff]
    %v1065 = vld [vmem:[%s1 + $0x1fe8] sm:$0xff]
    %v1066 = vld [vmem:[%s1 + $0x1ff0] sm:$0xff]
    %v1067 = vld [vmem:[%s1 + $0x1ff8] sm:$0xff]
    %v1100 = vcombine.high %v12, %v12
    %v1101 = vcombine.high %v13, %v13
    %v1102 = vcombine.high %v14, %v14
    %v1103 = vcombine.high %v15, %v15
    %v1104 = vcombine.high %v16, %v16
    %v1105 = vcombine.high %v17, %v17
    %v1106 = vcombine.high %v18, %v18
    %v1107 = vcombine.high %v19, %v19
    %v1108 = vcombine.high %v20, %v20
    %v1109 = vcombine.high %v21, %v21
    %v1110 = vcombine.high %v22, %v22
    %v1111 = vcombine.high %v23, %v23
    %v1112 = vcombine.high %v24, %v24
    %v1113 = vcombine.high %v25, %v25
    %v1114 = vcombine.high %v26, %v26
    %v1115 = vcombine.high %v27, %v27
    %v1116 = vcombine.high %v28, %v28
    %v1117 = vcombine.high %v29, %v29
    %v1118 = vcombine.high %v30, %v30
    %v1119 = vcombine.high %v31, %v31
    %v1120 = vcombine.high %v32, %v32
    %v1121 = vcombine.high %v33, %v33
    %v1122 = vcombine.high %v34, %v34
    %v1123 = vcombine.high %v35, %v35
    %v1124 = vcombine.high %v36, %v36
    %v1125 = vcombine.high %v37, %v37
    %v1126 = vcombine.high %v38, %v38
    %v1127 = vcombine.high %v39, %v39
    %v1128 = vcombine.high %v40, %v40
    %v1129 = vcombine.high %v41, %v41
    %v1130 = vcombine.high %v42, %v42
    %v1131 = vcombine.high %v43, %v43
    %1164 = vmatprep.subr.mxu0 0.0
    %1165 = vmatpush1.msra.mxu0 %v44
    %1166 = vmatprep.subr.mxu0 0.0
    %1167 = vmatpush1.msra.mxu0 %v45
    %1168 = vmatprep.subr.mxu0 0.0
    %1169 = vmatpush1.msra.mxu0 %v46
    %1170 = vmatprep.subr.mxu0 0.0
    %1171 = vmatpush1.msra.mxu0 %v47
    %1172 = vmatprep.subr.mxu0 0.0
    %1173 = vmatpush1.msra.mxu0 %v48
    %1174 = vmatprep.subr.mxu0 0.0
    %1175 = vmatpush1.msra.mxu0 %v49
    %1176 = vmatprep.subr.mxu0 0.0
    %1177 = vmatpush1.msra.mxu0 %v50
    %1178 = vmatprep.subr.mxu0 0.0
    %1179 = vmatpush1.msra.mxu0 %v51
    %1180 = vmatprep.subr.mxu0 0.0
    %1181 = vmatpush1.msra.mxu0 %v52
    %1182 = vmatprep.subr.mxu0 0.0
    %1183 = vmatpush1.msra.mxu0 %v53
    %1184 = vmatprep.subr.mxu0 0.0
    %1185 = vmatpush1.msra.mxu0 %v54
    %1186 = vmatprep.subr.mxu0 0.0
    %1187 = vmatpush1.msra.mxu0 %v55
    %1188 = vmatprep.subr.mxu0 0.0
    %1189 = vmatpush1.msra.mxu0 %v56
    %1190 = vmatprep.subr.mxu0 0.0
    %1191 = vmatpush1.msra.mxu0 %v57
    %1192 = vmatprep.subr.mxu0 0.0
    %1193 = vmatpush1.msra.mxu0 %v58
    %1194 = vmatprep.subr.mxu0 0.0
    %1195 = vmatpush1.msra.mxu0 %v59
    %1196 = vmatprep.subr.mxu0 0.0
    %1197 = vmatpush1.msra.mxu0 %v60
    %1198 = vmatprep.subr.mxu0 0.0
    %1199 = vmatpush1.msra.mxu0 %v61
    %1200 = vmatprep.subr.mxu0 0.0
    %1201 = vmatpush1.msra.mxu0 %v62
    %1202 = vmatprep.subr.mxu0 0.0
    %1203 = vmatpush1.msra.mxu0 %v63
    %1204 = vmatprep.subr.mxu0 0.0
    %1205 = vmatpush1.msra.mxu0 %v64
    %1206 = vmatprep.subr.mxu0 0.0
    %1207 = vmatpush1.msra.mxu0 %v65
    %1208 = vmatprep.subr.mxu0 0.0
    %1209 = vmatpush1.msra.mxu0 %v66
    %1210 = vmatprep.subr.mxu0 0.0
    %1211 = vmatpush1.msra.mxu0 %v67
    %1212 = vmatprep.subr.mxu0 0.0
    %1213 = vmatpush1.msra.mxu0 %v68
    %1214 = vmatprep.subr.mxu0 0.0
    %1215 = vmatpush1.msra.mxu0 %v69
    %1216 = vmatprep.subr.mxu0 0.0
    %1217 = vmatpush1.msra.mxu0 %v70
    %1218 = vmatprep.subr.mxu0 0.0
    %1219 = vmatpush1.msra.mxu0 %v71
    %1220 = vmatprep.subr.mxu0 0.0
    %1221 = vmatpush1.msra.mxu0 %v72
    %1222 = vmatprep.subr.mxu0 0.0
    %1223 = vmatpush1.msra.mxu0 %v73
    %1224 = vmatprep.subr.mxu0 0.0
    %1225 = vmatpush1.msra.mxu0 %v74
    %1226 = vmatprep.subr.mxu0 0.0
    %1227 = vmatpush1.msra.mxu0 %v75
    %1228 = vmatprep.mubr.f32.mxu0 %v1100
    %1229 = vmatmul.mubr.f32.gmra.mrb[0].mxu0 %v12
    %v1230 = vpop.f32.mrb[0].mxu0
    %v1231 = vadd.f32 0.0, %v1230
    %v1232 = vpop.f32.mrb[0].mxu0
    %1233 = vdwg.mxu0
    %1234 = vmatprep.subr.mxu0 0.0
    %1235 = vmatpush1.msra.mxu0 %v76
    %1236 = vmatprep.subr.mxu0 0.0
    %1237 = vmatpush1.msra.mxu0 %v77
    %1238 = vmatprep.subr.mxu0 0.0
    %1239 = vmatpush1.msra.mxu0 %v78
    %1240 = vmatprep.subr.mxu0 0.0
    %1241 = vmatpush1.msra.mxu0 %v79
    %1242 = vmatprep.subr.mxu0 0.0
    %1243 = vmatpush1.msra.mxu0 %v80
    %1244 = vmatprep.subr.mxu0 0.0
    %1245 = vmatpush1.msra.mxu0 %v81
    %1246 = vmatprep.subr.mxu0 0.0
    %1247 = vmatpush1.msra.mxu0 %v82
    %1248 = vmatprep.subr.mxu0 0.0
    %1249 = vmatpush1.msra.mxu0 %v83
    %1250 = vmatprep.subr.mxu0 0.0
    %1251 = vmatpush1.msra.mxu0 %v84
    %1252 = vmatprep.subr.mxu0 0.0
    %1253 = vmatpush1.msra.mxu0 %v85
    %1254 = vmatprep.subr.mxu0 0.0
    %1255 = vmatpush1.msra.mxu0 %v86
    %1256 = vmatprep.subr.mxu0 0.0
    %1257 = vmatpush1.msra.mxu0 %v87
    %1258 = vmatprep.subr.mxu0 0.0
    %1259 = vmatpush1.msra.mxu0 %v88
    %1260 = vmatprep.subr.mxu0 0.0
    %1261 = vmatpush1.msra.mxu0 %v89
    %1262 = vmatprep.subr.mxu0 0.0
    %1263 = vmatpush1.msra.mxu0 %v90
    %1264 = vmatprep.subr.mxu0 0.0
    %1265 = vmatpush1.msra.mxu0 %v91
    %1266 = vmatprep.subr.mxu0 0.0
    %1267 = vmatpush1.msra.mxu0 %v92
    %1268 = vmatprep.subr.mxu0 0.0
    %1269 = vmatpush1.msra.mxu0 %v93
    %1270 = vmatprep.subr.mxu0 0.0
    %1271 = vmatpush1.msra.mxu0 %v94
    %1272 = vmatprep.subr.mxu0 0.0
    %1273 = vmatpush1.msra.mxu0 %v95
    %1274 = vmatprep.subr.mxu0 0.0
    %1275 = vmatpush1.msra.mxu0 %v96
    %1276 = vmatprep.subr.mxu0 0.0
    %1277 = vmatpush1.msra.mxu0 %v97
    %1278 = vmatprep.subr.mxu0 0.0
    %1279 = vmatpush1.msra.mxu0 %v98
    %1280 = vmatprep.subr.mxu0 0.0
    %1281 = vmatpush1.msra.mxu0 %v99
    %1282 = vmatprep.subr.mxu0 0.0
    %1283 = vmatpush1.msra.mxu0 %v100
    %1284 = vmatprep.subr.mxu0 0.0
    %1285 = vmatpush1.msra.mxu0 %v101
    %1286 = vmatprep.subr.mxu0 0.0
    %1287 = vmatpush1.msra.mxu0 %v102
    %1288 = vmatprep.subr.mxu0 0.0
    %1289 = vmatpush1.msra.mxu0 %v103
    %1290 = vmatprep.subr.mxu0 0.0
    %1291 = vmatpush1.msra.mxu0 %v104
    %1292 = vmatprep.subr.mxu0 0.0
    %1293 = vmatpush1.msra.mxu0 %v105
    %1294 = vmatprep.subr.mxu0 0.0
    %1295 = vmatpush1.msra.mxu0 %v106
    %1296 = vmatprep.subr.mxu0 0.0
    %1297 = vmatpush1.msra.mxu0 %v107
    %1298 = vmatprep.mubr.f32.mxu0 %v1101
    %1299 = vmatmul.mubr.f32.gmra.mrb[0].mxu0 %v13
    %v1300 = vpop.f32.mrb[0].mxu0
    %v1301 = vadd.f32 %v1231, %v1300
    %v1302 = vpop.f32.mrb[0].mxu0
    %1303 = vdwg.mxu0
    %1304 = vmatprep.subr.mxu0 0.0
    %1305 = vmatpush1.msra.mxu0 %v108
    %1306 = vmatprep.subr.mxu0 0.0
    %1307 = vmatpush1.msra.mxu0 %v109
    %1308 = vmatprep.subr.mxu0 0.0
    %1309 = vmatpush1.msra.mxu0 %v110
    %1310 = vmatprep.subr.mxu0 0.0
    %1311 = vmatpush1.msra.mxu0 %v111
    %1312 = vmatprep.subr.mxu0 0.0
    %1313 = vmatpush1.msra.mxu0 %v112
    %1314 = vmatprep.subr.mxu0 0.0
    %1315 = vmatpush1.msra.mxu0 %v113
    %1316 = vmatprep.subr.mxu0 0.0
    %1317 = vmatpush1.msra.mxu0 %v114
    %1318 = vmatprep.subr.mxu0 0.0
    %1319 = vmatpush1.msra.mxu0 %v115
    %1320 = vmatprep.subr.mxu0 0.0
    %1321 = vmatpush1.msra.mxu0 %v116
    %1322 = vmatprep.subr.mxu0 0.0
    %1323 = vmatpush1.msra.mxu0 %v117
    %1324 = vmatprep.subr.mxu0 0.0
    %1325 = vmatpush1.msra.mxu0 %v118
    %1326 = vmatprep.subr.mxu0 0.0
    %1327 = vmatpush1.msra.mxu0 %v119
    %1328 = vmatprep.subr.mxu0 0.0
    %1329 = vmatpush1.msra.mxu0 %v120
    %1330 = vmatprep.subr.mxu0 0.0
    %1331 = vmatpush1.msra.mxu0 %v121
    %1332 = vmatprep.subr.mxu0 0.0
    %1333 = vmatpush1.msra.mxu0 %v122
    %1334 = vmatprep.subr.mxu0 0.0
    %1335 = vmatpush1.msra.mxu0 %v123
    %1336 = vmatprep.subr.mxu0 0.0
    %1337 = vmatpush1.msra.mxu0 %v124
    %1338 = vmatprep.subr.mxu0 0.0
    %1339 = vmatpush1.msra.mxu0 %v125
    %1340 = vmatprep.subr.mxu0 0.0
    %1341 = vmatpush1.msra.mxu0 %v126
    %1342 = vmatprep.subr.mxu0 0.0
    %1343 = vmatpush1.msra.mxu0 %v127
    %1344 = vmatprep.subr.mxu0 0.0
    %1345 = vmatpush1.msra.mxu0 %v128
    %1346 = vmatprep.subr.mxu0 0.0
    %1347 = vmatpush1.msra.mxu0 %v129
    %1348 = vmatprep.subr.mxu0 0.0
    %1349 = vmatpush1.msra.mxu0 %v130
    %1350 = vmatprep.subr.mxu0 0.0
    %1351 = vmatpush1.msra.mxu0 %v131
    %1352 = vmatprep.subr.mxu0 0.0
    %1353 = vmatpush1.msra.mxu0 %v132
    %1354 = vmatprep.subr.mxu0 0.0
    %1355 = vmatpush1.msra.mxu0 %v133
    %1356 = vmatprep.subr.mxu0 0.0
    %1357 = vmatpush1.msra.mxu0 %v134
    %1358 = vmatprep.subr.mxu0 0.0
    %1359 = vmatpush1.msra.mxu0 %v135
    %1360 = vmatprep.subr.mxu0 0.0
    %1361 = vmatpush1.msra.mxu0 %v136
    %1362 = vmatprep.subr.mxu0 0.0
    %1363 = vmatpush1.msra.mxu0 %v137
    %1364 = vmatprep.subr.mxu0 0.0
    %1365 = vmatpush1.msra.mxu0 %v138
    %1366 = vmatprep.subr.mxu0 0.0
    %1367 = vmatpush1.msra.mxu0 %v139
    %1368 = vmatprep.mubr.f32.mxu0 %v1102
    %1369 = vmatmul.mubr.f32.gmra.mrb[0].mxu0 %v14
    %v1370 = vpop.f32.mrb[0].mxu0
    %v1371 = vadd.f32 %v1301, %v1370
    %v1372 = vpop.f32.mrb[0].mxu0
    %1373 = vdwg.mxu0
    %1374 = vmatprep.subr.mxu0 0.0
    %1375 = vmatpush1.msra.mxu0 %v140
    %1376 = vmatprep.subr.mxu0 0.0
    %1377 = vmatpush1.msra.mxu0 %v141
    %1378 = vmatprep.subr.mxu0 0.0
    %1379 = vmatpush1.msra.mxu0 %v142
    %1380 = vmatprep.subr.mxu0 0.0
    %1381 = vmatpush1.msra.mxu0 %v143
    %1382 = vmatprep.subr.mxu0 0.0
    %1383 = vmatpush1.msra.mxu0 %v144
    %1384 = vmatprep.subr.mxu0 0.0
    %1385 = vmatpush1.msra.mxu0 %v145
    %1386 = vmatprep.subr.mxu0 0.0
    %1387 = vmatpush1.msra.mxu0 %v146
    %1388 = vmatprep.subr.mxu0 0.0
    %1389 = vmatpush1.msra.mxu0 %v147
    %1390 = vmatprep.subr.mxu0 0.0
    %1391 = vmatpush1.msra.mxu0 %v148
    %1392 = vmatprep.subr.mxu0 0.0
    %1393 = vmatpush1.msra.mxu0 %v149
    %1394 = vmatprep.subr.mxu0 0.0
    %1395 = vmatpush1.msra.mxu0 %v150
    %1396 = vmatprep.subr.mxu0 0.0
    %1397 = vmatpush1.msra.mxu0 %v151
    %1398 = vmatprep.subr.mxu0 0.0
    %1399 = vmatpush1.msra.mxu0 %v152
    %1400 = vmatprep.subr.mxu0 0.0
    %1401 = vmatpush1.msra.mxu0 %v153
    %1402 = vmatprep.subr.mxu0 0.0
    %1403 = vmatpush1.msra.mxu0 %v154
    %1404 = vmatprep.subr.mxu0 0.0
    %1405 = vmatpush1.msra.mxu0 %v155
    %1406 = vmatprep.subr.mxu0 0.0
    %1407 = vmatpush1.msra.mxu0 %v156
    %1408 = vmatprep.subr.mxu0 0.0
    %1409 = vmatpush1.msra.mxu0 %v157
    %1410 = vmatprep.subr.mxu0 0.0
    %1411 = vmatpush1.msra.mxu0 %v158
    %1412 = vmatprep.subr.mxu0 0.0
    %1413 = vmatpush1.msra.mxu0 %v159
    %1414 = vmatprep.subr.mxu0 0.0
    %1415 = vmatpush1.msra.mxu0 %v160
    %1416 = vmatprep.subr.mxu0 0.0
    %1417 = vmatpush1.msra.mxu0 %v161
    %1418 = vmatprep.subr.mxu0 0.0
    %1419 = vmatpush1.msra.mxu0 %v162
    %1420 = vmatprep.subr.mxu0 0.0
    %1421 = vmatpush1.msra.mxu0 %v163
    %1422 = vmatprep.subr.mxu0 0.0
    %1423 = vmatpush1.msra.mxu0 %v164
    %1424 = vmatprep.subr.mxu0 0.0
    %1425 = vmatpush1.msra.mxu0 %v165
    %1426 = vmatprep.subr.mxu0 0.0
    %1427 = vmatpush1.msra.mxu0 %v166
    %1428 = vmatprep.subr.mxu0 0.0
    %1429 = vmatpush1.msra.mxu0 %v167
    %1430 = vmatprep.subr.mxu0 0.0
    %1431 = vmatpush1.msra.mxu0 %v168
    %1432 = vmatprep.subr.mxu0 0.0
    %1433 = vmatpush1.msra.mxu0 %v169
    %1434 = vmatprep.subr.mxu0 0.0
    %1435 = vmatpush1.msra.mxu0 %v170
    %1436 = vmatprep.subr.mxu0 0.0
    %1437 = vmatpush1.msra.mxu0 %v171
    %1438 = vmatprep.mubr.f32.mxu0 %v1103
    %1439 = vmatmul.mubr.f32.gmra.mrb[0].mxu0 %v15
    %v1440 = vpop.f32.mrb[0].mxu0
    %v1441 = vadd.f32 %v1371, %v1440
    %v1442 = vpop.f32.mrb[0].mxu0
    %1443 = vdwg.mxu0
    %1444 = vmatprep.subr.mxu0 0.0
    %1445 = vmatpush1.msra.mxu0 %v172
    %1446 = vmatprep.subr.mxu0 0.0
    %1447 = vmatpush1.msra.mxu0 %v173
    %1448 = vmatprep.subr.mxu0 0.0
    %1449 = vmatpush1.msra.mxu0 %v174
    %1450 = vmatprep.subr.mxu0 0.0
    %1451 = vmatpush1.msra.mxu0 %v175
    %1452 = vmatprep.subr.mxu0 0.0
    %1453 = vmatpush1.msra.mxu0 %v176
    %1454 = vmatprep.subr.mxu0 0.0
    %1455 = vmatpush1.msra.mxu0 %v177
    %1456 = vmatprep.subr.mxu0 0.0
    %1457 = vmatpush1.msra.mxu0 %v178
    %1458 = vmatprep.subr.mxu0 0.0
    %1459 = vmatpush1.msra.mxu0 %v179
    %1460 = vmatprep.subr.mxu0 0.0
    %1461 = vmatpush1.msra.mxu0 %v180
    %1462 = vmatprep.subr.mxu0 0.0
    %1463 = vmatpush1.msra.mxu0 %v181
    %1464 = vmatprep.subr.mxu0 0.0
    %1465 = vmatpush1.msra.mxu0 %v182
    %1466 = vmatprep.subr.mxu0 0.0
    %1467 = vmatpush1.msra.mxu0 %v183
    %1468 = vmatprep.subr.mxu0 0.0
    %1469 = vmatpush1.msra.mxu0 %v184
    %1470 = vmatprep.subr.mxu0 0.0
    %1471 = vmatpush1.msra.mxu0 %v185
    %1472 = vmatprep.subr.mxu0 0.0
    %1473 = vmatpush1.msra.mxu0 %v186
    %1474 = vmatprep.subr.mxu0 0.0
    %1475 = vmatpush1.msra.mxu0 %v187
    %1476 = vmatprep.subr.mxu0 0.0
    %1477 = vmatpush1.msra.mxu0 %v188
    %1478 = vmatprep.subr.mxu0 0.0
    %1479 = vmatpush1.msra.mxu0 %v189
    %1480 = vmatprep.subr.mxu0 0.0
    %1481 = vmatpush1.msra.mxu0 %v190
    %1482 = vmatprep.subr.mxu0 0.0
    %1483 = vmatpush1.msra.mxu0 %v191
    %1484 = vmatprep.subr.mxu0 0.0
    %1485 = vmatpush1.msra.mxu0 %v192
    %1486 = vmatprep.subr.mxu0 0.0
    %1487 = vmatpush1.msra.mxu0 %v193
    %1488 = vmatprep.subr.mxu0 0.0
    %1489 = vmatpush1.msra.mxu0 %v194
    %1490 = vmatprep.subr.mxu0 0.0
    %1491 = vmatpush1.msra.mxu0 %v195
    %1492 = vmatprep.subr.mxu0 0.0
    %1493 = vmatpush1.msra.mxu0 %v196
    %1494 = vmatprep.subr.mxu0 0.0
    %1495 = vmatpush1.msra.mxu0 %v197
    %1496 = vmatprep.subr.mxu0 0.0
    %1497 = vmatpush1.msra.mxu0 %v198
    %1498 = vmatprep.subr.mxu0 0.0
    %1499 = vmatpush1.msra.mxu0 %v199
    %1500 = vmatprep.subr.mxu0 0.0
    %1501 = vmatpush1.msra.mxu0 %v200
    %1502 = vmatprep.subr.mxu0 0.0
    %1503 = vmatpush1.msra.mxu0 %v201
    %1504 = vmatprep.subr.mxu0 0.0
    %1505 = vmatpush1.msra.mxu0 %v202
    %1506 = vmatprep.subr.mxu0 0.0
    %1507 = vmatpush1.msra.mxu0 %v203
    %1508 = vmatprep.mubr.f32.mxu0 %v1104
    %1509 = vmatmul.mubr.f32.gmra.mrb[0].mxu0 %v16
    %v1510 = vpop.f32.mrb[0].mxu0
    %v1511 = vadd.f32 %v1441, %v1510
    %v1512 = vpop.f32.mrb[0].mxu0
    %1513 = vdwg.mxu0
    %1514 = vmatprep.subr.mxu0 0.0
    %1515 = vmatpush1.msra.mxu0 %v204
    %1516 = vmatprep.subr.mxu0 0.0
    %1517 = vmatpush1.msra.mxu0 %v205
    %1518 = vmatprep.subr.mxu0 0.0
    %1519 = vmatpush1.msra.mxu0 %v206
    %1520 = vmatprep.subr.mxu0 0.0
    %1521 = vmatpush1.msra.mxu0 %v207
    %1522 = vmatprep.subr.mxu0 0.0
    %1523 = vmatpush1.msra.mxu0 %v208
    %1524 = vmatprep.subr.mxu0 0.0
    %1525 = vmatpush1.msra.mxu0 %v209
    %1526 = vmatprep.subr.mxu0 0.0
    %1527 = vmatpush1.msra.mxu0 %v210
    %1528 = vmatprep.subr.mxu0 0.0
    %1529 = vmatpush1.msra.mxu0 %v211
    %1530 = vmatprep.subr.mxu0 0.0
    %1531 = vmatpush1.msra.mxu0 %v212
    %1532 = vmatprep.subr.mxu0 0.0
    %1533 = vmatpush1.msra.mxu0 %v213
    %1534 = vmatprep.subr.mxu0 0.0
    %1535 = vmatpush1.msra.mxu0 %v214
    %1536 = vmatprep.subr.mxu0 0.0
    %1537 = vmatpush1.msra.mxu0 %v215
    %1538 = vmatprep.subr.mxu0 0.0
    %1539 = vmatpush1.msra.mxu0 %v216
    %1540 = vmatprep.subr.mxu0 0.0
    %1541 = vmatpush1.msra.mxu0 %v217
    %1542 = vmatprep.subr.mxu0 0.0
    %1543 = vmatpush1.msra.mxu0 %v218
    %1544 = vmatprep.subr.mxu0 0.0
    %1545 = vmatpush1.msra.mxu0 %v219
    %1546 = vmatprep.subr.mxu0 0.0
    %1547 = vmatpush1.msra.mxu0 %v220
    %1548 = vmatprep.subr.mxu0 0.0
    %1549 = vmatpush1.msra.mxu0 %v221
    %1550 = vmatprep.subr.mxu0 0.0
    %1551 = vmatpush1.msra.mxu0 %v222
    %1552 = vmatprep.subr.mxu0 0.0
    %1553 = vmatpush1.msra.mxu0 %v223
    %1554 = vmatprep.subr.mxu0 0.0
    %1555 = vmatpush1.msra.mxu0 %v224
    %1556 = vmatprep.subr.mxu0 0.0
    %1557 = vmatpush1.msra.mxu0 %v225
    %1558 = vmatprep.subr.mxu0 0.0
    %1559 = vmatpush1.msra.mxu0 %v226
    %1560 = vmatprep.subr.mxu0 0.0
    %1561 = vmatpush1.msra.mxu0 %v227
    %1562 = vmatprep.subr.mxu0 0.0
    %1563 = vmatpush1.msra.mxu0 %v228
    %1564 = vmatprep.subr.mxu0 0.0
    %1565 = vmatpush1.msra.mxu0 %v229
    %1566 = vmatprep.subr.mxu0 0.0
    %1567 = vmatpush1.msra.mxu0 %v230
    %1568 = vmatprep.subr.mxu0 0.0
    %1569 = vmatpush1.msra.mxu0 %v231
    %1570 = vmatprep.subr.mxu0 0.0
    %1571 = vmatpush1.msra.mxu0 %v232
    %1572 = vmatprep.subr.mxu0 0.0
    %1573 = vmatpush1.msra.mxu0 %v233
    %1574 = vmatprep.subr.mxu0 0.0
    %1575 = vmatpush1.msra.mxu0 %v234
    %1576 = vmatprep.subr.mxu0 0.0
    %1577 = vmatpush1.msra.mxu0 %v235
    %1578 = vmatprep.mubr.f32.mxu0 %v1105
    %1579 = vmatmul.mubr.f32.gmra.mrb[0].mxu0 %v17
    %v1580 = vpop.f32.mrb[0].mxu0
    %v1581 = vadd.f32 %v1511, %v1580
    %v1582 = vpop.f32.mrb[0].mxu0
    %1583 = vdwg.mxu0
    %1584 = vmatprep.subr.mxu0 0.0
    %1585 = vmatpush1.msra.mxu0 %v236
    %1586 = vmatprep.subr.mxu0 0.0
    %1587 = vmatpush1.msra.mxu0 %v237
    %1588 = vmatprep.subr.mxu0 0.0
    %1589 = vmatpush1.msra.mxu0 %v238
    %1590 = vmatprep.subr.mxu0 0.0
    %1591 = vmatpush1.msra.mxu0 %v239
    %1592 = vmatprep.subr.mxu0 0.0
    %1593 = vmatpush1.msra.mxu0 %v240
    %1594 = vmatprep.subr.mxu0 0.0
    %1595 = vmatpush1.msra.mxu0 %v241
    %1596 = vmatprep.subr.mxu0 0.0
    %1597 = vmatpush1.msra.mxu0 %v242
    %1598 = vmatprep.subr.mxu0 0.0
    %1599 = vmatpush1.msra.mxu0 %v243
    %1600 = vmatprep.subr.mxu0 0.0
    %1601 = vmatpush1.msra.mxu0 %v244
    %1602 = vmatprep.subr.mxu0 0.0
    %1603 = vmatpush1.msra.mxu0 %v245
    %1604 = vmatprep.subr.mxu0 0.0
    %1605 = vmatpush1.msra.mxu0 %v246
    %1606 = vmatprep.subr.mxu0 0.0
    %1607 = vmatpush1.msra.mxu0 %v247
    %1608 = vmatprep.subr.mxu0 0.0
    %1609 = vmatpush1.msra.mxu0 %v248
    %1610 = vmatprep.subr.mxu0 0.0
    %1611 = vmatpush1.msra.mxu0 %v249
    %1612 = vmatprep.subr.mxu0 0.0
    %1613 = vmatpush1.msra.mxu0 %v250
    %1614 = vmatprep.subr.mxu0 0.0
    %1615 = vmatpush1.msra.mxu0 %v251
    %1616 = vmatprep.subr.mxu0 0.0
    %1617 = vmatpush1.msra.mxu0 %v252
    %1618 = vmatprep.subr.mxu0 0.0
    %1619 = vmatpush1.msra.mxu0 %v253
    %1620 = vmatprep.subr.mxu0 0.0
    %1621 = vmatpush1.msra.mxu0 %v254
    %1622 = vmatprep.subr.mxu0 0.0
    %1623 = vmatpush1.msra.mxu0 %v255
    %1624 = vmatprep.subr.mxu0 0.0
    %1625 = vmatpush1.msra.mxu0 %v256
    %1626 = vmatprep.subr.mxu0 0.0
    %1627 = vmatpush1.msra.mxu0 %v257
    %1628 = vmatprep.subr.mxu0 0.0
    %1629 = vmatpush1.msra.mxu0 %v258
    %1630 = vmatprep.subr.mxu0 0.0
    %1631 = vmatpush1.msra.mxu0 %v259
    %1632 = vmatprep.subr.mxu0 0.0
    %1633 = vmatpush1.msra.mxu0 %v260
    %1634 = vmatprep.subr.mxu0 0.0
    %1635 = vmatpush1.msra.mxu0 %v261
    %1636 = vmatprep.subr.mxu0 0.0
    %1637 = vmatpush1.msra.mxu0 %v262
    %1638 = vmatprep.subr.mxu0 0.0
    %1639 = vmatpush1.msra.mxu0 %v263
    %1640 = vmatprep.subr.mxu0 0.0
    %1641 = vmatpush1.msra.mxu0 %v264
    %1642 = vmatprep.subr.mxu0 0.0
    %1643 = vmatpush1.msra.mxu0 %v265
    %1644 = vmatprep.subr.mxu0 0.0
    %1645 = vmatpush1.msra.mxu0 %v266
    %1646 = vmatprep.subr.mxu0 0.0
    %1647 = vmatpush1.msra.mxu0 %v267
    %1648 = vmatprep.mubr.f32.mxu0 %v1106
    %1649 = vmatmul.mubr.f32.gmra.mrb[0].mxu0 %v18
    %v1650 = vpop.f32.mrb[0].mxu0
    %v1651 = vadd.f32 %v1581, %v1650
    %v1652 = vpop.f32.mrb[0].mxu0
    %1653 = vdwg.mxu0
    %1654 = vmatprep.subr.mxu0 0.0
    %1655 = vmatpush1.msra.mxu0 %v268
    %1656 = vmatprep.subr.mxu0 0.0
    %1657 = vmatpush1.msra.mxu0 %v269
    %1658 = vmatprep.subr.mxu0 0.0
    %1659 = vmatpush1.msra.mxu0 %v270
    %1660 = vmatprep.subr.mxu0 0.0
    %1661 = vmatpush1.msra.mxu0 %v271
    %1662 = vmatprep.subr.mxu0 0.0
    %1663 = vmatpush1.msra.mxu0 %v272
    %1664 = vmatprep.subr.mxu0 0.0
    %1665 = vmatpush1.msra.mxu0 %v273
    %1666 = vmatprep.subr.mxu0 0.0
    %1667 = vmatpush1.msra.mxu0 %v274
    %1668 = vmatprep.subr.mxu0 0.0
    %1669 = vmatpush1.msra.mxu0 %v275
    %1670 = vmatprep.subr.mxu0 0.0
    %1671 = vmatpush1.msra.mxu0 %v276
    %1672 = vmatprep.subr.mxu0 0.0
    %1673 = vmatpush1.msra.mxu0 %v277
    %1674 = vmatprep.subr.mxu0 0.0
    %1675 = vmatpush1.msra.mxu0 %v278
    %1676 = vmatprep.subr.mxu0 0.0
    %1677 = vmatpush1.msra.mxu0 %v279
    %1678 = vmatprep.subr.mxu0 0.0
    %1679 = vmatpush1.msra.mxu0 %v280
    %1680 = vmatprep.subr.mxu0 0.0
    %1681 = vmatpush1.msra.mxu0 %v281
    %1682 = vmatprep.subr.mxu0 0.0
    %1683 = vmatpush1.msra.mxu0 %v282
    %1684 = vmatprep.subr.mxu0 0.0
    %1685 = vmatpush1.msra.mxu0 %v283
    %1686 = vmatprep.subr.mxu0 0.0
    %1687 = vmatpush1.msra.mxu0 %v284
    %1688 = vmatprep.subr.mxu0 0.0
    %1689 = vmatpush1.msra.mxu0 %v285
    %1690 = vmatprep.subr.mxu0 0.0
    %1691 = vmatpush1.msra.mxu0 %v286
    %1692 = vmatprep.subr.mxu0 0.0
    %1693 = vmatpush1.msra.mxu0 %v287
    %1694 = vmatprep.subr.mxu0 0.0
    %1695 = vmatpush1.msra.mxu0 %v288
    %1696 = vmatprep.subr.mxu0 0.0
    %1697 = vmatpush1.msra.mxu0 %v289
    %1698 = vmatprep.subr.mxu0 0.0
    %1699 = vmatpush1.msra.mxu0 %v290
    %1700 = vmatprep.subr.mxu0 0.0
    %1701 = vmatpush1.msra.mxu0 %v291
    %1702 = vmatprep.subr.mxu0 0.0
    %1703 = vmatpush1.msra.mxu0 %v292
    %1704 = vmatprep.subr.mxu0 0.0
    %1705 = vmatpush1.msra.mxu0 %v293
    %1706 = vmatprep.subr.mxu0 0.0
    %1707 = vmatpush1.msra.mxu0 %v294
    %1708 = vmatprep.subr.mxu0 0.0
    %1709 = vmatpush1.msra.mxu0 %v295
    %1710 = vmatprep.subr.mxu0 0.0
    %1711 = vmatpush1.msra.mxu0 %v296
    %1712 = vmatprep.subr.mxu0 0.0
    %1713 = vmatpush1.msra.mxu0 %v297
    %1714 = vmatprep.subr.mxu0 0.0
    %1715 = vmatpush1.msra.mxu0 %v298
    %1716 = vmatprep.subr.mxu0 0.0
    %1717 = vmatpush1.msra.mxu0 %v299
    %1718 = vmatprep.mubr.f32.mxu0 %v1107
    %1719 = vmatmul.mubr.f32.gmra.mrb[0].mxu0 %v19
    %v1720 = vpop.f32.mrb[0].mxu0
    %v1721 = vadd.f32 %v1651, %v1720
    %v1722 = vpop.f32.mrb[0].mxu0
    %1723 = vdwg.mxu0
    %1724 = vmatprep.subr.mxu0 0.0
    %1725 = vmatpush1.msra.mxu0 %v300
    %1726 = vmatprep.subr.mxu0 0.0
    %1727 = vmatpush1.msra.mxu0 %v301
    %1728 = vmatprep.subr.mxu0 0.0
    %1729 = vmatpush1.msra.mxu0 %v302
    %1730 = vmatprep.subr.mxu0 0.0
    %1731 = vmatpush1.msra.mxu0 %v303
    %1732 = vmatprep.subr.mxu0 0.0
    %1733 = vmatpush1.msra.mxu0 %v304
    %1734 = vmatprep.subr.mxu0 0.0
    %1735 = vmatpush1.msra.mxu0 %v305
    %1736 = vmatprep.subr.mxu0 0.0
    %1737 = vmatpush1.msra.mxu0 %v306
    %1738 = vmatprep.subr.mxu0 0.0
    %1739 = vmatpush1.msra.mxu0 %v307
    %1740 = vmatprep.subr.mxu0 0.0
    %1741 = vmatpush1.msra.mxu0 %v308
    %1742 = vmatprep.subr.mxu0 0.0
    %1743 = vmatpush1.msra.mxu0 %v309
    %1744 = vmatprep.subr.mxu0 0.0
    %1745 = vmatpush1.msra.mxu0 %v310
    %1746 = vmatprep.subr.mxu0 0.0
    %1747 = vmatpush1.msra.mxu0 %v311
    %1748 = vmatprep.subr.mxu0 0.0
    %1749 = vmatpush1.msra.mxu0 %v312
    %1750 = vmatprep.subr.mxu0 0.0
    %1751 = vmatpush1.msra.mxu0 %v313
    %1752 = vmatprep.subr.mxu0 0.0
    %1753 = vmatpush1.msra.mxu0 %v314
    %1754 = vmatprep.subr.mxu0 0.0
    %1755 = vmatpush1.msra.mxu0 %v315
    %1756 = vmatprep.subr.mxu0 0.0
    %1757 = vmatpush1.msra.mxu0 %v316
    %1758 = vmatprep.subr.mxu0 0.0
    %1759 = vmatpush1.msra.mxu0 %v317
    %1760 = vmatprep.subr.mxu0 0.0
    %1761 = vmatpush1.msra.mxu0 %v318
    %1762 = vmatprep.subr.mxu0 0.0
    %1763 = vmatpush1.msra.mxu0 %v319
    %1764 = vmatprep.subr.mxu0 0.0
    %1765 = vmatpush1.msra.mxu0 %v320
    %1766 = vmatprep.subr.mxu0 0.0
    %1767 = vmatpush1.msra.mxu0 %v321
    %1768 = vmatprep.subr.mxu0 0.0
    %1769 = vmatpush1.msra.mxu0 %v322
    %1770 = vmatprep.subr.mxu0 0.0
    %1771 = vmatpush1.msra.mxu0 %v323
    %1772 = vmatprep.subr.mxu0 0.0
    %1773 = vmatpush1.msra.mxu0 %v324
    %1774 = vmatprep.subr.mxu0 0.0
    %1775 = vmatpush1.msra.mxu0 %v325
    %1776 = vmatprep.subr.mxu0 0.0
    %1777 = vmatpush1.msra.mxu0 %v326
    %1778 = vmatprep.subr.mxu0 0.0
    %1779 = vmatpush1.msra.mxu0 %v327
    %1780 = vmatprep.subr.mxu0 0.0
    %1781 = vmatpush1.msra.mxu0 %v328
    %1782 = vmatprep.subr.mxu0 0.0
    %1783 = vmatpush1.msra.mxu0 %v329
    %1784 = vmatprep.subr.mxu0 0.0
    %1785 = vmatpush1.msra.mxu0 %v330
    %1786 = vmatprep.subr.mxu0 0.0
    %1787 = vmatpush1.msra.mxu0 %v331
    %1788 = vmatprep.mubr.f32.mxu0 %v1108
    %1789 = vmatmul.mubr.f32.gmra.mrb[0].mxu0 %v20
    %v1790 = vpop.f32.mrb[0].mxu0
    %v1791 = vadd.f32 %v1721, %v1790
    %v1792 = vpop.f32.mrb[0].mxu0
    %1793 = vdwg.mxu0
    %1794 = vmatprep.subr.mxu0 0.0
    %1795 = vmatpush1.msra.mxu0 %v332
    %1796 = vmatprep.subr.mxu0 0.0
    %1797 = vmatpush1.msra.mxu0 %v333
    %1798 = vmatprep.subr.mxu0 0.0
    %1799 = vmatpush1.msra.mxu0 %v334
    %1800 = vmatprep.subr.mxu0 0.0
    %1801 = vmatpush1.msra.mxu0 %v335
    %1802 = vmatprep.subr.mxu0 0.0
    %1803 = vmatpush1.msra.mxu0 %v336
    %1804 = vmatprep.subr.mxu0 0.0
    %1805 = vmatpush1.msra.mxu0 %v337
    %1806 = vmatprep.subr.mxu0 0.0
    %1807 = vmatpush1.msra.mxu0 %v338
    %1808 = vmatprep.subr.mxu0 0.0
    %1809 = vmatpush1.msra.mxu0 %v339
    %1810 = vmatprep.subr.mxu0 0.0
    %1811 = vmatpush1.msra.mxu0 %v340
    %1812 = vmatprep.subr.mxu0 0.0
    %1813 = vmatpush1.msra.mxu0 %v341
    %1814 = vmatprep.subr.mxu0 0.0
    %1815 = vmatpush1.msra.mxu0 %v342
    %1816 = vmatprep.subr.mxu0 0.0
    %1817 = vmatpush1.msra.mxu0 %v343
    %1818 = vmatprep.subr.mxu0 0.0
    %1819 = vmatpush1.msra.mxu0 %v344
    %1820 = vmatprep.subr.mxu0 0.0
    %1821 = vmatpush1.msra.mxu0 %v345
    %1822 = vmatprep.subr.mxu0 0.0
    %1823 = vmatpush1.msra.mxu0 %v346
    %1824 = vmatprep.subr.mxu0 0.0
    %1825 = vmatpush1.msra.mxu0 %v347
    %1826 = vmatprep.subr.mxu0 0.0
    %1827 = vmatpush1.msra.mxu0 %v348
    %1828 = vmatprep.subr.mxu0 0.0
    %1829 = vmatpush1.msra.mxu0 %v349
    %1830 = vmatprep.subr.mxu0 0.0
    %1831 = vmatpush1.msra.mxu0 %v350
    %1832 = vmatprep.subr.mxu0 0.0
    %1833 = vmatpush1.msra.mxu0 %v351
    %1834 = vmatprep.subr.mxu0 0.0
    %1835 = vmatpush1.msra.mxu0 %v352
    %1836 = vmatprep.subr.mxu0 0.0
    %1837 = vmatpush1.msra.mxu0 %v353
    %1838 = vmatprep.subr.mxu0 0.0
    %1839 = vmatpush1.msra.mxu0 %v354
    %1840 = vmatprep.subr.mxu0 0.0
    %1841 = vmatpush1.msra.mxu0 %v355
    %1842 = vmatprep.subr.mxu0 0.0
    %1843 = vmatpush1.msra.mxu0 %v356
    %1844 = vmatprep.subr.mxu0 0.0
    %1845 = vmatpush1.msra.mxu0 %v357
    %1846 = vmatprep.subr.mxu0 0.0
    %1847 = vmatpush1.msra.mxu0 %v358
    %1848 = vmatprep.subr.mxu0 0.0
    %1849 = vmatpush1.msra.mxu0 %v359
    %1850 = vmatprep.subr.mxu0 0.0
    %1851 = vmatpush1.msra.mxu0 %v360
    %1852 = vmatprep.subr.mxu0 0.0
    %1853 = vmatpush1.msra.mxu0 %v361
    %1854 = vmatprep.subr.mxu0 0.0
    %1855 = vmatpush1.msra.mxu0 %v362
    %1856 = vmatprep.subr.mxu0 0.0
    %1857 = vmatpush1.msra.mxu0 %v363
    %1858 = vmatprep.mubr.f32.mxu0 %v1109
    %1859 = vmatmul.mubr.f32.gmra.mrb[0].mxu0 %v21
    %v1860 = vpop.f32.mrb[0].mxu0
    %v1861 = vadd.f32 %v1791, %v1860
    %v1862 = vpop.f32.mrb[0].mxu0
    %1863 = vdwg.mxu0
    %1864 = vmatprep.subr.mxu0 0.0
    %1865 = vmatpush1.msra.mxu0 %v364
    %1866 = vmatprep.subr.mxu0 0.0
    %1867 = vmatpush1.msra.mxu0 %v365
    %1868 = vmatprep.subr.mxu0 0.0
    %1869 = vmatpush1.msra.mxu0 %v366
    %1870 = vmatprep.subr.mxu0 0.0
    %1871 = vmatpush1.msra.mxu0 %v367
    %1872 = vmatprep.subr.mxu0 0.0
    %1873 = vmatpush1.msra.mxu0 %v368
    %1874 = vmatprep.subr.mxu0 0.0
    %1875 = vmatpush1.msra.mxu0 %v369
    %1876 = vmatprep.subr.mxu0 0.0
    %1877 = vmatpush1.msra.mxu0 %v370
    %1878 = vmatprep.subr.mxu0 0.0
    %1879 = vmatpush1.msra.mxu0 %v371
    %1880 = vmatprep.subr.mxu0 0.0
    %1881 = vmatpush1.msra.mxu0 %v372
    %1882 = vmatprep.subr.mxu0 0.0
    %1883 = vmatpush1.msra.mxu0 %v373
    %1884 = vmatprep.subr.mxu0 0.0
    %1885 = vmatpush1.msra.mxu0 %v374
    %1886 = vmatprep.subr.mxu0 0.0
    %1887 = vmatpush1.msra.mxu0 %v375
    %1888 = vmatprep.subr.mxu0 0.0
    %1889 = vmatpush1.msra.mxu0 %v376
    %1890 = vmatprep.subr.mxu0 0.0
    %1891 = vmatpush1.msra.mxu0 %v377
    %1892 = vmatprep.subr.mxu0 0.0
    %1893 = vmatpush1.msra.mxu0 %v378
    %1894 = vmatprep.subr.mxu0 0.0
    %1895 = vmatpush1.msra.mxu0 %v379
    %1896 = vmatprep.subr.mxu0 0.0
    %1897 = vmatpush1.msra.mxu0 %v380
    %1898 = vmatprep.subr.mxu0 0.0
    %1899 = vmatpush1.msra.mxu0 %v381
    %1900 = vmatprep.subr.mxu0 0.0
    %1901 = vmatpush1.msra.mxu0 %v382
    %1902 = vmatprep.subr.mxu0 0.0
    %1903 = vmatpush1.msra.mxu0 %v383
    %1904 = vmatprep.subr.mxu0 0.0
    %1905 = vmatpush1.msra.mxu0 %v384
    %1906 = vmatprep.subr.mxu0 0.0
    %1907 = vmatpush1.msra.mxu0 %v385
    %1908 = vmatprep.subr.mxu0 0.0
    %1909 = vmatpush1.msra.mxu0 %v386
    %1910 = vmatprep.subr.mxu0 0.0
    %1911 = vmatpush1.msra.mxu0 %v387
    %1912 = vmatprep.subr.mxu0 0.0
    %1913 = vmatpush1.msra.mxu0 %v388
    %1914 = vmatprep.subr.mxu0 0.0
    %1915 = vmatpush1.msra.mxu0 %v389
    %1916 = vmatprep.subr.mxu0 0.0
    %1917 = vmatpush1.msra.mxu0 %v390
    %1918 = vmatprep.subr.mxu0 0.0
    %1919 = vmatpush1.msra.mxu0 %v391
    %1920 = vmatprep.subr.mxu0 0.0
    %1921 = vmatpush1.msra.mxu0 %v392
    %1922 = vmatprep.subr.mxu0 0.0
    %1923 = vmatpush1.msra.mxu0 %v393
    %1924 = vmatprep.subr.mxu0 0.0
    %1925 = vmatpush1.msra.mxu0 %v394
    %1926 = vmatprep.subr.mxu0 0.0
    %1927 = vmatpush1.msra.mxu0 %v395
    %1928 = vmatprep.mubr.f32.mxu0 %v1110
    %1929 = vmatmul.mubr.f32.gmra.mrb[0].mxu0 %v22
    %v1930 = vpop.f32.mrb[0].mxu0
    %v1931 = vadd.f32 %v1861, %v1930
    %v1932 = vpop.f32.mrb[0].mxu0
    %1933 = vdwg.mxu0
    %1934 = vmatprep.subr.mxu0 0.0
    %1935 = vmatpush1.msra.mxu0 %v396
    %1936 = vmatprep.subr.mxu0 0.0
    %1937 = vmatpush1.msra.mxu0 %v397
    %1938 = vmatprep.subr.mxu0 0.0
    %1939 = vmatpush1.msra.mxu0 %v398
    %1940 = vmatprep.subr.mxu0 0.0
    %1941 = vmatpush1.msra.mxu0 %v399
    %1942 = vmatprep.subr.mxu0 0.0
    %1943 = vmatpush1.msra.mxu0 %v400
    %1944 = vmatprep.subr.mxu0 0.0
    %1945 = vmatpush1.msra.mxu0 %v401
    %1946 = vmatprep.subr.mxu0 0.0
    %1947 = vmatpush1.msra.mxu0 %v402
    %1948 = vmatprep.subr.mxu0 0.0
    %1949 = vmatpush1.msra.mxu0 %v403
    %1950 = vmatprep.subr.mxu0 0.0
    %1951 = vmatpush1.msra.mxu0 %v404
    %1952 = vmatprep.subr.mxu0 0.0
    %1953 = vmatpush1.msra.mxu0 %v405
    %1954 = vmatprep.subr.mxu0 0.0
    %1955 = vmatpush1.msra.mxu0 %v406
    %1956 = vmatprep.subr.mxu0 0.0
    %1957 = vmatpush1.msra.mxu0 %v407
    %1958 = vmatprep.subr.mxu0 0.0
    %1959 = vmatpush1.msra.mxu0 %v408
    %1960 = vmatprep.subr.mxu0 0.0
    %1961 = vmatpush1.msra.mxu0 %v409
    %1962 = vmatprep.subr.mxu0 0.0
    %1963 = vmatpush1.msra.mxu0 %v410
    %1964 = vmatprep.subr.mxu0 0.0
    %1965 = vmatpush1.msra.mxu0 %v411
    %1966 = vmatprep.subr.mxu0 0.0
    %1967 = vmatpush1.msra.mxu0 %v412
    %1968 = vmatprep.subr.mxu0 0.0
    %1969 = vmatpush1.msra.mxu0 %v413
    %1970 = vmatprep.subr.mxu0 0.0
    %1971 = vmatpush1.msra.mxu0 %v414
    %1972 = vmatprep.subr.mxu0 0.0
    %1973 = vmatpush1.msra.mxu0 %v415
    %1974 = vmatprep.subr.mxu0 0.0
    %1975 = vmatpush1.msra.mxu0 %v416
    %1976 = vmatprep.subr.mxu0 0.0
    %1977 = vmatpush1.msra.mxu0 %v417
    %1978 = vmatprep.subr.mxu0 0.0
    %1979 = vmatpush1.msra.mxu0 %v418
    %1980 = vmatprep.subr.mxu0 0.0
    %1981 = vmatpush1.msra.mxu0 %v419
    %1982 = vmatprep.subr.mxu0 0.0
    %1983 = vmatpush1.msra.mxu0 %v420
    %1984 = vmatprep.subr.mxu0 0.0
    %1985 = vmatpush1.msra.mxu0 %v421
    %1986 = vmatprep.subr.mxu0 0.0
    %1987 = vmatpush1.msra.mxu0 %v422
    %1988 = vmatprep.subr.mxu0 0.0
    %1989 = vmatpush1.msra.mxu0 %v423
    %1990 = vmatprep.subr.mxu0 0.0
    %1991 = vmatpush1.msra.mxu0 %v424
    %1992 = vmatprep.subr.mxu0 0.0
    %1993 = vmatpush1.msra.mxu0 %v425
    %1994 = vmatprep.subr.mxu0 0.0
    %1995 = vmatpush1.msra.mxu0 %v426
    %1996 = vmatprep.subr.mxu0 0.0
    %1997 = vmatpush1.msra.mxu0 %v427
    %1998 = vmatprep.mubr.f32.mxu0 %v1111
    %1999 = vmatmul.mubr.f32.gmra.mrb[0].mxu0 %v23
    %v2000 = vpop.f32.mrb[0].mxu0
    %v2001 = vadd.f32 %v1931, %v2000
    %v2002 = vpop.f32.mrb[0].mxu0
    %2003 = vdwg.mxu0
    %2004 = vmatprep.subr.mxu0 0.0
    %2005 = vmatpush1.msra.mxu0 %v428
    %2006 = vmatprep.subr.mxu0 0.0
    %2007 = vmatpush1.msra.mxu0 %v429
    %2008 = vmatprep.subr.mxu0 0.0
    %2009 = vmatpush1.msra.mxu0 %v430
    %2010 = vmatprep.subr.mxu0 0.0
    %2011 = vmatpush1.msra.mxu0 %v431
    %2012 = vmatprep.subr.mxu0 0.0
    %2013 = vmatpush1.msra.mxu0 %v432
    %2014 = vmatprep.subr.mxu0 0.0
    %2015 = vmatpush1.msra.mxu0 %v433
    %2016 = vmatprep.subr.mxu0 0.0
    %2017 = vmatpush1.msra.mxu0 %v434
    %2018 = vmatprep.subr.mxu0 0.0
    %2019 = vmatpush1.msra.mxu0 %v435
    %2020 = vmatprep.subr.mxu0 0.0
    %2021 = vmatpush1.msra.mxu0 %v436
    %2022 = vmatprep.subr.mxu0 0.0
    %2023 = vmatpush1.msra.mxu0 %v437
    %2024 = vmatprep.subr.mxu0 0.0
    %2025 = vmatpush1.msra.mxu0 %v438
    %2026 = vmatprep.subr.mxu0 0.0
    %2027 = vmatpush1.msra.mxu0 %v439
    %2028 = vmatprep.subr.mxu0 0.0
    %2029 = vmatpush1.msra.mxu0 %v440
    %2030 = vmatprep.subr.mxu0 0.0
    %2031 = vmatpush1.msra.mxu0 %v441
    %2032 = vmatprep.subr.mxu0 0.0
    %2033 = vmatpush1.msra.mxu0 %v442
    %2034 = vmatprep.subr.mxu0 0.0
    %2035 = vmatpush1.msra.mxu0 %v443
    %2036 = vmatprep.subr.mxu0 0.0
    %2037 = vmatpush1.msra.mxu0 %v444
    %2038 = vmatprep.subr.mxu0 0.0
    %2039 = vmatpush1.msra.mxu0 %v445
    %2040 = vmatprep.subr.mxu0 0.0
    %2041 = vmatpush1.msra.mxu0 %v446
    %2042 = vmatprep.subr.mxu0 0.0
    %2043 = vmatpush1.msra.mxu0 %v447
    %2044 = vmatprep.subr.mxu0 0.0
    %2045 = vmatpush1.msra.mxu0 %v448
    %2046 = vmatprep.subr.mxu0 0.0
    %2047 = vmatpush1.msra.mxu0 %v449
    %2048 = vmatprep.subr.mxu0 0.0
    %2049 = vmatpush1.msra.mxu0 %v450
    %2050 = vmatprep.subr.mxu0 0.0
    %2051 = vmatpush1.msra.mxu0 %v451
    %2052 = vmatprep.subr.mxu0 0.0
    %2053 = vmatpush1.msra.mxu0 %v452
    %2054 = vmatprep.subr.mxu0 0.0
    %2055 = vmatpush1.msra.mxu0 %v453
    %2056 = vmatprep.subr.mxu0 0.0
    %2057 = vmatpush1.msra.mxu0 %v454
    %2058 = vmatprep.subr.mxu0 0.0
    %2059 = vmatpush1.msra.mxu0 %v455
    %2060 = vmatprep.subr.mxu0 0.0
    %2061 = vmatpush1.msra.mxu0 %v456
    %2062 = vmatprep.subr.mxu0 0.0
    %2063 = vmatpush1.msra.mxu0 %v457
    %2064 = vmatprep.subr.mxu0 0.0
    %2065 = vmatpush1.msra.mxu0 %v458
    %2066 = vmatprep.subr.mxu0 0.0
    %2067 = vmatpush1.msra.mxu0 %v459
    %2068 = vmatprep.mubr.f32.mxu0 %v1112
    %2069 = vmatmul.mubr.f32.gmra.mrb[0].mxu0 %v24
    %v2070 = vpop.f32.mrb[0].mxu0
    %v2071 = vadd.f32 %v2001, %v2070
    %v2072 = vpop.f32.mrb[0].mxu0
    %2073 = vdwg.mxu0
    %2074 = vmatprep.subr.mxu0 0.0
    %2075 = vmatpush1.msra.mxu0 %v460
    %2076 = vmatprep.subr.mxu0 0.0
    %2077 = vmatpush1.msra.mxu0 %v461
    %2078 = vmatprep.subr.mxu0 0.0
    %2079 = vmatpush1.msra.mxu0 %v462
    %2080 = vmatprep.subr.mxu0 0.0
    %2081 = vmatpush1.msra.mxu0 %v463
    %2082 = vmatprep.subr.mxu0 0.0
    %2083 = vmatpush1.msra.mxu0 %v464
    %2084 = vmatprep.subr.mxu0 0.0
    %2085 = vmatpush1.msra.mxu0 %v465
    %2086 = vmatprep.subr.mxu0 0.0
    %2087 = vmatpush1.msra.mxu0 %v466
    %2088 = vmatprep.subr.mxu0 0.0
    %2089 = vmatpush1.msra.mxu0 %v467
    %2090 = vmatprep.subr.mxu0 0.0
    %2091 = vmatpush1.msra.mxu0 %v468
    %2092 = vmatprep.subr.mxu0 0.0
    %2093 = vmatpush1.msra.mxu0 %v469
    %2094 = vmatprep.subr.mxu0 0.0
    %2095 = vmatpush1.msra.mxu0 %v470
    %2096 = vmatprep.subr.mxu0 0.0
    %2097 = vmatpush1.msra.mxu0 %v471
    %2098 = vmatprep.subr.mxu0 0.0
    %2099 = vmatpush1.msra.mxu0 %v472
    %2100 = vmatprep.subr.mxu0 0.0
    %2101 = vmatpush1.msra.mxu0 %v473
    %2102 = vmatprep.subr.mxu0 0.0
    %2103 = vmatpush1.msra.mxu0 %v474
    %2104 = vmatprep.subr.mxu0 0.0
    %2105 = vmatpush1.msra.mxu0 %v475
    %2106 = vmatprep.subr.mxu0 0.0
    %2107 = vmatpush1.msra.mxu0 %v476
    %2108 = vmatprep.subr.mxu0 0.0
    %2109 = vmatpush1.msra.mxu0 %v477
    %2110 = vmatprep.subr.mxu0 0.0
    %2111 = vmatpush1.msra.mxu0 %v478
    %2112 = vmatprep.subr.mxu0 0.0
    %2113 = vmatpush1.msra.mxu0 %v479
    %2114 = vmatprep.subr.mxu0 0.0
    %2115 = vmatpush1.msra.mxu0 %v480
    %2116 = vmatprep.subr.mxu0 0.0
    %2117 = vmatpush1.msra.mxu0 %v481
    %2118 = vmatprep.subr.mxu0 0.0
    %2119 = vmatpush1.msra.mxu0 %v482
    %2120 = vmatprep.subr.mxu0 0.0
    %2121 = vmatpush1.msra.mxu0 %v483
    %2122 = vmatprep.subr.mxu0 0.0
    %2123 = vmatpush1.msra.mxu0 %v484
    %2124 = vmatprep.subr.mxu0 0.0
    %2125 = vmatpush1.msra.mxu0 %v485
    %2126 = vmatprep.subr.mxu0 0.0
    %2127 = vmatpush1.msra.mxu0 %v486
    %2128 = vmatprep.subr.mxu0 0.0
    %2129 = vmatpush1.msra.mxu0 %v487
    %2130 = vmatprep.subr.mxu0 0.0
    %2131 = vmatpush1.msra.mxu0 %v488
    %2132 = vmatprep.subr.mxu0 0.0
    %2133 = vmatpush1.msra.mxu0 %v489
    %2134 = vmatprep.subr.mxu0 0.0
    %2135 = vmatpush1.msra.mxu0 %v490
    %2136 = vmatprep.subr.mxu0 0.0
    %2137 = vmatpush1.msra.mxu0 %v491
    %2138 = vmatprep.mubr.f32.mxu0 %v1113
    %2139 = vmatmul.mubr.f32.gmra.mrb[0].mxu0 %v25
    %v2140 = vpop.f32.mrb[0].mxu0
    %v2141 = vadd.f32 %v2071, %v2140
    %v2142 = vpop.f32.mrb[0].mxu0
    %2143 = vdwg.mxu0
    %2144 = vmatprep.subr.mxu0 0.0
    %2145 = vmatpush1.msra.mxu0 %v492
    %2146 = vmatprep.subr.mxu0 0.0
    %2147 = vmatpush1.msra.mxu0 %v493
    %2148 = vmatprep.subr.mxu0 0.0
    %2149 = vmatpush1.msra.mxu0 %v494
    %2150 = vmatprep.subr.mxu0 0.0
    %2151 = vmatpush1.msra.mxu0 %v495
    %2152 = vmatprep.subr.mxu0 0.0
    %2153 = vmatpush1.msra.mxu0 %v496
    %2154 = vmatprep.subr.mxu0 0.0
    %2155 = vmatpush1.msra.mxu0 %v497
    %2156 = vmatprep.subr.mxu0 0.0
    %2157 = vmatpush1.msra.mxu0 %v498
    %2158 = vmatprep.subr.mxu0 0.0
    %2159 = vmatpush1.msra.mxu0 %v499
    %2160 = vmatprep.subr.mxu0 0.0
    %2161 = vmatpush1.msra.mxu0 %v500
    %2162 = vmatprep.subr.mxu0 0.0
    %2163 = vmatpush1.msra.mxu0 %v501
    %2164 = vmatprep.subr.mxu0 0.0
    %2165 = vmatpush1.msra.mxu0 %v502
    %2166 = vmatprep.subr.mxu0 0.0
    %2167 = vmatpush1.msra.mxu0 %v503
    %2168 = vmatprep.subr.mxu0 0.0
    %2169 = vmatpush1.msra.mxu0 %v504
    %2170 = vmatprep.subr.mxu0 0.0
    %2171 = vmatpush1.msra.mxu0 %v505
    %2172 = vmatprep.subr.mxu0 0.0
    %2173 = vmatpush1.msra.mxu0 %v506
    %2174 = vmatprep.subr.mxu0 0.0
    %2175 = vmatpush1.msra.mxu0 %v507
    %2176 = vmatprep.subr.mxu0 0.0
    %2177 = vmatpush1.msra.mxu0 %v508
    %2178 = vmatprep.subr.mxu0 0.0
    %2179 = vmatpush1.msra.mxu0 %v509
    %2180 = vmatprep.subr.mxu0 0.0
    %2181 = vmatpush1.msra.mxu0 %v510
    %2182 = vmatprep.subr.mxu0 0.0
    %2183 = vmatpush1.msra.mxu0 %v511
    %2184 = vmatprep.subr.mxu0 0.0
    %2185 = vmatpush1.msra.mxu0 %v512
    %2186 = vmatprep.subr.mxu0 0.0
    %2187 = vmatpush1.msra.mxu0 %v513
    %2188 = vmatprep.subr.mxu0 0.0
    %2189 = vmatpush1.msra.mxu0 %v514
    %2190 = vmatprep.subr.mxu0 0.0
    %2191 = vmatpush1.msra.mxu0 %v515
    %2192 = vmatprep.subr.mxu0 0.0
    %2193 = vmatpush1.msra.mxu0 %v516
    %2194 = vmatprep.subr.mxu0 0.0
    %2195 = vmatpush1.msra.mxu0 %v517
    %2196 = vmatprep.subr.mxu0 0.0
    %2197 = vmatpush1.msra.mxu0 %v518
    %2198 = vmatprep.subr.mxu0 0.0
    %2199 = vmatpush1.msra.mxu0 %v519
    %2200 = vmatprep.subr.mxu0 0.0
    %2201 = vmatpush1.msra.mxu0 %v520
    %2202 = vmatprep.subr.mxu0 0.0
    %2203 = vmatpush1.msra.mxu0 %v521
    %2204 = vmatprep.subr.mxu0 0.0
    %2205 = vmatpush1.msra.mxu0 %v522
    %2206 = vmatprep.subr.mxu0 0.0
    %2207 = vmatpush1.msra.mxu0 %v523
    %2208 = vmatprep.mubr.f32.mxu0 %v1114
    %2209 = vmatmul.mubr.f32.gmra.mrb[0].mxu0 %v26
    %v2210 = vpop.f32.mrb[0].mxu0
    %v2211 = vadd.f32 %v2141, %v2210
    %v2212 = vpop.f32.mrb[0].mxu0
    %2213 = vdwg.mxu0
    %2214 = vmatprep.subr.mxu0 0.0
    %2215 = vmatpush1.msra.mxu0 %v524
    %2216 = vmatprep.subr.mxu0 0.0
    %2217 = vmatpush1.msra.mxu0 %v525
    %2218 = vmatprep.subr.mxu0 0.0
    %2219 = vmatpush1.msra.mxu0 %v526
    %2220 = vmatprep.subr.mxu0 0.0
    %2221 = vmatpush1.msra.mxu0 %v527
    %2222 = vmatprep.subr.mxu0 0.0
    %2223 = vmatpush1.msra.mxu0 %v528
    %2224 = vmatprep.subr.mxu0 0.0
    %2225 = vmatpush1.msra.mxu0 %v529
    %2226 = vmatprep.subr.mxu0 0.0
    %2227 = vmatpush1.msra.mxu0 %v530
    %2228 = vmatprep.subr.mxu0 0.0
    %2229 = vmatpush1.msra.mxu0 %v531
    %2230 = vmatprep.subr.mxu0 0.0
    %2231 = vmatpush1.msra.mxu0 %v532
    %2232 = vmatprep.subr.mxu0 0.0
    %2233 = vmatpush1.msra.mxu0 %v533
    %2234 = vmatprep.subr.mxu0 0.0
    %2235 = vmatpush1.msra.mxu0 %v534
    %2236 = vmatprep.subr.mxu0 0.0
    %2237 = vmatpush1.msra.mxu0 %v535
    %2238 = vmatprep.subr.mxu0 0.0
    %2239 = vmatpush1.msra.mxu0 %v536
    %2240 = vmatprep.subr.mxu0 0.0
    %2241 = vmatpush1.msra.mxu0 %v537
    %2242 = vmatprep.subr.mxu0 0.0
    %2243 = vmatpush1.msra.mxu0 %v538
    %2244 = vmatprep.subr.mxu0 0.0
    %2245 = vmatpush1.msra.mxu0 %v539
    %2246 = vmatprep.subr.mxu0 0.0
    %2247 = vmatpush1.msra.mxu0 %v540
    %2248 = vmatprep.subr.mxu0 0.0
    %2249 = vmatpush1.msra.mxu0 %v541
    %2250 = vmatprep.subr.mxu0 0.0
    %2251 = vmatpush1.msra.mxu0 %v542
    %2252 = vmatprep.subr.mxu0 0.0
    %2253 = vmatpush1.msra.mxu0 %v543
    %2254 = vmatprep.subr.mxu0 0.0
    %2255 = vmatpush1.msra.mxu0 %v544
    %2256 = vmatprep.subr.mxu0 0.0
    %2257 = vmatpush1.msra.mxu0 %v545
    %2258 = vmatprep.subr.mxu0 0.0
    %2259 = vmatpush1.msra.mxu0 %v546
    %2260 = vmatprep.subr.mxu0 0.0
    %2261 = vmatpush1.msra.mxu0 %v547
    %2262 = vmatprep.subr.mxu0 0.0
    %2263 = vmatpush1.msra.mxu0 %v548
    %2264 = vmatprep.subr.mxu0 0.0
    %2265 = vmatpush1.msra.mxu0 %v549
    %2266 = vmatprep.subr.mxu0 0.0
    %2267 = vmatpush1.msra.mxu0 %v550
    %2268 = vmatprep.subr.mxu0 0.0
    %2269 = vmatpush1.msra.mxu0 %v551
    %2270 = vmatprep.subr.mxu0 0.0
    %2271 = vmatpush1.msra.mxu0 %v552
    %2272 = vmatprep.subr.mxu0 0.0
    %2273 = vmatpush1.msra.mxu0 %v553
    %2274 = vmatprep.subr.mxu0 0.0
    %2275 = vmatpush1.msra.mxu0 %v554
    %2276 = vmatprep.subr.mxu0 0.0
    %2277 = vmatpush1.msra.mxu0 %v555
    %2278 = vmatprep.mubr.f32.mxu0 %v1115
    %2279 = vmatmul.mubr.f32.gmra.mrb[0].mxu0 %v27
    %v2280 = vpop.f32.mrb[0].mxu0
    %v2281 = vadd.f32 %v2211, %v2280
    %v2282 = vpop.f32.mrb[0].mxu0
    %2283 = vdwg.mxu0
    %2284 = vmatprep.subr.mxu0 0.0
    %2285 = vmatpush1.msra.mxu0 %v556
    %2286 = vmatprep.subr.mxu0 0.0
    %2287 = vmatpush1.msra.mxu0 %v557
    %2288 = vmatprep.subr.mxu0 0.0
    %2289 = vmatpush1.msra.mxu0 %v558
    %2290 = vmatprep.subr.mxu0 0.0
    %2291 = vmatpush1.msra.mxu0 %v559
    %2292 = vmatprep.subr.mxu0 0.0
    %2293 = vmatpush1.msra.mxu0 %v560
    %2294 = vmatprep.subr.mxu0 0.0
    %2295 = vmatpush1.msra.mxu0 %v561
    %2296 = vmatprep.subr.mxu0 0.0
    %2297 = vmatpush1.msra.mxu0 %v562
    %2298 = vmatprep.subr.mxu0 0.0
    %2299 = vmatpush1.msra.mxu0 %v563
    %2300 = vmatprep.subr.mxu0 0.0
    %2301 = vmatpush1.msra.mxu0 %v564
    %2302 = vmatprep.subr.mxu0 0.0
    %2303 = vmatpush1.msra.mxu0 %v565
    %2304 = vmatprep.subr.mxu0 0.0
    %2305 = vmatpush1.msra.mxu0 %v566
    %2306 = vmatprep.subr.mxu0 0.0
    %2307 = vmatpush1.msra.mxu0 %v567
    %2308 = vmatprep.subr.mxu0 0.0
    %2309 = vmatpush1.msra.mxu0 %v568
    %2310 = vmatprep.subr.mxu0 0.0
    %2311 = vmatpush1.msra.mxu0 %v569
    %2312 = vmatprep.subr.mxu0 0.0
    %2313 = vmatpush1.msra.mxu0 %v570
    %2314 = vmatprep.subr.mxu0 0.0
    %2315 = vmatpush1.msra.mxu0 %v571
    %2316 = vmatprep.subr.mxu0 0.0
    %2317 = vmatpush1.msra.mxu0 %v572
    %2318 = vmatprep.subr.mxu0 0.0
    %2319 = vmatpush1.msra.mxu0 %v573
    %2320 = vmatprep.subr.mxu0 0.0
    %2321 = vmatpush1.msra.mxu0 %v574
    %2322 = vmatprep.subr.mxu0 0.0
    %2323 = vmatpush1.msra.mxu0 %v575
    %2324 = vmatprep.subr.mxu0 0.0
    %2325 = vmatpush1.msra.mxu0 %v576
    %2326 = vmatprep.subr.mxu0 0.0
    %2327 = vmatpush1.msra.mxu0 %v577
    %2328 = vmatprep.subr.mxu0 0.0
    %2329 = vmatpush1.msra.mxu0 %v578
    %2330 = vmatprep.subr.mxu0 0.0
    %2331 = vmatpush1.msra.mxu0 %v579
    %2332 = vmatprep.subr.mxu0 0.0
    %2333 = vmatpush1.msra.mxu0 %v580
    %2334 = vmatprep.subr.mxu0 0.0
    %2335 = vmatpush1.msra.mxu0 %v581
    %2336 = vmatprep.subr.mxu0 0.0
    %2337 = vmatpush1.msra.mxu0 %v582
    %2338 = vmatprep.subr.mxu0 0.0
    %2339 = vmatpush1.msra.mxu0 %v583
    %2340 = vmatprep.subr.mxu0 0.0
    %2341 = vmatpush1.msra.mxu0 %v584
    %2342 = vmatprep.subr.mxu0 0.0
    %2343 = vmatpush1.msra.mxu0 %v585
    %2344 = vmatprep.subr.mxu0 0.0
    %2345 = vmatpush1.msra.mxu0 %v586
    %2346 = vmatprep.subr.mxu0 0.0
    %2347 = vmatpush1.msra.mxu0 %v587
    %2348 = vmatprep.mubr.f32.mxu0 %v1116
    %2349 = vmatmul.mubr.f32.gmra.mrb[0].mxu0 %v28
    %v2350 = vpop.f32.mrb[0].mxu0
    %v2351 = vadd.f32 %v2281, %v2350
    %v2352 = vpop.f32.mrb[0].mxu0
    %2353 = vdwg.mxu0
    %2354 = vmatprep.subr.mxu0 0.0
    %2355 = vmatpush1.msra.mxu0 %v588
    %2356 = vmatprep.subr.mxu0 0.0
    %2357 = vmatpush1.msra.mxu0 %v589
    %2358 = vmatprep.subr.mxu0 0.0
    %2359 = vmatpush1.msra.mxu0 %v590
    %2360 = vmatprep.subr.mxu0 0.0
    %2361 = vmatpush1.msra.mxu0 %v591
    %2362 = vmatprep.subr.mxu0 0.0
    %2363 = vmatpush1.msra.mxu0 %v592
    %2364 = vmatprep.subr.mxu0 0.0
    %2365 = vmatpush1.msra.mxu0 %v593
    %2366 = vmatprep.subr.mxu0 0.0
    %2367 = vmatpush1.msra.mxu0 %v594
    %2368 = vmatprep.subr.mxu0 0.0
    %2369 = vmatpush1.msra.mxu0 %v595
    %2370 = vmatprep.subr.mxu0 0.0
    %2371 = vmatpush1.msra.mxu0 %v596
    %2372 = vmatprep.subr.mxu0 0.0
    %2373 = vmatpush1.msra.mxu0 %v597
    %2374 = vmatprep.subr.mxu0 0.0
    %2375 = vmatpush1.msra.mxu0 %v598
    %2376 = vmatprep.subr.mxu0 0.0
    %2377 = vmatpush1.msra.mxu0 %v599
    %2378 = vmatprep.subr.mxu0 0.0
    %2379 = vmatpush1.msra.mxu0 %v600
    %2380 = vmatprep.subr.mxu0 0.0
    %2381 = vmatpush1.msra.mxu0 %v601
    %2382 = vmatprep.subr.mxu0 0.0
    %2383 = vmatpush1.msra.mxu0 %v602
    %2384 = vmatprep.subr.mxu0 0.0
    %2385 = vmatpush1.msra.mxu0 %v603
    %2386 = vmatprep.subr.mxu0 0.0
    %2387 = vmatpush1.msra.mxu0 %v604
    %2388 = vmatprep.subr.mxu0 0.0
    %2389 = vmatpush1.msra.mxu0 %v605
    %2390 = vmatprep.subr.mxu0 0.0
    %2391 = vmatpush1.msra.mxu0 %v606
    %2392 = vmatprep.subr.mxu0 0.0
    %2393 = vmatpush1.msra.mxu0 %v607
    %2394 = vmatprep.subr.mxu0 0.0
    %2395 = vmatpush1.msra.mxu0 %v608
    %2396 = vmatprep.subr.mxu0 0.0
    %2397 = vmatpush1.msra.mxu0 %v609
    %2398 = vmatprep.subr.mxu0 0.0
    %2399 = vmatpush1.msra.mxu0 %v610
    %2400 = vmatprep.subr.mxu0 0.0
    %2401 = vmatpush1.msra.mxu0 %v611
    %2402 = vmatprep.subr.mxu0 0.0
    %2403 = vmatpush1.msra.mxu0 %v612
    %2404 = vmatprep.subr.mxu0 0.0
    %2405 = vmatpush1.msra.mxu0 %v613
    %2406 = vmatprep.subr.mxu0 0.0
    %2407 = vmatpush1.msra.mxu0 %v614
    %2408 = vmatprep.subr.mxu0 0.0
    %2409 = vmatpush1.msra.mxu0 %v615
    %2410 = vmatprep.subr.mxu0 0.0
    %2411 = vmatpush1.msra.mxu0 %v616
    %2412 = vmatprep.subr.mxu0 0.0
    %2413 = vmatpush1.msra.mxu0 %v617
    %2414 = vmatprep.subr.mxu0 0.0
    %2415 = vmatpush1.msra.mxu0 %v618
    %2416 = vmatprep.subr.mxu0 0.0
    %2417 = vmatpush1.msra.mxu0 %v619
    %2418 = vmatprep.mubr.f32.mxu0 %v1117
    %2419 = vmatmul.mubr.f32.gmra.mrb[0].mxu0 %v29
    %v2420 = vpop.f32.mrb[0].mxu0
    %v2421 = vadd.f32 %v2351, %v2420
    %v2422 = vpop.f32.mrb[0].mxu0
    %2423 = vdwg.mxu0
    %2424 = vmatprep.subr.mxu0 0.0
    %2425 = vmatpush1.msra.mxu0 %v620
    %2426 = vmatprep.subr.mxu0 0.0
    %2427 = vmatpush1.msra.mxu0 %v621
    %2428 = vmatprep.subr.mxu0 0.0
    %2429 = vmatpush1.msra.mxu0 %v622
    %2430 = vmatprep.subr.mxu0 0.0
    %2431 = vmatpush1.msra.mxu0 %v623
    %2432 = vmatprep.subr.mxu0 0.0
    %2433 = vmatpush1.msra.mxu0 %v624
    %2434 = vmatprep.subr.mxu0 0.0
    %2435 = vmatpush1.msra.mxu0 %v625
    %2436 = vmatprep.subr.mxu0 0.0
    %2437 = vmatpush1.msra.mxu0 %v626
    %2438 = vmatprep.subr.mxu0 0.0
    %2439 = vmatpush1.msra.mxu0 %v627
    %2440 = vmatprep.subr.mxu0 0.0
    %2441 = vmatpush1.msra.mxu0 %v628
    %2442 = vmatprep.subr.mxu0 0.0
    %2443 = vmatpush1.msra.mxu0 %v629
    %2444 = vmatprep.subr.mxu0 0.0
    %2445 = vmatpush1.msra.mxu0 %v630
    %2446 = vmatprep.subr.mxu0 0.0
    %2447 = vmatpush1.msra.mxu0 %v631
    %2448 = vmatprep.subr.mxu0 0.0
    %2449 = vmatpush1.msra.mxu0 %v632
    %2450 = vmatprep.subr.mxu0 0.0
    %2451 = vmatpush1.msra.mxu0 %v633
    %2452 = vmatprep.subr.mxu0 0.0
    %2453 = vmatpush1.msra.mxu0 %v634
    %2454 = vmatprep.subr.mxu0 0.0
    %2455 = vmatpush1.msra.mxu0 %v635
    %2456 = vmatprep.subr.mxu0 0.0
    %2457 = vmatpush1.msra.mxu0 %v636
    %2458 = vmatprep.subr.mxu0 0.0
    %2459 = vmatpush1.msra.mxu0 %v637
    %2460 = vmatprep.subr.mxu0 0.0
    %2461 = vmatpush1.msra.mxu0 %v638
    %2462 = vmatprep.subr.mxu0 0.0
    %2463 = vmatpush1.msra.mxu0 %v639
    %2464 = vmatprep.subr.mxu0 0.0
    %2465 = vmatpush1.msra.mxu0 %v640
    %2466 = vmatprep.subr.mxu0 0.0
    %2467 = vmatpush1.msra.mxu0 %v641
    %2468 = vmatprep.subr.mxu0 0.0
    %2469 = vmatpush1.msra.mxu0 %v642
    %2470 = vmatprep.subr.mxu0 0.0
    %2471 = vmatpush1.msra.mxu0 %v643
    %2472 = vmatprep.subr.mxu0 0.0
    %2473 = vmatpush1.msra.mxu0 %v644
    %2474 = vmatprep.subr.mxu0 0.0
    %2475 = vmatpush1.msra.mxu0 %v645
    %2476 = vmatprep.subr.mxu0 0.0
    %2477 = vmatpush1.msra.mxu0 %v646
    %2478 = vmatprep.subr.mxu0 0.0
    %2479 = vmatpush1.msra.mxu0 %v647
    %2480 = vmatprep.subr.mxu0 0.0
    %2481 = vmatpush1.msra.mxu0 %v648
    %2482 = vmatprep.subr.mxu0 0.0
    %2483 = vmatpush1.msra.mxu0 %v649
    %2484 = vmatprep.subr.mxu0 0.0
    %2485 = vmatpush1.msra.mxu0 %v650
    %2486 = vmatprep.subr.mxu0 0.0
    %2487 = vmatpush1.msra.mxu0 %v651
    %2488 = vmatprep.mubr.f32.mxu0 %v1118
    %2489 = vmatmul.mubr.f32.gmra.mrb[0].mxu0 %v30
    %v2490 = vpop.f32.mrb[0].mxu0
    %v2491 = vadd.f32 %v2421, %v2490
    %v2492 = vpop.f32.mrb[0].mxu0
    %2493 = vdwg.mxu0
    %2494 = vmatprep.subr.mxu0 0.0
    %2495 = vmatpush1.msra.mxu0 %v652
    %2496 = vmatprep.subr.mxu0 0.0
    %2497 = vmatpush1.msra.mxu0 %v653
    %2498 = vmatprep.subr.mxu0 0.0
    %2499 = vmatpush1.msra.mxu0 %v654
    %2500 = vmatprep.subr.mxu0 0.0
    %2501 = vmatpush1.msra.mxu0 %v655
    %2502 = vmatprep.subr.mxu0 0.0
    %2503 = vmatpush1.msra.mxu0 %v656
    %2504 = vmatprep.subr.mxu0 0.0
    %2505 = vmatpush1.msra.mxu0 %v657
    %2506 = vmatprep.subr.mxu0 0.0
    %2507 = vmatpush1.msra.mxu0 %v658
    %2508 = vmatprep.subr.mxu0 0.0
    %2509 = vmatpush1.msra.mxu0 %v659
    %2510 = vmatprep.subr.mxu0 0.0
    %2511 = vmatpush1.msra.mxu0 %v660
    %2512 = vmatprep.subr.mxu0 0.0
    %2513 = vmatpush1.msra.mxu0 %v661
    %2514 = vmatprep.subr.mxu0 0.0
    %2515 = vmatpush1.msra.mxu0 %v662
    %2516 = vmatprep.subr.mxu0 0.0
    %2517 = vmatpush1.msra.mxu0 %v663
    %2518 = vmatprep.subr.mxu0 0.0
    %2519 = vmatpush1.msra.mxu0 %v664
    %2520 = vmatprep.subr.mxu0 0.0
    %2521 = vmatpush1.msra.mxu0 %v665
    %2522 = vmatprep.subr.mxu0 0.0
    %2523 = vmatpush1.msra.mxu0 %v666
    %2524 = vmatprep.subr.mxu0 0.0
    %2525 = vmatpush1.msra.mxu0 %v667
    %2526 = vmatprep.subr.mxu0 0.0
    %2527 = vmatpush1.msra.mxu0 %v668
    %2528 = vmatprep.subr.mxu0 0.0
    %2529 = vmatpush1.msra.mxu0 %v669
    %2530 = vmatprep.subr.mxu0 0.0
    %2531 = vmatpush1.msra.mxu0 %v670
    %2532 = vmatprep.subr.mxu0 0.0
    %2533 = vmatpush1.msra.mxu0 %v671
    %2534 = vmatprep.subr.mxu0 0.0
    %2535 = vmatpush1.msra.mxu0 %v672
    %2536 = vmatprep.subr.mxu0 0.0
    %2537 = vmatpush1.msra.mxu0 %v673
    %2538 = vmatprep.subr.mxu0 0.0
    %2539 = vmatpush1.msra.mxu0 %v674
    %2540 = vmatprep.subr.mxu0 0.0
    %2541 = vmatpush1.msra.mxu0 %v675
    %2542 = vmatprep.subr.mxu0 0.0
    %2543 = vmatpush1.msra.mxu0 %v676
    %2544 = vmatprep.subr.mxu0 0.0
    %2545 = vmatpush1.msra.mxu0 %v677
    %2546 = vmatprep.subr.mxu0 0.0
    %2547 = vmatpush1.msra.mxu0 %v678
    %2548 = vmatprep.subr.mxu0 0.0
    %2549 = vmatpush1.msra.mxu0 %v679
    %2550 = vmatprep.subr.mxu0 0.0
    %2551 = vmatpush1.msra.mxu0 %v680
    %2552 = vmatprep.subr.mxu0 0.0
    %2553 = vmatpush1.msra.mxu0 %v681
    %2554 = vmatprep.subr.mxu0 0.0
    %2555 = vmatpush1.msra.mxu0 %v682
    %2556 = vmatprep.subr.mxu0 0.0
    %2557 = vmatpush1.msra.mxu0 %v683
    %2558 = vmatprep.mubr.f32.mxu0 %v1119
    %2559 = vmatmul.mubr.f32.gmra.mrb[0].mxu0 %v31
    %v2560 = vpop.f32.mrb[0].mxu0
    %v2561 = vadd.f32 %v2491, %v2560
    %v2562 = vpop.f32.mrb[0].mxu0
    %2563 = vdwg.mxu0
    %2564 = vmatprep.subr.mxu0 0.0
    %2565 = vmatpush1.msra.mxu0 %v684
    %2566 = vmatprep.subr.mxu0 0.0
    %2567 = vmatpush1.msra.mxu0 %v685
    %2568 = vmatprep.subr.mxu0 0.0
    %2569 = vmatpush1.msra.mxu0 %v686
    %2570 = vmatprep.subr.mxu0 0.0
    %2571 = vmatpush1.msra.mxu0 %v687
    %2572 = vmatprep.subr.mxu0 0.0
    %2573 = vmatpush1.msra.mxu0 %v688
    %2574 = vmatprep.subr.mxu0 0.0
    %2575 = vmatpush1.msra.mxu0 %v689
    %2576 = vmatprep.subr.mxu0 0.0
    %2577 = vmatpush1.msra.mxu0 %v690
    %2578 = vmatprep.subr.mxu0 0.0
    %2579 = vmatpush1.msra.mxu0 %v691
    %2580 = vmatprep.subr.mxu0 0.0
    %2581 = vmatpush1.msra.mxu0 %v692
    %2582 = vmatprep.subr.mxu0 0.0
    %2583 = vmatpush1.msra.mxu0 %v693
    %2584 = vmatprep.subr.mxu0 0.0
    %2585 = vmatpush1.msra.mxu0 %v694
    %2586 = vmatprep.subr.mxu0 0.0
    %2587 = vmatpush1.msra.mxu0 %v695
    %2588 = vmatprep.subr.mxu0 0.0
    %2589 = vmatpush1.msra.mxu0 %v696
    %2590 = vmatprep.subr.mxu0 0.0
    %2591 = vmatpush1.msra.mxu0 %v697
    %2592 = vmatprep.subr.mxu0 0.0
    %2593 = vmatpush1.msra.mxu0 %v698
    %2594 = vmatprep.subr.mxu0 0.0
    %2595 = vmatpush1.msra.mxu0 %v699
    %2596 = vmatprep.subr.mxu0 0.0
    %2597 = vmatpush1.msra.mxu0 %v700
    %2598 = vmatprep.subr.mxu0 0.0
    %2599 = vmatpush1.msra.mxu0 %v701
    %2600 = vmatprep.subr.mxu0 0.0
    %2601 = vmatpush1.msra.mxu0 %v702
    %2602 = vmatprep.subr.mxu0 0.0
    %2603 = vmatpush1.msra.mxu0 %v703
    %2604 = vmatprep.subr.mxu0 0.0
    %2605 = vmatpush1.msra.mxu0 %v704
    %2606 = vmatprep.subr.mxu0 0.0
    %2607 = vmatpush1.msra.mxu0 %v705
    %2608 = vmatprep.subr.mxu0 0.0
    %2609 = vmatpush1.msra.mxu0 %v706
    %2610 = vmatprep.subr.mxu0 0.0
    %2611 = vmatpush1.msra.mxu0 %v707
    %2612 = vmatprep.subr.mxu0 0.0
    %2613 = vmatpush1.msra.mxu0 %v708
    %2614 = vmatprep.subr.mxu0 0.0
    %2615 = vmatpush1.msra.mxu0 %v709
    %2616 = vmatprep.subr.mxu0 0.0
    %2617 = vmatpush1.msra.mxu0 %v710
    %2618 = vmatprep.subr.mxu0 0.0
    %2619 = vmatpush1.msra.mxu0 %v711
    %2620 = vmatprep.subr.mxu0 0.0
    %2621 = vmatpush1.msra.mxu0 %v712
    %2622 = vmatprep.subr.mxu0 0.0
    %2623 = vmatpush1.msra.mxu0 %v713
    %2624 = vmatprep.subr.mxu0 0.0
    %2625 = vmatpush1.msra.mxu0 %v714
    %2626 = vmatprep.subr.mxu0 0.0
    %2627 = vmatpush1.msra.mxu0 %v715
    %2628 = vmatprep.mubr.f32.mxu0 %v1120
    %2629 = vmatmul.mubr.f32.gmra.mrb[0].mxu0 %v32
    %v2630 = vpop.f32.mrb[0].mxu0
    %v2631 = vadd.f32 %v2561, %v2630
    %v2632 = vpop.f32.mrb[0].mxu0
    %2633 = vdwg.mxu0
    %2634 = vmatprep.subr.mxu0 0.0
    %2635 = vmatpush1.msra.mxu0 %v716
    %2636 = vmatprep.subr.mxu0 0.0
    %2637 = vmatpush1.msra.mxu0 %v717
    %2638 = vmatprep.subr.mxu0 0.0
    %2639 = vmatpush1.msra.mxu0 %v718
    %2640 = vmatprep.subr.mxu0 0.0
    %2641 = vmatpush1.msra.mxu0 %v719
    %2642 = vmatprep.subr.mxu0 0.0
    %2643 = vmatpush1.msra.mxu0 %v720
    %2644 = vmatprep.subr.mxu0 0.0
    %2645 = vmatpush1.msra.mxu0 %v721
    %2646 = vmatprep.subr.mxu0 0.0
    %2647 = vmatpush1.msra.mxu0 %v722
    %2648 = vmatprep.subr.mxu0 0.0
    %2649 = vmatpush1.msra.mxu0 %v723
    %2650 = vmatprep.subr.mxu0 0.0
    %2651 = vmatpush1.msra.mxu0 %v724
    %2652 = vmatprep.subr.mxu0 0.0
    %2653 = vmatpush1.msra.mxu0 %v725
    %2654 = vmatprep.subr.mxu0 0.0
    %2655 = vmatpush1.msra.mxu0 %v726
    %2656 = vmatprep.subr.mxu0 0.0
    %2657 = vmatpush1.msra.mxu0 %v727
    %2658 = vmatprep.subr.mxu0 0.0
    %2659 = vmatpush1.msra.mxu0 %v728
    %2660 = vmatprep.subr.mxu0 0.0
    %2661 = vmatpush1.msra.mxu0 %v729
    %2662 = vmatprep.subr.mxu0 0.0
    %2663 = vmatpush1.msra.mxu0 %v730
    %2664 = vmatprep.subr.mxu0 0.0
    %2665 = vmatpush1.msra.mxu0 %v731
    %2666 = vmatprep.subr.mxu0 0.0
    %2667 = vmatpush1.msra.mxu0 %v732
    %2668 = vmatprep.subr.mxu0 0.0
    %2669 = vmatpush1.msra.mxu0 %v733
    %2670 = vmatprep.subr.mxu0 0.0
    %2671 = vmatpush1.msra.mxu0 %v734
    %2672 = vmatprep.subr.mxu0 0.0
    %2673 = vmatpush1.msra.mxu0 %v735
    %2674 = vmatprep.subr.mxu0 0.0
    %2675 = vmatpush1.msra.mxu0 %v736
    %2676 = vmatprep.subr.mxu0 0.0
    %2677 = vmatpush1.msra.mxu0 %v737
    %2678 = vmatprep.subr.mxu0 0.0
    %2679 = vmatpush1.msra.mxu0 %v738
    %2680 = vmatprep.subr.mxu0 0.0
    %2681 = vmatpush1.msra.mxu0 %v739
    %2682 = vmatprep.subr.mxu0 0.0
    %2683 = vmatpush1.msra.mxu0 %v740
    %2684 = vmatprep.subr.mxu0 0.0
    %2685 = vmatpush1.msra.mxu0 %v741
    %2686 = vmatprep.subr.mxu0 0.0
    %2687 = vmatpush1.msra.mxu0 %v742
    %2688 = vmatprep.subr.mxu0 0.0
    %2689 = vmatpush1.msra.mxu0 %v743
    %2690 = vmatprep.subr.mxu0 0.0
    %2691 = vmatpush1.msra.mxu0 %v744
    %2692 = vmatprep.subr.mxu0 0.0
    %2693 = vmatpush1.msra.mxu0 %v745
    %2694 = vmatprep.subr.mxu0 0.0
    %2695 = vmatpush1.msra.mxu0 %v746
    %2696 = vmatprep.subr.mxu0 0.0
    %2697 = vmatpush1.msra.mxu0 %v747
    %2698 = vmatprep.mubr.f32.mxu0 %v1121
    %2699 = vmatmul.mubr.f32.gmra.mrb[0].mxu0 %v33
    %v2700 = vpop.f32.mrb[0].mxu0
    %v2701 = vadd.f32 %v2631, %v2700
    %v2702 = vpop.f32.mrb[0].mxu0
    %2703 = vdwg.mxu0
    %2704 = vmatprep.subr.mxu0 0.0
    %2705 = vmatpush1.msra.mxu0 %v748
    %2706 = vmatprep.subr.mxu0 0.0
    %2707 = vmatpush1.msra.mxu0 %v749
    %2708 = vmatprep.subr.mxu0 0.0
    %2709 = vmatpush1.msra.mxu0 %v750
    %2710 = vmatprep.subr.mxu0 0.0
    %2711 = vmatpush1.msra.mxu0 %v751
    %2712 = vmatprep.subr.mxu0 0.0
    %2713 = vmatpush1.msra.mxu0 %v752
    %2714 = vmatprep.subr.mxu0 0.0
    %2715 = vmatpush1.msra.mxu0 %v753
    %2716 = vmatprep.subr.mxu0 0.0
    %2717 = vmatpush1.msra.mxu0 %v754
    %2718 = vmatprep.subr.mxu0 0.0
    %2719 = vmatpush1.msra.mxu0 %v755
    %2720 = vmatprep.subr.mxu0 0.0
    %2721 = vmatpush1.msra.mxu0 %v756
    %2722 = vmatprep.subr.mxu0 0.0
    %2723 = vmatpush1.msra.mxu0 %v757
    %2724 = vmatprep.subr.mxu0 0.0
    %2725 = vmatpush1.msra.mxu0 %v758
    %2726 = vmatprep.subr.mxu0 0.0
    %2727 = vmatpush1.msra.mxu0 %v759
    %2728 = vmatprep.subr.mxu0 0.0
    %2729 = vmatpush1.msra.mxu0 %v760
    %2730 = vmatprep.subr.mxu0 0.0
    %2731 = vmatpush1.msra.mxu0 %v761
    %2732 = vmatprep.subr.mxu0 0.0
    %2733 = vmatpush1.msra.mxu0 %v762
    %2734 = vmatprep.subr.mxu0 0.0
    %2735 = vmatpush1.msra.mxu0 %v763
    %2736 = vmatprep.subr.mxu0 0.0
    %2737 = vmatpush1.msra.mxu0 %v764
    %2738 = vmatprep.subr.mxu0 0.0
    %2739 = vmatpush1.msra.mxu0 %v765
    %2740 = vmatprep.subr.mxu0 0.0
    %2741 = vmatpush1.msra.mxu0 %v766
    %2742 = vmatprep.subr.mxu0 0.0
    %2743 = vmatpush1.msra.mxu0 %v767
    %2744 = vmatprep.subr.mxu0 0.0
    %2745 = vmatpush1.msra.mxu0 %v768
    %2746 = vmatprep.subr.mxu0 0.0
    %2747 = vmatpush1.msra.mxu0 %v769
    %2748 = vmatprep.subr.mxu0 0.0
    %2749 = vmatpush1.msra.mxu0 %v770
    %2750 = vmatprep.subr.mxu0 0.0
    %2751 = vmatpush1.msra.mxu0 %v771
    %2752 = vmatprep.subr.mxu0 0.0
    %2753 = vmatpush1.msra.mxu0 %v772
    %2754 = vmatprep.subr.mxu0 0.0
    %2755 = vmatpush1.msra.mxu0 %v773
    %2756 = vmatprep.subr.mxu0 0.0
    %2757 = vmatpush1.msra.mxu0 %v774
    %2758 = vmatprep.subr.mxu0 0.0
    %2759 = vmatpush1.msra.mxu0 %v775
    %2760 = vmatprep.subr.mxu0 0.0
    %2761 = vmatpush1.msra.mxu0 %v776
    %2762 = vmatprep.subr.mxu0 0.0
    %2763 = vmatpush1.msra.mxu0 %v777
    %2764 = vmatprep.subr.mxu0 0.0
    %2765 = vmatpush1.msra.mxu0 %v778
    %2766 = vmatprep.subr.mxu0 0.0
    %2767 = vmatpush1.msra.mxu0 %v779
    %2768 = vmatprep.mubr.f32.mxu0 %v1122
    %2769 = vmatmul.mubr.f32.gmra.mrb[0].mxu0 %v34
    %v2770 = vpop.f32.mrb[0].mxu0
    %v2771 = vadd.f32 %v2701, %v2770
    %v2772 = vpop.f32.mrb[0].mxu0
    %2773 = vdwg.mxu0
    %2774 = vmatprep.subr.mxu0 0.0
    %2775 = vmatpush1.msra.mxu0 %v780
    %2776 = vmatprep.subr.mxu0 0.0
    %2777 = vmatpush1.msra.mxu0 %v781
    %2778 = vmatprep.subr.mxu0 0.0
    %2779 = vmatpush1.msra.mxu0 %v782
    %2780 = vmatprep.subr.mxu0 0.0
    %2781 = vmatpush1.msra.mxu0 %v783
    %2782 = vmatprep.subr.mxu0 0.0
    %2783 = vmatpush1.msra.mxu0 %v784
    %2784 = vmatprep.subr.mxu0 0.0
    %2785 = vmatpush1.msra.mxu0 %v785
    %2786 = vmatprep.subr.mxu0 0.0
    %2787 = vmatpush1.msra.mxu0 %v786
    %2788 = vmatprep.subr.mxu0 0.0
    %2789 = vmatpush1.msra.mxu0 %v787
    %2790 = vmatprep.subr.mxu0 0.0
    %2791 = vmatpush1.msra.mxu0 %v788
    %2792 = vmatprep.subr.mxu0 0.0
    %2793 = vmatpush1.msra.mxu0 %v789
    %2794 = vmatprep.subr.mxu0 0.0
    %2795 = vmatpush1.msra.mxu0 %v790
    %2796 = vmatprep.subr.mxu0 0.0
    %2797 = vmatpush1.msra.mxu0 %v791
    %2798 = vmatprep.subr.mxu0 0.0
    %2799 = vmatpush1.msra.mxu0 %v792
    %2800 = vmatprep.subr.mxu0 0.0
    %2801 = vmatpush1.msra.mxu0 %v793
    %2802 = vmatprep.subr.mxu0 0.0
    %2803 = vmatpush1.msra.mxu0 %v794
    %2804 = vmatprep.subr.mxu0 0.0
    %2805 = vmatpush1.msra.mxu0 %v795
    %2806 = vmatprep.subr.mxu0 0.0
    %2807 = vmatpush1.msra.mxu0 %v796
    %2808 = vmatprep.subr.mxu0 0.0
    %2809 = vmatpush1.msra.mxu0 %v797
    %2810 = vmatprep.subr.mxu0 0.0
    %2811 = vmatpush1.msra.mxu0 %v798
    %2812 = vmatprep.subr.mxu0 0.0
    %2813 = vmatpush1.msra.mxu0 %v799
    %2814 = vmatprep.subr.mxu0 0.0
    %2815 = vmatpush1.msra.mxu0 %v800
    %2816 = vmatprep.subr.mxu0 0.0
    %2817 = vmatpush1.msra.mxu0 %v801
    %2818 = vmatprep.subr.mxu0 0.0
    %2819 = vmatpush1.msra.mxu0 %v802
    %2820 = vmatprep.subr.mxu0 0.0
    %2821 = vmatpush1.msra.mxu0 %v803
    %2822 = vmatprep.subr.mxu0 0.0
    %2823 = vmatpush1.msra.mxu0 %v804
    %2824 = vmatprep.subr.mxu0 0.0
    %2825 = vmatpush1.msra.mxu0 %v805
    %2826 = vmatprep.subr.mxu0 0.0
    %2827 = vmatpush1.msra.mxu0 %v806
    %2828 = vmatprep.subr.mxu0 0.0
    %2829 = vmatpush1.msra.mxu0 %v807
    %2830 = vmatprep.subr.mxu0 0.0
    %2831 = vmatpush1.msra.mxu0 %v808
    %2832 = vmatprep.subr.mxu0 0.0
    %2833 = vmatpush1.msra.mxu0 %v809
    %2834 = vmatprep.subr.mxu0 0.0
    %2835 = vmatpush1.msra.mxu0 %v810
    %2836 = vmatprep.subr.mxu0 0.0
    %2837 = vmatpush1.msra.mxu0 %v811
    %2838 = vmatprep.mubr.f32.mxu0 %v1123
    %2839 = vmatmul.mubr.f32.gmra.mrb[0].mxu0 %v35
    %v2840 = vpop.f32.mrb[0].mxu0
    %v2841 = vadd.f32 %v2771, %v2840
    %v2842 = vpop.f32.mrb[0].mxu0
    %2843 = vdwg.mxu0
    %2844 = vmatprep.subr.mxu0 0.0
    %2845 = vmatpush1.msra.mxu0 %v812
    %2846 = vmatprep.subr.mxu0 0.0
    %2847 = vmatpush1.msra.mxu0 %v813
    %2848 = vmatprep.subr.mxu0 0.0
    %2849 = vmatpush1.msra.mxu0 %v814
    %2850 = vmatprep.subr.mxu0 0.0
    %2851 = vmatpush1.msra.mxu0 %v815
    %2852 = vmatprep.subr.mxu0 0.0
    %2853 = vmatpush1.msra.mxu0 %v816
    %2854 = vmatprep.subr.mxu0 0.0
    %2855 = vmatpush1.msra.mxu0 %v817
    %2856 = vmatprep.subr.mxu0 0.0
    %2857 = vmatpush1.msra.mxu0 %v818
    %2858 = vmatprep.subr.mxu0 0.0
    %2859 = vmatpush1.msra.mxu0 %v819
    %2860 = vmatprep.subr.mxu0 0.0
    %2861 = vmatpush1.msra.mxu0 %v820
    %2862 = vmatprep.subr.mxu0 0.0
    %2863 = vmatpush1.msra.mxu0 %v821
    %2864 = vmatprep.subr.mxu0 0.0
    %2865 = vmatpush1.msra.mxu0 %v822
    %2866 = vmatprep.subr.mxu0 0.0
    %2867 = vmatpush1.msra.mxu0 %v823
    %2868 = vmatprep.subr.mxu0 0.0
    %2869 = vmatpush1.msra.mxu0 %v824
    %2870 = vmatprep.subr.mxu0 0.0
    %2871 = vmatpush1.msra.mxu0 %v825
    %2872 = vmatprep.subr.mxu0 0.0
    %2873 = vmatpush1.msra.mxu0 %v826
    %2874 = vmatprep.subr.mxu0 0.0
    %2875 = vmatpush1.msra.mxu0 %v827
    %2876 = vmatprep.subr.mxu0 0.0
    %2877 = vmatpush1.msra.mxu0 %v828
    %2878 = vmatprep.subr.mxu0 0.0
    %2879 = vmatpush1.msra.mxu0 %v829
    %2880 = vmatprep.subr.mxu0 0.0
    %2881 = vmatpush1.msra.mxu0 %v830
    %2882 = vmatprep.subr.mxu0 0.0
    %2883 = vmatpush1.msra.mxu0 %v831
    %2884 = vmatprep.subr.mxu0 0.0
    %2885 = vmatpush1.msra.mxu0 %v832
    %2886 = vmatprep.subr.mxu0 0.0
    %2887 = vmatpush1.msra.mxu0 %v833
    %2888 = vmatprep.subr.mxu0 0.0
    %2889 = vmatpush1.msra.mxu0 %v834
    %2890 = vmatprep.subr.mxu0 0.0
    %2891 = vmatpush1.msra.mxu0 %v835
    %2892 = vmatprep.subr.mxu0 0.0
    %2893 = vmatpush1.msra.mxu0 %v836
    %2894 = vmatprep.subr.mxu0 0.0
    %2895 = vmatpush1.msra.mxu0 %v837
    %2896 = vmatprep.subr.mxu0 0.0
    %2897 = vmatpush1.msra.mxu0 %v838
    %2898 = vmatprep.subr.mxu0 0.0
    %2899 = vmatpush1.msra.mxu0 %v839
    %2900 = vmatprep.subr.mxu0 0.0
    %2901 = vmatpush1.msra.mxu0 %v840
    %2902 = vmatprep.subr.mxu0 0.0
    %2903 = vmatpush1.msra.mxu0 %v841
    %2904 = vmatprep.subr.mxu0 0.0
    %2905 = vmatpush1.msra.mxu0 %v842
    %2906 = vmatprep.subr.mxu0 0.0
    %2907 = vmatpush1.msra.mxu0 %v843
    %2908 = vmatprep.mubr.f32.mxu0 %v1124
    %2909 = vmatmul.mubr.f32.gmra.mrb[0].mxu0 %v36
    %v2910 = vpop.f32.mrb[0].mxu0
    %v2911 = vadd.f32 %v2841, %v2910
    %v2912 = vpop.f32.mrb[0].mxu0
    %2913 = vdwg.mxu0
    %2914 = vmatprep.subr.mxu0 0.0
    %2915 = vmatpush1.msra.mxu0 %v844
    %2916 = vmatprep.subr.mxu0 0.0
    %2917 = vmatpush1.msra.mxu0 %v845
    %2918 = vmatprep.subr.mxu0 0.0
    %2919 = vmatpush1.msra.mxu0 %v846
    %2920 = vmatprep.subr.mxu0 0.0
    %2921 = vmatpush1.msra.mxu0 %v847
    %2922 = vmatprep.subr.mxu0 0.0
    %2923 = vmatpush1.msra.mxu0 %v848
    %2924 = vmatprep.subr.mxu0 0.0
    %2925 = vmatpush1.msra.mxu0 %v849
    %2926 = vmatprep.subr.mxu0 0.0
    %2927 = vmatpush1.msra.mxu0 %v850
    %2928 = vmatprep.subr.mxu0 0.0
    %2929 = vmatpush1.msra.mxu0 %v851
    %2930 = vmatprep.subr.mxu0 0.0
    %2931 = vmatpush1.msra.mxu0 %v852
    %2932 = vmatprep.subr.mxu0 0.0
    %2933 = vmatpush1.msra.mxu0 %v853
    %2934 = vmatprep.subr.mxu0 0.0
    %2935 = vmatpush1.msra.mxu0 %v854
    %2936 = vmatprep.subr.mxu0 0.0
    %2937 = vmatpush1.msra.mxu0 %v855
    %2938 = vmatprep.subr.mxu0 0.0
    %2939 = vmatpush1.msra.mxu0 %v856
    %2940 = vmatprep.subr.mxu0 0.0
    %2941 = vmatpush1.msra.mxu0 %v857
    %2942 = vmatprep.subr.mxu0 0.0
    %2943 = vmatpush1.msra.mxu0 %v858
    %2944 = vmatprep.subr.mxu0 0.0
    %2945 = vmatpush1.msra.mxu0 %v859
    %2946 = vmatprep.subr.mxu0 0.0
    %2947 = vmatpush1.msra.mxu0 %v860
    %2948 = vmatprep.subr.mxu0 0.0
    %2949 = vmatpush1.msra.mxu0 %v861
    %2950 = vmatprep.subr.mxu0 0.0
    %2951 = vmatpush1.msra.mxu0 %v862
    %2952 = vmatprep.subr.mxu0 0.0
    %2953 = vmatpush1.msra.mxu0 %v863
    %2954 = vmatprep.subr.mxu0 0.0
    %2955 = vmatpush1.msra.mxu0 %v864
    %2956 = vmatprep.subr.mxu0 0.0
    %2957 = vmatpush1.msra.mxu0 %v865
    %2958 = vmatprep.subr.mxu0 0.0
    %2959 = vmatpush1.msra.mxu0 %v866
    %2960 = vmatprep.subr.mxu0 0.0
    %2961 = vmatpush1.msra.mxu0 %v867
    %2962 = vmatprep.subr.mxu0 0.0
    %2963 = vmatpush1.msra.mxu0 %v868
    %2964 = vmatprep.subr.mxu0 0.0
    %2965 = vmatpush1.msra.mxu0 %v869
    %2966 = vmatprep.subr.mxu0 0.0
    %2967 = vmatpush1.msra.mxu0 %v870
    %2968 = vmatprep.subr.mxu0 0.0
    %2969 = vmatpush1.msra.mxu0 %v871
    %2970 = vmatprep.subr.mxu0 0.0
    %2971 = vmatpush1.msra.mxu0 %v872
    %2972 = vmatprep.subr.mxu0 0.0
    %2973 = vmatpush1.msra.mxu0 %v873
    %2974 = vmatprep.subr.mxu0 0.0
    %2975 = vmatpush1.msra.mxu0 %v874
    %2976 = vmatprep.subr.mxu0 0.0
    %2977 = vmatpush1.msra.mxu0 %v875
    %2978 = vmatprep.mubr.f32.mxu0 %v1125
    %2979 = vmatmul.mubr.f32.gmra.mrb[0].mxu0 %v37
    %v2980 = vpop.f32.mrb[0].mxu0
    %v2981 = vadd.f32 %v2911, %v2980
    %v2982 = vpop.f32.mrb[0].mxu0
    %2983 = vdwg.mxu0
    %2984 = vmatprep.subr.mxu0 0.0
    %2985 = vmatpush1.msra.mxu0 %v876
    %2986 = vmatprep.subr.mxu0 0.0
    %2987 = vmatpush1.msra.mxu0 %v877
    %2988 = vmatprep.subr.mxu0 0.0
    %2989 = vmatpush1.msra.mxu0 %v878
    %2990 = vmatprep.subr.mxu0 0.0
    %2991 = vmatpush1.msra.mxu0 %v879
    %2992 = vmatprep.subr.mxu0 0.0
    %2993 = vmatpush1.msra.mxu0 %v880
    %2994 = vmatprep.subr.mxu0 0.0
    %2995 = vmatpush1.msra.mxu0 %v881
    %2996 = vmatprep.subr.mxu0 0.0
    %2997 = vmatpush1.msra.mxu0 %v882
    %2998 = vmatprep.subr.mxu0 0.0
    %2999 = vmatpush1.msra.mxu0 %v883
    %3000 = vmatprep.subr.mxu0 0.0
    %3001 = vmatpush1.msra.mxu0 %v884
    %3002 = vmatprep.subr.mxu0 0.0
    %3003 = vmatpush1.msra.mxu0 %v885
    %3004 = vmatprep.subr.mxu0 0.0
    %3005 = vmatpush1.msra.mxu0 %v886
    %3006 = vmatprep.subr.mxu0 0.0
    %3007 = vmatpush1.msra.mxu0 %v887
    %3008 = vmatprep.subr.mxu0 0.0
    %3009 = vmatpush1.msra.mxu0 %v888
    %3010 = vmatprep.subr.mxu0 0.0
    %3011 = vmatpush1.msra.mxu0 %v889
    %3012 = vmatprep.subr.mxu0 0.0
    %3013 = vmatpush1.msra.mxu0 %v890
    %3014 = vmatprep.subr.mxu0 0.0
    %3015 = vmatpush1.msra.mxu0 %v891
    %3016 = vmatprep.subr.mxu0 0.0
    %3017 = vmatpush1.msra.mxu0 %v892
    %3018 = vmatprep.subr.mxu0 0.0
    %3019 = vmatpush1.msra.mxu0 %v893
    %3020 = vmatprep.subr.mxu0 0.0
    %3021 = vmatpush1.msra.mxu0 %v894
    %3022 = vmatprep.subr.mxu0 0.0
    %3023 = vmatpush1.msra.mxu0 %v895
    %3024 = vmatprep.subr.mxu0 0.0
    %3025 = vmatpush1.msra.mxu0 %v896
    %3026 = vmatprep.subr.mxu0 0.0
    %3027 = vmatpush1.msra.mxu0 %v897
    %3028 = vmatprep.subr.mxu0 0.0
    %3029 = vmatpush1.msra.mxu0 %v898
    %3030 = vmatprep.subr.mxu0 0.0
    %3031 = vmatpush1.msra.mxu0 %v899
    %3032 = vmatprep.subr.mxu0 0.0
    %3033 = vmatpush1.msra.mxu0 %v900
    %3034 = vmatprep.subr.mxu0 0.0
    %3035 = vmatpush1.msra.mxu0 %v901
    %3036 = vmatprep.subr.mxu0 0.0
    %3037 = vmatpush1.msra.mxu0 %v902
    %3038 = vmatprep.subr.mxu0 0.0
    %3039 = vmatpush1.msra.mxu0 %v903
    %3040 = vmatprep.subr.mxu0 0.0
    %3041 = vmatpush1.msra.mxu0 %v904
    %3042 = vmatprep.subr.mxu0 0.0
    %3043 = vmatpush1.msra.mxu0 %v905
    %3044 = vmatprep.subr.mxu0 0.0
    %3045 = vmatpush1.msra.mxu0 %v906
    %3046 = vmatprep.subr.mxu0 0.0
    %3047 = vmatpush1.msra.mxu0 %v907
    %3048 = vmatprep.mubr.f32.mxu0 %v1126
    %3049 = vmatmul.mubr.f32.gmra.mrb[0].mxu0 %v38
    %v3050 = vpop.f32.mrb[0].mxu0
    %v3051 = vadd.f32 %v2981, %v3050
    %v3052 = vpop.f32.mrb[0].mxu0
    %3053 = vdwg.mxu0
    %3054 = vmatprep.subr.mxu0 0.0
    %3055 = vmatpush1.msra.mxu0 %v908
    %3056 = vmatprep.subr.mxu0 0.0
    %3057 = vmatpush1.msra.mxu0 %v909
    %3058 = vmatprep.subr.mxu0 0.0
    %3059 = vmatpush1.msra.mxu0 %v910
    %3060 = vmatprep.subr.mxu0 0.0
    %3061 = vmatpush1.msra.mxu0 %v911
    %3062 = vmatprep.subr.mxu0 0.0
    %3063 = vmatpush1.msra.mxu0 %v912
    %3064 = vmatprep.subr.mxu0 0.0
    %3065 = vmatpush1.msra.mxu0 %v913
    %3066 = vmatprep.subr.mxu0 0.0
    %3067 = vmatpush1.msra.mxu0 %v914
    %3068 = vmatprep.subr.mxu0 0.0
    %3069 = vmatpush1.msra.mxu0 %v915
    %3070 = vmatprep.subr.mxu0 0.0
    %3071 = vmatpush1.msra.mxu0 %v916
    %3072 = vmatprep.subr.mxu0 0.0
    %3073 = vmatpush1.msra.mxu0 %v917
    %3074 = vmatprep.subr.mxu0 0.0
    %3075 = vmatpush1.msra.mxu0 %v918
    %3076 = vmatprep.subr.mxu0 0.0
    %3077 = vmatpush1.msra.mxu0 %v919
    %3078 = vmatprep.subr.mxu0 0.0
    %3079 = vmatpush1.msra.mxu0 %v920
    %3080 = vmatprep.subr.mxu0 0.0
    %3081 = vmatpush1.msra.mxu0 %v921
    %3082 = vmatprep.subr.mxu0 0.0
    %3083 = vmatpush1.msra.mxu0 %v922
    %3084 = vmatprep.subr.mxu0 0.0
    %3085 = vmatpush1.msra.mxu0 %v923
    %3086 = vmatprep.subr.mxu0 0.0
    %3087 = vmatpush1.msra.mxu0 %v924
    %3088 = vmatprep.subr.mxu0 0.0
    %3089 = vmatpush1.msra.mxu0 %v925
    %3090 = vmatprep.subr.mxu0 0.0
    %3091 = vmatpush1.msra.mxu0 %v926
    %3092 = vmatprep.subr.mxu0 0.0
    %3093 = vmatpush1.msra.mxu0 %v927
    %3094 = vmatprep.subr.mxu0 0.0
    %3095 = vmatpush1.msra.mxu0 %v928
    %3096 = vmatprep.subr.mxu0 0.0
    %3097 = vmatpush1.msra.mxu0 %v929
    %3098 = vmatprep.subr.mxu0 0.0
    %3099 = vmatpush1.msra.mxu0 %v930
    %3100 = vmatprep.subr.mxu0 0.0
    %3101 = vmatpush1.msra.mxu0 %v931
    %3102 = vmatprep.subr.mxu0 0.0
    %3103 = vmatpush1.msra.mxu0 %v932
    %3104 = vmatprep.subr.mxu0 0.0
    %3105 = vmatpush1.msra.mxu0 %v933
    %3106 = vmatprep.subr.mxu0 0.0
    %3107 = vmatpush1.msra.mxu0 %v934
    %3108 = vmatprep.subr.mxu0 0.0
    %3109 = vmatpush1.msra.mxu0 %v935
    %3110 = vmatprep.subr.mxu0 0.0
    %3111 = vmatpush1.msra.mxu0 %v936
    %3112 = vmatprep.subr.mxu0 0.0
    %3113 = vmatpush1.msra.mxu0 %v937
    %3114 = vmatprep.subr.mxu0 0.0
    %3115 = vmatpush1.msra.mxu0 %v938
    %3116 = vmatprep.subr.mxu0 0.0
    %3117 = vmatpush1.msra.mxu0 %v939
    %3118 = vmatprep.mubr.f32.mxu0 %v1127
    %3119 = vmatmul.mubr.f32.gmra.mrb[0].mxu0 %v39
    %v3120 = vpop.f32.mrb[0].mxu0
    %v3121 = vadd.f32 %v3051, %v3120
    %v3122 = vpop.f32.mrb[0].mxu0
    %3123 = vdwg.mxu0
    %3124 = vmatprep.subr.mxu0 0.0
    %3125 = vmatpush1.msra.mxu0 %v940
    %3126 = vmatprep.subr.mxu0 0.0
    %3127 = vmatpush1.msra.mxu0 %v941
    %3128 = vmatprep.subr.mxu0 0.0
    %3129 = vmatpush1.msra.mxu0 %v942
    %3130 = vmatprep.subr.mxu0 0.0
    %3131 = vmatpush1.msra.mxu0 %v943
    %3132 = vmatprep.subr.mxu0 0.0
    %3133 = vmatpush1.msra.mxu0 %v944
    %3134 = vmatprep.subr.mxu0 0.0
    %3135 = vmatpush1.msra.mxu0 %v945
    %3136 = vmatprep.subr.mxu0 0.0
    %3137 = vmatpush1.msra.mxu0 %v946
    %3138 = vmatprep.subr.mxu0 0.0
    %3139 = vmatpush1.msra.mxu0 %v947
    %3140 = vmatprep.subr.mxu0 0.0
    %3141 = vmatpush1.msra.mxu0 %v948
    %3142 = vmatprep.subr.mxu0 0.0
    %3143 = vmatpush1.msra.mxu0 %v949
    %3144 = vmatprep.subr.mxu0 0.0
    %3145 = vmatpush1.msra.mxu0 %v950
    %3146 = vmatprep.subr.mxu0 0.0
    %3147 = vmatpush1.msra.mxu0 %v951
    %3148 = vmatprep.subr.mxu0 0.0
    %3149 = vmatpush1.msra.mxu0 %v952
    %3150 = vmatprep.subr.mxu0 0.0
    %3151 = vmatpush1.msra.mxu0 %v953
    %3152 = vmatprep.subr.mxu0 0.0
    %3153 = vmatpush1.msra.mxu0 %v954
    %3154 = vmatprep.subr.mxu0 0.0
    %3155 = vmatpush1.msra.mxu0 %v955
    %3156 = vmatprep.subr.mxu0 0.0
    %3157 = vmatpush1.msra.mxu0 %v956
    %3158 = vmatprep.subr.mxu0 0.0
    %3159 = vmatpush1.msra.mxu0 %v957
    %3160 = vmatprep.subr.mxu0 0.0
    %3161 = vmatpush1.msra.mxu0 %v958
    %3162 = vmatprep.subr.mxu0 0.0
    %3163 = vmatpush1.msra.mxu0 %v959
    %3164 = vmatprep.subr.mxu0 0.0
    %3165 = vmatpush1.msra.mxu0 %v960
    %3166 = vmatprep.subr.mxu0 0.0
    %3167 = vmatpush1.msra.mxu0 %v961
    %3168 = vmatprep.subr.mxu0 0.0
    %3169 = vmatpush1.msra.mxu0 %v962
    %3170 = vmatprep.subr.mxu0 0.0
    %3171 = vmatpush1.msra.mxu0 %v963
    %3172 = vmatprep.subr.mxu0 0.0
    %3173 = vmatpush1.msra.mxu0 %v964
    %3174 = vmatprep.subr.mxu0 0.0
    %3175 = vmatpush1.msra.mxu0 %v965
    %3176 = vmatprep.subr.mxu0 0.0
    %3177 = vmatpush1.msra.mxu0 %v966
    %3178 = vmatprep.subr.mxu0 0.0
    %3179 = vmatpush1.msra.mxu0 %v967
    %3180 = vmatprep.subr.mxu0 0.0
    %3181 = vmatpush1.msra.mxu0 %v968
    %3182 = vmatprep.subr.mxu0 0.0
    %3183 = vmatpush1.msra.mxu0 %v969
    %3184 = vmatprep.subr.mxu0 0.0
    %3185 = vmatpush1.msra.mxu0 %v970
    %3186 = vmatprep.subr.mxu0 0.0
    %3187 = vmatpush1.msra.mxu0 %v971
    %3188 = vmatprep.mubr.f32.mxu0 %v1128
    %3189 = vmatmul.mubr.f32.gmra.mrb[0].mxu0 %v40
    %v3190 = vpop.f32.mrb[0].mxu0
    %v3191 = vadd.f32 %v3121, %v3190
    %v3192 = vpop.f32.mrb[0].mxu0
    %3193 = vdwg.mxu0
    %3194 = vmatprep.subr.mxu0 0.0
    %3195 = vmatpush1.msra.mxu0 %v972
    %3196 = vmatprep.subr.mxu0 0.0
    %3197 = vmatpush1.msra.mxu0 %v973
    %3198 = vmatprep.subr.mxu0 0.0
    %3199 = vmatpush1.msra.mxu0 %v974
    %3200 = vmatprep.subr.mxu0 0.0
    %3201 = vmatpush1.msra.mxu0 %v975
    %3202 = vmatprep.subr.mxu0 0.0
    %3203 = vmatpush1.msra.mxu0 %v976
    %3204 = vmatprep.subr.mxu0 0.0
    %3205 = vmatpush1.msra.mxu0 %v977
    %3206 = vmatprep.subr.mxu0 0.0
    %3207 = vmatpush1.msra.mxu0 %v978
    %3208 = vmatprep.subr.mxu0 0.0
    %3209 = vmatpush1.msra.mxu0 %v979
    %3210 = vmatprep.subr.mxu0 0.0
    %3211 = vmatpush1.msra.mxu0 %v980
    %3212 = vmatprep.subr.mxu0 0.0
    %3213 = vmatpush1.msra.mxu0 %v981
    %3214 = vmatprep.subr.mxu0 0.0
    %3215 = vmatpush1.msra.mxu0 %v982
    %3216 = vmatprep.subr.mxu0 0.0
    %3217 = vmatpush1.msra.mxu0 %v983
    %3218 = vmatprep.subr.mxu0 0.0
    %3219 = vmatpush1.msra.mxu0 %v984
    %3220 = vmatprep.subr.mxu0 0.0
    %3221 = vmatpush1.msra.mxu0 %v985
    %3222 = vmatprep.subr.mxu0 0.0
    %3223 = vmatpush1.msra.mxu0 %v986
    %3224 = vmatprep.subr.mxu0 0.0
    %3225 = vmatpush1.msra.mxu0 %v987
    %3226 = vmatprep.subr.mxu0 0.0
    %3227 = vmatpush1.msra.mxu0 %v988
    %3228 = vmatprep.subr.mxu0 0.0
    %3229 = vmatpush1.msra.mxu0 %v989
    %3230 = vmatprep.subr.mxu0 0.0
    %3231 = vmatpush1.msra.mxu0 %v990
    %3232 = vmatprep.subr.mxu0 0.0
    %3233 = vmatpush1.msra.mxu0 %v991
    %3234 = vmatprep.subr.mxu0 0.0
    %3235 = vmatpush1.msra.mxu0 %v992
    %3236 = vmatprep.subr.mxu0 0.0
    %3237 = vmatpush1.msra.mxu0 %v993
    %3238 = vmatprep.subr.mxu0 0.0
    %3239 = vmatpush1.msra.mxu0 %v994
    %3240 = vmatprep.subr.mxu0 0.0
    %3241 = vmatpush1.msra.mxu0 %v995
    %3242 = vmatprep.subr.mxu0 0.0
    %3243 = vmatpush1.msra.mxu0 %v996
    %3244 = vmatprep.subr.mxu0 0.0
    %3245 = vmatpush1.msra.mxu0 %v997
    %3246 = vmatprep.subr.mxu0 0.0
    %3247 = vmatpush1.msra.mxu0 %v998
    %3248 = vmatprep.subr.mxu0 0.0
    %3249 = vmatpush1.msra.mxu0 %v999
    %3250 = vmatprep.subr.mxu0 0.0
    %3251 = vmatpush1.msra.mxu0 %v1000
    %3252 = vmatprep.subr.mxu0 0.0
    %3253 = vmatpush1.msra.mxu0 %v1001
    %3254 = vmatprep.subr.mxu0 0.0
    %3255 = vmatpush1.msra.mxu0 %v1002
    %3256 = vmatprep.subr.mxu0 0.0
    %3257 = vmatpush1.msra.mxu0 %v1003
    %3258 = vmatprep.mubr.f32.mxu0 %v1129
    %3259 = vmatmul.mubr.f32.gmra.mrb[0].mxu0 %v41
    %v3260 = vpop.f32.mrb[0].mxu0
    %v3261 = vadd.f32 %v3191, %v3260
    %v3262 = vpop.f32.mrb[0].mxu0
    %3263 = vdwg.mxu0
    %3264 = vmatprep.subr.mxu0 0.0
    %3265 = vmatpush1.msra.mxu0 %v1004
    %3266 = vmatprep.subr.mxu0 0.0
    %3267 = vmatpush1.msra.mxu0 %v1005
    %3268 = vmatprep.subr.mxu0 0.0
    %3269 = vmatpush1.msra.mxu0 %v1006
    %3270 = vmatprep.subr.mxu0 0.0
    %3271 = vmatpush1.msra.mxu0 %v1007
    %3272 = vmatprep.subr.mxu0 0.0
    %3273 = vmatpush1.msra.mxu0 %v1008
    %3274 = vmatprep.subr.mxu0 0.0
    %3275 = vmatpush1.msra.mxu0 %v1009
    %3276 = vmatprep.subr.mxu0 0.0
    %3277 = vmatpush1.msra.mxu0 %v1010
    %3278 = vmatprep.subr.mxu0 0.0
    %3279 = vmatpush1.msra.mxu0 %v1011
    %3280 = vmatprep.subr.mxu0 0.0
    %3281 = vmatpush1.msra.mxu0 %v1012
    %3282 = vmatprep.subr.mxu0 0.0
    %3283 = vmatpush1.msra.mxu0 %v1013
    %3284 = vmatprep.subr.mxu0 0.0
    %3285 = vmatpush1.msra.mxu0 %v1014
    %3286 = vmatprep.subr.mxu0 0.0
    %3287 = vmatpush1.msra.mxu0 %v1015
    %3288 = vmatprep.subr.mxu0 0.0
    %3289 = vmatpush1.msra.mxu0 %v1016
    %3290 = vmatprep.subr.mxu0 0.0
    %3291 = vmatpush1.msra.mxu0 %v1017
    %3292 = vmatprep.subr.mxu0 0.0
    %3293 = vmatpush1.msra.mxu0 %v1018
    %3294 = vmatprep.subr.mxu0 0.0
    %3295 = vmatpush1.msra.mxu0 %v1019
    %3296 = vmatprep.subr.mxu0 0.0
    %3297 = vmatpush1.msra.mxu0 %v1020
    %3298 = vmatprep.subr.mxu0 0.0
    %3299 = vmatpush1.msra.mxu0 %v1021
    %3300 = vmatprep.subr.mxu0 0.0
    %3301 = vmatpush1.msra.mxu0 %v1022
    %3302 = vmatprep.subr.mxu0 0.0
    %3303 = vmatpush1.msra.mxu0 %v1023
    %3304 = vmatprep.subr.mxu0 0.0
    %3305 = vmatpush1.msra.mxu0 %v1024
    %3306 = vmatprep.subr.mxu0 0.0
    %3307 = vmatpush1.msra.mxu0 %v1025
    %3308 = vmatprep.subr.mxu0 0.0
    %3309 = vmatpush1.msra.mxu0 %v1026
    %3310 = vmatprep.subr.mxu0 0.0
    %3311 = vmatpush1.msra.mxu0 %v1027
    %3312 = vmatprep.subr.mxu0 0.0
    %3313 = vmatpush1.msra.mxu0 %v1028
    %3314 = vmatprep.subr.mxu0 0.0
    %3315 = vmatpush1.msra.mxu0 %v1029
    %3316 = vmatprep.subr.mxu0 0.0
    %3317 = vmatpush1.msra.mxu0 %v1030
    %3318 = vmatprep.subr.mxu0 0.0
    %3319 = vmatpush1.msra.mxu0 %v1031
    %3320 = vmatprep.subr.mxu0 0.0
    %3321 = vmatpush1.msra.mxu0 %v1032
    %3322 = vmatprep.subr.mxu0 0.0
    %3323 = vmatpush1.msra.mxu0 %v1033
    %3324 = vmatprep.subr.mxu0 0.0
    %3325 = vmatpush1.msra.mxu0 %v1034
    %3326 = vmatprep.subr.mxu0 0.0
    %3327 = vmatpush1.msra.mxu0 %v1035
    %3328 = vmatprep.mubr.f32.mxu0 %v1130
    %3329 = vmatmul.mubr.f32.gmra.mrb[0].mxu0 %v42
    %v3330 = vpop.f32.mrb[0].mxu0
    %v3331 = vadd.f32 %v3261, %v3330
    %v3332 = vpop.f32.mrb[0].mxu0
    %3333 = vdwg.mxu0
    %3334 = vmatprep.subr.mxu0 0.0
    %3335 = vmatpush1.msra.mxu0 %v1036
    %3336 = vmatprep.subr.mxu0 0.0
    %3337 = vmatpush1.msra.mxu0 %v1037
    %3338 = vmatprep.subr.mxu0 0.0
    %3339 = vmatpush1.msra.mxu0 %v1038
    %3340 = vmatprep.subr.mxu0 0.0
    %3341 = vmatpush1.msra.mxu0 %v1039
    %3342 = vmatprep.subr.mxu0 0.0
    %3343 = vmatpush1.msra.mxu0 %v1040
    %3344 = vmatprep.subr.mxu0 0.0
    %3345 = vmatpush1.msra.mxu0 %v1041
    %3346 = vmatprep.subr.mxu0 0.0
    %3347 = vmatpush1.msra.mxu0 %v1042
    %3348 = vmatprep.subr.mxu0 0.0
    %3349 = vmatpush1.msra.mxu0 %v1043
    %3350 = vmatprep.subr.mxu0 0.0
    %3351 = vmatpush1.msra.mxu0 %v1044
    %3352 = vmatprep.subr.mxu0 0.0
    %3353 = vmatpush1.msra.mxu0 %v1045
    %3354 = vmatprep.subr.mxu0 0.0
    %3355 = vmatpush1.msra.mxu0 %v1046
    %3356 = vmatprep.subr.mxu0 0.0
    %3357 = vmatpush1.msra.mxu0 %v1047
    %3358 = vmatprep.subr.mxu0 0.0
    %3359 = vmatpush1.msra.mxu0 %v1048
    %3360 = vmatprep.subr.mxu0 0.0
    %3361 = vmatpush1.msra.mxu0 %v1049
    %3362 = vmatprep.subr.mxu0 0.0
    %3363 = vmatpush1.msra.mxu0 %v1050
    %3364 = vmatprep.subr.mxu0 0.0
    %3365 = vmatpush1.msra.mxu0 %v1051
    %3366 = vmatprep.subr.mxu0 0.0
    %3367 = vmatpush1.msra.mxu0 %v1052
    %3368 = vmatprep.subr.mxu0 0.0
    %3369 = vmatpush1.msra.mxu0 %v1053
    %3370 = vmatprep.subr.mxu0 0.0
    %3371 = vmatpush1.msra.mxu0 %v1054
    %3372 = vmatprep.subr.mxu0 0.0
    %3373 = vmatpush1.msra.mxu0 %v1055
    %3374 = vmatprep.subr.mxu0 0.0
    %3375 = vmatpush1.msra.mxu0 %v1056
    %3376 = vmatprep.subr.mxu0 0.0
    %3377 = vmatpush1.msra.mxu0 %v1057
    %3378 = vmatprep.subr.mxu0 0.0
    %3379 = vmatpush1.msra.mxu0 %v1058
    %3380 = vmatprep.subr.mxu0 0.0
    %3381 = vmatpush1.msra.mxu0 %v1059
    %3382 = vmatprep.subr.mxu0 0.0
    %3383 = vmatpush1.msra.mxu0 %v1060
    %3384 = vmatprep.subr.mxu0 0.0
    %3385 = vmatpush1.msra.mxu0 %v1061
    %3386 = vmatprep.subr.mxu0 0.0
    %3387 = vmatpush1.msra.mxu0 %v1062
    %3388 = vmatprep.subr.mxu0 0.0
    %3389 = vmatpush1.msra.mxu0 %v1063
    %3390 = vmatprep.subr.mxu0 0.0
    %3391 = vmatpush1.msra.mxu0 %v1064
    %3392 = vmatprep.subr.mxu0 0.0
    %3393 = vmatpush1.msra.mxu0 %v1065
    %3394 = vmatprep.subr.mxu0 0.0
    %3395 = vmatpush1.msra.mxu0 %v1066
    %3396 = vmatprep.subr.mxu0 0.0
    %3397 = vmatpush1.msra.mxu0 %v1067
    %3398 = vmatprep.mubr.f32.mxu0 %v1131
    %3399 = vmatmul.mubr.f32.gmra.mrb[0].mxu0 %v43
    %v3400 = vpop.f32.mrb[0].mxu0
    %v3401 = vadd.f32 %v3331, %v3400
    %v3402 = vpop.f32.mrb[0].mxu0
    %3403 = vdwg.mxu0
    %v3404 = vxor.u32 %v3401, 2147483648
    %v3405 = vmul.f32 %v3404, 1.442695
    %v3406 = vpow.pop %v3405
    %v3407 = vadd.f32 %v3406, 1.0
    %v3408 = vrcp.pop %v3407
    %v3409 = vmul.f32 1.0, %v3408
    %3410 = vst [vmem:[#allocation2] sm:$0xf] %v3409
    // Predicated region
    $region10: #{_last_layer_forward_2d.1} parent=1 // pred_check
      _
    $region11: #{_last_layer_forward_2d.1} parent=1 // pred_check_branch
      %3412 = sbr.rel (0) target = $region13
    $region12: #{_last_layer_forward_2d.1} parent=1 // pred_region
      %s3414 = ssub.s32 64, 64
      %3415 = vsyncadd [#allocation3], %s3414
      %s3417 = sshll.u32 [#allocation2], 4
      %s3418 = int_to_ptr.vmem [resolvable:$true] %s3417
      %3420 = dma.vmem_to_hbm [thread:$0]  %s3418, 64, %s2, [#allocation3]
    $region13: #{_last_layer_forward_2d.1} parent=1 // pred_fallthru
      _
    // Predicated region
    $region14: #{_last_layer_forward_2d.1} parent=1 // pred_check
      _
    $region15: #{_last_layer_forward_2d.1} parent=1 // pred_check_branch
      %3422 = sbr.rel (0) target = $region17
    $region16: #{_last_layer_forward_2d.1} parent=1 // pred_region
      %3423 = dma.done [#allocation3], 64
    $region17: #{_last_layer_forward_2d.1} parent=1 // pred_fallthru
      _
    %3424 = vsyncpa [#allocation3], 1

</llo_original>
